<compile_context>
chip_gen: v5e
topology: v5e:2x2
jax: 0.10.0
libtpu: 0.0.40
codegen_flags: <defaults>
</compile_context>

<pallas_src>
import functools

import jax
import jax.numpy as jnp
from jax import lax
from jax.experimental import pallas as pl
from jax.experimental.pallas import tpu as pltpu


# --------------------------------------------------------------------------- Pallas kernel

def _make_fused_gemm_kernel(num_inputs, has_residual):
    """y = silu((sum_i x_i @ w_i) * scale + bias) [+ residual]."""

    def kernel(*refs):
        x_refs = refs[:num_inputs]
        w_refs = refs[num_inputs:2 * num_inputs]
        scale_ref = refs[2 * num_inputs]
        bias_ref = refs[2 * num_inputs + 1]
        res_ref = refs[2 * num_inputs + 2] if has_residual else None
        out_ref = refs[-1]

        acc = jnp.dot(x_refs[0][...], w_refs[0][...],
                      preferred_element_type=jnp.float32)
        for i in range(1, num_inputs):
            acc = acc + jnp.dot(x_refs[i][...], w_refs[i][...],
                                preferred_element_type=jnp.float32)
        y = acc * scale_ref[...] + bias_ref[...]     # folded BatchNorm (eval mode)
        y = y * jax.nn.sigmoid(y)                    # SiLU
        if has_residual:
            y = y + res_ref[...].astype(jnp.float32)
        out_ref[...] = y.astype(out_ref.dtype)

    return kernel


def fused_gemm_bn_silu(xs, ws, scale, bias, residual=None, *, block_rows=256):
    """Row-tiled pallas_call computing silu(bn(sum_i xs[i] @ ws[i])) (+ residual)."""
    xs = [jnp.asarray(x) for x in xs]
    ws = [jnp.asarray(w) for w in ws]
    rows = int(xs[0].shape[0])
    cout = int(ws[0].shape[1])

    tm = block_rows if rows >= block_rows else rows   # tm == rows or a multiple of 8
    grid = (pl.cdiv(rows, tm),)

    scale2 = jnp.asarray(scale, jnp.float32).reshape(1, cout)
    bias2 = jnp.asarray(bias, jnp.float32).reshape(1, cout)

    args, in_specs = [], []
    for x in xs:
        args.append(x)
        in_specs.append(pl.BlockSpec((tm, int(x.shape[1])), lambda r: (r, 0)))
    for w in ws:
        args.append(w)
        in_specs.append(pl.BlockSpec((int(w.shape[0]), cout), lambda r: (0, 0)))
    args.append(scale2)
    in_specs.append(pl.BlockSpec((1, cout), lambda r: (0, 0)))
    args.append(bias2)
    in_specs.append(pl.BlockSpec((1, cout), lambda r: (0, 0)))
    has_res = residual is not None
    if has_res:
        args.append(jnp.asarray(residual))
        in_specs.append(pl.BlockSpec((tm, cout), lambda r: (r, 0)))

    k_total = sum(int(x.shape[1]) for x in xs)
    flops = 2 * rows * k_total * cout
    bytes_accessed = sum(int(a.size) * int(a.dtype.itemsize) for a in args) + rows * cout * 4

    return pl.pallas_call(
        _make_fused_gemm_kernel(len(xs), has_res),
        out_shape=jax.ShapeDtypeStruct((rows, cout), xs[0].dtype),
        grid=grid,
        in_specs=in_specs,
        out_specs=pl.BlockSpec((tm, cout), lambda r: (r, 0)),
        compiler_params=pltpu.CompilerParams(dimension_semantics=("parallel",)),
        cost_estimate=pl.CostEstimate(flops=flops,
                                      transcendentals=rows * cout,
                                      bytes_accessed=bytes_accessed),
    )(*args)


# --------------------------------------------------------------------------- parameters

def _fold_bn(gamma, beta, mean, var, eps=1e-5):
    scale = gamma / jnp.sqrt(var + eps)
    return scale, beta - mean * scale


def _init_conv_bn(key, cin, cout, ksize):
    kw, kg, kb, km, kv = jax.random.split(key, 5)
    fan_in = cin * ksize * ksize
    w = jax.random.normal(kw, (ksize, ksize, cin, cout), jnp.float32) / jnp.sqrt(fan_in)
    gamma = jax.random.uniform(kg, (cout,), jnp.float32, 0.5, 1.5)
    beta = 0.1 * jax.random.normal(kb, (cout,), jnp.float32)
    mean = 0.1 * jax.random.normal(km, (cout,), jnp.float32)
    var = jax.random.uniform(kv, (cout,), jnp.float32, 0.5, 1.5)
    scale, bias = _fold_bn(gamma, beta, mean, var)
    return {"w": w, "scale": scale, "bias": bias}


def init_c3_params(key, c1, c2, n=1, e=0.5):
    c_ = int(c2 * e)
    keys = iter(jax.random.split(key, 3 + 2 * n))
    return {
        "cv1": _init_conv_bn(next(keys), c1, c_, 1),
        "cv2": _init_conv_bn(next(keys), c1, c_, 1),
        "cv3": _init_conv_bn(next(keys), 2 * c_, c2, 1),
        "m": [
            {"conv1": _init_conv_bn(next(keys), c_, c_, 1),
             "conv2": _init_conv_bn(next(keys), c_, c_, 3)}
            for _ in range(n)
        ],
    }


# --------------------------------------------------------------------------- forward (Pallas)

def _im2col_3x3(x_nhwc):
    n, h, w, c = x_nhwc.shape
    xp = jnp.pad(x_nhwc, ((0, 0), (1, 1), (1, 1), (0, 0)))
    cols = [xp[:, dh:dh + h, dw:dw + w, :] for dh in range(3) for dw in range(3)]
    return jnp.concatenate(cols, axis=-1).reshape(n * h * w, 9 * c)


def c3_forward_pallas(params, x_nchw, *, shortcut=True, block_rows=256):
    x = jnp.transpose(x_nchw, (0, 2, 3, 1))                  # NHWC (lane-dense channels)
    n, h, w, _ = x.shape
    x2d = x.reshape(n * h * w, -1)

    def w1x1(p):
        wk = p["w"]
        return wk.reshape(wk.shape[2], wk.shape[3])

    a = fused_gemm_bn_silu([x2d], [w1x1(params["cv1"])],
                           params["cv1"]["scale"], params["cv1"]["bias"],
                           block_rows=block_rows)
    b = fused_gemm_bn_silu([x2d], [w1x1(params["cv2"])],
                           params["cv2"]["scale"], params["cv2"]["bias"],
                           block_rows=block_rows)

    c_ = a.shape[1]
    for blk in params["m"]:
        hmid = fused_gemm_bn_silu([a], [w1x1(blk["conv1"])],
                                  blk["conv1"]["scale"], blk["conv1"]["bias"],
                                  block_rows=block_rows)
        patches = _im2col_3x3(hmid.reshape(n, h, w, c_))
        w2 = blk["conv2"]["w"].reshape(9 * c_, c_)
        a = fused_gemm_bn_silu([patches], [w2],
                               blk["conv2"]["scale"], blk["conv2"]["bias"],
                               residual=a if shortcut else None,
                               block_rows=block_rows)

    # cv3 with the channel-concat fused into the GEMM (weight split along input channels).
    w3 = params["cv3"]["w"].reshape(2 * c_, -1)
    out2d = fused_gemm_bn_silu([a, b], [w3[:c_], w3[c_:]],
                               params["cv3"]["scale"], params["cv3"]["bias"],
                               block_rows=block_rows)
    c2 = out2d.shape[1]
    return jnp.transpose(out2d.reshape(n, h, w, c2), (0, 3, 1, 2))   # back to NCHW


# --------------------------------------------------------------------------- reference (XLA)

def _conv_bn_silu_ref(x_nhwc, p):
    ksize = p["w"].shape[0]
    pad = (ksize - 1) // 2
    z = lax.conv_general_dilated(
        x_nhwc, p["w"], window_strides=(1, 1),
        padding=[(pad, pad), (pad, pad)],
        dimension_numbers=("NHWC", "HWIO", "NHWC"),
        precision=lax.Precision.HIGHEST)
    z = z * p["scale"] + p["bias"]
    return z * jax.nn.sigmoid(z)


def c3_forward_ref(params, x_nchw, *, shortcut=True):
    x = jnp.transpose(x_nchw, (0, 2, 3, 1))
    a = _conv_bn_silu_ref(x, params["cv1"])
    b = _conv_bn_silu_ref(x, params["cv2"])
    for blk in params["m"]:
        y = _conv_bn_silu_ref(_conv_bn_silu_ref(a, blk["conv1"]), blk["conv2"])
        a = y + a if shortcut else y
    out = _conv_bn_silu_ref(jnp.concatenate([a, b], axis=-1), params["cv3"])
    return jnp.transpose(out, (0, 3, 1, 2))


# --------------------------------------------------------------------------- module wrapper

class C3:
    """Pallas/TPU mirror of the PyTorch C3 module (inference semantics, BN folded)."""

    def __init__(self, c1, c2, n=1, shortcut=True, g=1, e=0.5, *, key, block_rows=256):
        # TODO(synk): grouped convs (g != 1) not implemented; the reference C3 only forwards g
        # through a mismatched Bottleneck signature, so all convs here use groups=1 (BaseConv default).
        self.shortcut = bool(shortcut)
        self.block_rows = int(block_rows)
        self.params = init_c3_params(key, c1, c2, n=n, e=e)

    def __call__(self, x_nchw):
        return c3_forward_pallas(self.params, x_nchw,
                                 shortcut=self.shortcut, block_rows=self.block_rows)


# --------------------------------------------------------------------------- main

if __name__ == "__main__":
    key = jax.random.PRNGKey(0)
    kx, kp = jax.random.split(key)

    N, C1, H, W = 2, 16, 16, 16
    C2, NUM_BOTTLENECKS = 32, 2

    x = jax.random.normal(kx, (N, C1, H, W), dtype=jnp.float32)
    model = C3(C1, C2, n=NUM_BOTTLENECKS, shortcut=True, key=kp)

    fwd = jax.jit(functools.partial(c3_forward_pallas,
                                    shortcut=True, block_rows=model.block_rows))
    out = jax.block_until_ready(fwd(model.params, x))

    ref = jax.block_until_ready(c3_forward_ref(model.params, x, shortcut=True))

    assert out.shape == ref.shape, (out.shape, ref.shape)
    assert out.dtype == ref.dtype, (out.dtype, ref.dtype)
    max_err = float(jnp.max(jnp.abs(out - ref)))
    assert jnp.allclose(out, ref, rtol=5e-3, atol=5e-3), f"max abs err {max_err}"

    print("KERNEL_OK")
</pallas_src>

<mosaic_0001>
module attributes {stable_mosaic.version = 11 : i64} {
  func.func @kernel(%arg0: i32, %arg1: memref<256x16xf32, #tpu.memory_space<vmem>>, %arg2: memref<16x16xf32, #tpu.memory_space<vmem>>, %arg3: memref<1x16xf32, #tpu.memory_space<vmem>>, %arg4: memref<1x16xf32, #tpu.memory_space<vmem>>, %arg5: memref<256x16xf32, #tpu.memory_space<vmem>>) attributes {dimension_semantics = [#tpu.dimension_semantics<parallel>], iteration_bounds = array<i64: 2>, scalar_prefetch = 0 : i64, scratch_operands = 0 : i64, tpu.core_type = #tpu.core_type<tc>, window_params = [{transform_indices = @transform_0, window_bounds = array<i64: 256, 16>}, {pipeline_mode = #tpu.pipeline_mode<synchronous>, transform_indices = @transform_1, window_bounds = array<i64: 16, 16>}, {pipeline_mode = #tpu.pipeline_mode<synchronous>, transform_indices = @transform_2, window_bounds = array<i64: 1, 16>}, {pipeline_mode = #tpu.pipeline_mode<synchronous>, transform_indices = @transform_3, window_bounds = array<i64: 1, 16>}, {transform_indices = @transform_4, window_bounds = array<i64: 256, 16>}]} {
    %c0 = arith.constant 0 : index
    %c0_0 = arith.constant 0 : index
    %0 = vector.load %arg1[%c0, %c0_0] : memref<256x16xf32, #tpu.memory_space<vmem>>, vector<256x16xf32>
    %c0_1 = arith.constant 0 : index
    %c0_2 = arith.constant 0 : index
    %1 = vector.load %arg2[%c0_1, %c0_2] : memref<16x16xf32, #tpu.memory_space<vmem>>, vector<16x16xf32>
    %cst = arith.constant dense<0.000000e+00> : vector<256x16xf32>
    %2 = tpu.matmul %0, %1, %cst {dimension_numbers = #tpu.dot_dimension_numbers<[1], [0], [0], [1], [0, 0, 1, 1], [], []>} : vector<256x16xf32>, vector<16x16xf32>, vector<256x16xf32> -> vector<256x16xf32>
    %c0_3 = arith.constant 0 : index
    %c0_4 = arith.constant 0 : index
    %3 = vector.load %arg3[%c0_3, %c0_4] : memref<1x16xf32, #tpu.memory_space<vmem>>, vector<1x16xf32>
    %4 = vector.broadcast %3 : vector<1x16xf32> to vector<256x16xf32>
    %5 = arith.mulf %2, %4 : vector<256x16xf32>
    %c0_5 = arith.constant 0 : index
    %c0_6 = arith.constant 0 : index
    %6 = vector.load %arg4[%c0_5, %c0_6] : memref<1x16xf32, #tpu.memory_space<vmem>>, vector<1x16xf32>
    %7 = vector.broadcast %6 : vector<1x16xf32> to vector<256x16xf32>
    %8 = arith.addf %5, %7 : vector<256x16xf32>
    %9 = arith.negf %8 : vector<256x16xf32>
    %10 = math.exp %9 : vector<256x16xf32>
    %cst_7 = arith.constant 1.000000e+00 : f32
    %11 = vector.broadcast %cst_7 : f32 to vector<256x16xf32>
    %12 = arith.addf %11, %10 : vector<256x16xf32>
    %13 = arith.divf %11, %12 : vector<256x16xf32>
    %14 = arith.mulf %8, %13 : vector<256x16xf32>
    %c0_8 = arith.constant 0 : index
    %c0_9 = arith.constant 0 : index
    %15 = vector.load %arg5[%c0_8, %c0_9] : memref<256x16xf32, #tpu.memory_space<vmem>>, vector<256x16xf32>
    tpu.vector_store %arg5[%c0_8, %c0_9], %14 {strides = array<i32>} : memref<256x16xf32, #tpu.memory_space<vmem>>, vector<256x16xf32>,
    return
  }
  func.func @transform_0(%arg0: i32) -> (i32, i32) {
    %c0_i32 = arith.constant 0 : i32
    %c0_i32_0 = arith.constant 0 : i32
    return %arg0, %c0_i32 : i32, i32
  }
  func.func @transform_1(%arg0: i32) -> (i32, i32) {
    %c0_i32 = arith.constant 0 : i32
    %c0_i32_0 = arith.constant 0 : i32
    %c0_i32_1 = arith.constant 0 : i32
    return %c0_i32, %c0_i32_0 : i32, i32
  }
  func.func @transform_2(%arg0: i32) -> (i32, i32) {
    %c0_i32 = arith.constant 0 : i32
    %c0_i32_0 = arith.constant 0 : i32
    %c0_i32_1 = arith.constant 0 : i32
    return %c0_i32, %c0_i32_0 : i32, i32
  }
  func.func @transform_3(%arg0: i32) -> (i32, i32) {
    %c0_i32 = arith.constant 0 : i32
    %c0_i32_0 = arith.constant 0 : i32
    %c0_i32_1 = arith.constant 0 : i32
    return %c0_i32, %c0_i32_0 : i32, i32
  }
  func.func @transform_4(%arg0: i32) -> (i32, i32) {
    %c0_i32 = arith.constant 0 : i32
    %c0_i32_0 = arith.constant 0 : i32
    return %arg0, %c0_i32 : i32, i32
  }
}

module attributes {stable_mosaic.version = 11 : i64} {
  func.func @kernel(%arg0: i32, %arg1: memref<256x16xf32, #tpu.memory_space<vmem>>, %arg2: memref<256x16xf32, #tpu.memory_space<vmem>>, %arg3: memref<16x32xf32, #tpu.memory_space<vmem>>, %arg4: memref<16x32xf32, #tpu.memory_space<vmem>>, %arg5: memref<1x32xf32, #tpu.memory_space<vmem>>, %arg6: memref<1x32xf32, #tpu.memory_space<vmem>>, %arg7: memref<256x32xf32, #tpu.memory_space<vmem>>) attributes {dimension_semantics = [#tpu.dimension_semantics<parallel>], iteration_bounds = array<i64: 2>, scalar_prefetch = 0 : i64, scratch_operands = 0 : i64, tpu.core_type = #tpu.core_type<tc>, window_params = [{transform_indices = @transform_0, window_bounds = array<i64: 256, 16>}, {transform_indices = @transform_1, window_bounds = array<i64: 256, 16>}, {pipeline_mode = #tpu.pipeline_mode<synchronous>, transform_indices = @transform_2, window_bounds = array<i64: 16, 32>}, {pipeline_mode = #tpu.pipeline_mode<synchronous>, transform_indices = @transform_3, window_bounds = array<i64: 16, 32>}, {pipeline_mode = #tpu.pipeline_mode<synchronous>, transform_indices = @transform_4, window_bounds = array<i64: 1, 32>}, {pipeline_mode = #tpu.pipeline_mode<synchronous>, transform_indices = @transform_5, window_bounds = array<i64: 1, 32>}, {transform_indices = @transform_6, window_bounds = array<i64: 256, 32>}]} {
    %c0 = arith.constant 0 : index
    %c0_0 = arith.constant 0 : index
    %0 = vector.load %arg1[%c0, %c0_0] : memref<256x16xf32, #tpu.memory_space<vmem>>, vector<256x16xf32>
    %c0_1 = arith.constant 0 : index
    %c0_2 = arith.constant 0 : index
    %1 = vector.load %arg3[%c0_1, %c0_2] : memref<16x32xf32, #tpu.memory_space<vmem>>, vector<16x32xf32>
    %cst = arith.constant dense<0.000000e+00> : vector<256x32xf32>
    %2 = tpu.matmul %0, %1, %cst {dimension_numbers = #tpu.dot_dimension_numbers<[1], [0], [0], [1], [0, 0, 1, 1], [], []>} : vector<256x16xf32>, vector<16x32xf32>, vector<256x32xf32> -> vector<256x32xf32>
    %c0_3 = arith.constant 0 : index
    %c0_4 = arith.constant 0 : index
    %3 = vector.load %arg2[%c0_3, %c0_4] : memref<256x16xf32, #tpu.memory_space<vmem>>, vector<256x16xf32>
    %c0_5 = arith.constant 0 : index
    %c0_6 = arith.constant 0 : index
    %4 = vector.load %arg4[%c0_5, %c0_6] : memref<16x32xf32, #tpu.memory_space<vmem>>, vector<16x32xf32>
    %cst_7 = arith.constant dense<0.000000e+00> : vector<256x32xf32>
    %5 = tpu.matmul %3, %4, %cst_7 {dimension_numbers = #tpu.dot_dimension_numbers<[1], [0], [0], [1], [0, 0, 1, 1], [], []>} : vector<256x16xf32>, vector<16x32xf32>, vector<256x32xf32> -> vector<256x32xf32>
    %6 = arith.addf %2, %5 : vector<256x32xf32>
    %c0_8 = arith.constant 0 : index
    %c0_9 = arith.constant 0 : index
    %7 = vector.load %arg5[%c0_8, %c0_9] : memref<1x32xf32, #tpu.memory_space<vmem>>, vector<1x32xf32>
    %8 = vector.broadcast %7 : vector<1x32xf32> to vector<256x32xf32>
    %9 = arith.mulf %6, %8 : vector<256x32xf32>
    %c0_10 = arith.constant 0 : index
    %c0_11 = arith.constant 0 : index
    %10 = vector.load %arg6[%c0_10, %c0_11] : memref<1x32xf32, #tpu.memory_space<vmem>>, vector<1x32xf32>
    %11 = vector.broadcast %10 : vector<1x32xf32> to vector<256x32xf32>
    %12 = arith.addf %9, %11 : vector<256x32xf32>
    %13 = arith.negf %12 : vector<256x32xf32>
    %14 = math.exp %13 : vector<256x32xf32>
    %cst_12 = arith.constant 1.000000e+00 : f32
    %15 = vector.broadcast %cst_12 : f32 to vector<256x32xf32>
    %16 = arith.addf %15, %14 : vector<256x32xf32>
    %17 = arith.divf %15, %16 : vector<256x32xf32>
    %18 = arith.mulf %12, %17 : vector<256x32xf32>
    %c0_13 = arith.constant 0 : index
    %c0_14 = arith.constant 0 : index
    %19 = vector.load %arg7[%c0_13, %c0_14] : memref<256x32xf32, #tpu.memory_space<vmem>>, vector<256x32xf32>
    tpu.vector_store %arg7[%c0_13, %c0_14], %18 {strides = array<i32>} : memref<256x32xf32, #tpu.memory_space<vmem>>, vector<256x32xf32>,
    return
  }
  func.func @transform_0(%arg0: i32) -> (i32, i32) {
    %c0_i32 = arith.constant 0 : i32
    %c0_i32_0 = arith.constant 0 : i32
    return %arg0, %c0_i32 : i32, i32
  }
  func.func @transform_1(%arg0: i32) -> (i32, i32) {
    %c0_i32 = arith.constant 0 : i32
    %c0_i32_0 = arith.constant 0 : i32
    return %arg0, %c0_i32 : i32, i32
  }
  func.func @transform_2(%arg0: i32) -> (i32, i32) {
    %c0_i32 = arith.constant 0 : i32
    %c0_i32_0 = arith.constant 0 : i32
    %c0_i32_1 = arith.constant 0 : i32
    return %c0_i32, %c0_i32_0 : i32, i32
  }
  func.func @transform_3(%arg0: i32) -> (i32, i32) {
    %c0_i32 = arith.constant 0 : i32
    %c0_i32_0 = arith.constant 0 : i32
    %c0_i32_1 = arith.constant 0 : i32
    return %c0_i32, %c0_i32_0 : i32, i32
  }
  func.func @transform_4(%arg0: i32) -> (i32, i32) {
    %c0_i32 = arith.constant 0 : i32
    %c0_i32_0 = arith.constant 0 : i32
    %c0_i32_1 = arith.constant 0 : i32
    return %c0_i32, %c0_i32_0 : i32, i32
  }
  func.func @transform_5(%arg0: i32) -> (i32, i32) {
    %c0_i32 = arith.constant 0 : i32
    %c0_i32_0 = arith.constant 0 : i32
    %c0_i32_1 = arith.constant 0 : i32
    return %c0_i32, %c0_i32_0 : i32, i32
  }
  func.func @transform_6(%arg0: i32) -> (i32, i32) {
    %c0_i32 = arith.constant 0 : i32
    %c0_i32_0 = arith.constant 0 : i32
    return %arg0, %c0_i32 : i32, i32
  }
}

module attributes {stable_mosaic.version = 11 : i64} {
  func.func @kernel(%arg0: i32, %arg1: memref<256x144xf32, #tpu.memory_space<vmem>>, %arg2: memref<144x16xf32, #tpu.memory_space<vmem>>, %arg3: memref<1x16xf32, #tpu.memory_space<vmem>>, %arg4: memref<1x16xf32, #tpu.memory_space<vmem>>, %arg5: memref<256x16xf32, #tpu.memory_space<vmem>>, %arg6: memref<256x16xf32, #tpu.memory_space<vmem>>) attributes {dimension_semantics = [#tpu.dimension_semantics<parallel>], iteration_bounds = array<i64: 2>, scalar_prefetch = 0 : i64, scratch_operands = 0 : i64, tpu.core_type = #tpu.core_type<tc>, window_params = [{transform_indices = @transform_0, window_bounds = array<i64: 256, 144>}, {pipeline_mode = #tpu.pipeline_mode<synchronous>, transform_indices = @transform_1, window_bounds = array<i64: 144, 16>}, {pipeline_mode = #tpu.pipeline_mode<synchronous>, transform_indices = @transform_2, window_bounds = array<i64: 1, 16>}, {pipeline_mode = #tpu.pipeline_mode<synchronous>, transform_indices = @transform_3, window_bounds = array<i64: 1, 16>}, {transform_indices = @transform_4, window_bounds = array<i64: 256, 16>}, {transform_indices = @transform_5, window_bounds = array<i64: 256, 16>}]} {
    %c0 = arith.constant 0 : index
    %c0_0 = arith.constant 0 : index
    %0 = vector.load %arg1[%c0, %c0_0] : memref<256x144xf32, #tpu.memory_space<vmem>>, vector<256x144xf32>
    %c0_1 = arith.constant 0 : index
    %c0_2 = arith.constant 0 : index
    %1 = vector.load %arg2[%c0_1, %c0_2] : memref<144x16xf32, #tpu.memory_space<vmem>>, vector<144x16xf32>
    %cst = arith.constant dense<0.000000e+00> : vector<256x16xf32>
    %2 = tpu.matmul %0, %1, %cst {dimension_numbers = #tpu.dot_dimension_numbers<[1], [0], [0], [1], [0, 0, 1, 1], [], []>} : vector<256x144xf32>, vector<144x16xf32>, vector<256x16xf32> -> vector<256x16xf32>
    %c0_3 = arith.constant 0 : index
    %c0_4 = arith.constant 0 : index
    %3 = vector.load %arg3[%c0_3, %c0_4] : memref<1x16xf32, #tpu.memory_space<vmem>>, vector<1x16xf32>
    %4 = vector.broadcast %3 : vector<1x16xf32> to vector<256x16xf32>
    %5 = arith.mulf %2, %4 : vector<256x16xf32>
    %c0_5 = arith.constant 0 : index
    %c0_6 = arith.constant 0 : index
    %6 = vector.load %arg4[%c0_5, %c0_6] : memref<1x16xf32, #tpu.memory_space<vmem>>, vector<1x16xf32>
    %7 = vector.broadcast %6 : vector<1x16xf32> to vector<256x16xf32>
    %8 = arith.addf %5, %7 : vector<256x16xf32>
    %9 = arith.negf %8 : vector<256x16xf32>
    %10 = math.exp %9 : vector<256x16xf32>
    %cst_7 = arith.constant 1.000000e+00 : f32
    %11 = vector.broadcast %cst_7 : f32 to vector<256x16xf32>
    %12 = arith.addf %11, %10 : vector<256x16xf32>
    %13 = arith.divf %11, %12 : vector<256x16xf32>
    %14 = arith.mulf %8, %13 : vector<256x16xf32>
    %c0_8 = arith.constant 0 : index
    %c0_9 = arith.constant 0 : index
    %15 = vector.load %arg5[%c0_8, %c0_9] : memref<256x16xf32, #tpu.memory_space<vmem>>, vector<256x16xf32>
    %16 = arith.addf %14, %15 : vector<256x16xf32>
    %c0_10 = arith.constant 0 : index
    %c0_11 = arith.constant 0 : index
    %17 = vector.load %arg6[%c0_10, %c0_11] : memref<256x16xf32, #tpu.memory_space<vmem>>, vector<256x16xf32>
    tpu.vector_store %arg6[%c0_10, %c0_11], %16 {strides = array<i32>} : memref<256x16xf32, #tpu.memory_space<vmem>>, vector<256x16xf32>,
    return
  }
  func.func @transform_0(%arg0: i32) -> (i32, i32) {
    %c0_i32 = arith.constant 0 : i32
    %c0_i32_0 = arith.constant 0 : i32
    return %arg0, %c0_i32 : i32, i32
  }
  func.func @transform_1(%arg0: i32) -> (i32, i32) {
    %c0_i32 = arith.constant 0 : i32
    %c0_i32_0 = arith.constant 0 : i32
    %c0_i32_1 = arith.constant 0 : i32
    return %c0_i32, %c0_i32_0 : i32, i32
  }
  func.func @transform_2(%arg0: i32) -> (i32, i32) {
    %c0_i32 = arith.constant 0 : i32
    %c0_i32_0 = arith.constant 0 : i32
    %c0_i32_1 = arith.constant 0 : i32
    return %c0_i32, %c0_i32_0 : i32, i32
  }
  func.func @transform_3(%arg0: i32) -> (i32, i32) {
    %c0_i32 = arith.constant 0 : i32
    %c0_i32_0 = arith.constant 0 : i32
    %c0_i32_1 = arith.constant 0 : i32
    return %c0_i32, %c0_i32_0 : i32, i32
  }
  func.func @transform_4(%arg0: i32) -> (i32, i32) {
    %c0_i32 = arith.constant 0 : i32
    %c0_i32_0 = arith.constant 0 : i32
    return %arg0, %c0_i32 : i32, i32
  }
  func.func @transform_5(%arg0: i32) -> (i32, i32) {
    %c0_i32 = arith.constant 0 : i32
    %c0_i32_0 = arith.constant 0 : i32
    return %arg0, %c0_i32 : i32, i32
  }
}

</mosaic_0001>

<llo_original>
// kernel: c3_forward_pallas.7
$region0: #{c3_forward_pallas.7}
  #allocation0 [shape = 'u32[]', space=smem, size = 0x4, offset = 0x4, fixed_abs, tag = 'smem constant byte address 0x4 - core index']
  #allocation1 [shape = 'u32[72,128]{1,0:T(1,128)}', space=vmem, size = 0x9000, scoped, tag = 'internal scratch']
  %s0 = inlined_call_operand.vmem [shape: f32[512,16], index: 0, kind: input, shape index: {}]
  %s1 = inlined_call_operand.vmem [shape: f32[16,16], index: 1, kind: input, shape index: {}]
  %s2 = inlined_call_operand.vmem [shape: f32[1,16], index: 2, kind: input, shape index: {}]
  %s3 = inlined_call_operand.vmem [shape: f32[1,16], index: 3, kind: input, shape index: {}]
  %s4 = inlined_call_operand.vmem [shape: f32[512,16], index: 4, kind: output, shape index: {}]
  %s5 = sld [smem:[#allocation0]]
  $region49: #{c3_forward_pallas.7} parent=0
    _
  %s7 = ssub.s32 1, %s5
  %s8 = scalar_select 0, %s7, %s5
  loop: start=0, step=1, limit=4
  $region2: #{c3_forward_pallas.7} parent=0 // loop_pre_header
    _
  $region3: #{c3_forward_pallas.7} parent=0 // loop_header
    %s10 = sphi 0, %s14
    %p11 = scmp.ge.s32.totalorder %s10, 4
    %s20 = sphi 0, %s22
    %s23 = sphi 0, %s20
    %s24 = sphi 0, %s23
    %s40 = sphi 0, %s24
    %s44 = sphi 0, %s44
    %s46 = sphi 0, %s44
    %s47 = sphi 0, %s46
    %s61 = sphi 0, %s47
    %s65 = sphi 0, %s65
    %s67 = sphi 0, %s65
    %s68 = sphi 0, %s67
    %s82 = sphi 0, %s68
    %s86 = sphi 0, %s86
    %s88 = sphi 0, %s86
    %s89 = sphi 0, %s88
    %s103 = sphi 0, %s89
    %s109 = sphi 0, %s111
    %s112 = sphi 0, %s109
    %s113 = sphi 0, %s112
    %s129 = sphi 0, %s113
  $region4: #{c3_forward_pallas.7} parent=0 // loop_header_branch
    %13 = sbr.rel (%p11) target = $region8
  $region5: #{c3_forward_pallas.7} parent=0 // loop_body
    %s15 = ssub.s32 %s10, 1
    %s16 = ssub.s32 %s10, 2
    %s17 = sadd.s32 %s10, 1
    %s18 = ssub.s32 %s10, %s17
    %p19 = scmp.eq.s32.totalorder %s18, 0
    %s21 = sadd.s32 %s20, 1
    %s22 = scalar_select %p19, %s20, %s21
    %p25 = pneg %p19
    %p26 = scmp.eq.s32.totalorder %s10, 1
    %p27 = por %p25, %p26
    %p28 = scmp.ne.s32.totalorder %s20, %s23
    %p29 = scmp.eq.s32.totalorder %s10, 0
    %p30 = por %p28, %p29
    %p31 = scmp.ne.s32.totalorder %s20, %s23
    %p32 = scmp.eq.s32.totalorder %s15, 1
    %p33 = por %p31, %p32
    %p34 = scmp.ne.s32.totalorder %s23, %s24
    %p35 = scmp.eq.s32.totalorder %s15, 0
    %p36 = por %p34, %p35
    %p37 = scmp.ne.s32.totalorder %s23, %s24
    %p38 = scmp.eq.s32.totalorder %s16, 1
    %p39 = por %p37, %p38
    %p41 = scmp.ne.s32.totalorder %s24, %s40
    %p42 = scmp.eq.s32.totalorder %s16, 0
    %p43 = por %p41, %p42
    %s45 = sadd.s32 %s44, 1
    %p48 = scmp.eq.s32.totalorder %s10, 1
    %p49 = scmp.ne.s32.totalorder %s44, %s46
    %p50 = scmp.eq.s32.totalorder %s10, 0
    %p51 = por %p49, %p50
    %p52 = scmp.ne.s32.totalorder %s44, %s46
    %p53 = scmp.eq.s32.totalorder %s15, 1
    %p54 = por %p52, %p53
    %p55 = scmp.ne.s32.totalorder %s46, %s47
    %p56 = scmp.eq.s32.totalorder %s15, 0
    %p57 = por %p55, %p56
    %p58 = scmp.ne.s32.totalorder %s46, %s47
    %p59 = scmp.eq.s32.totalorder %s16, 1
    %p60 = por %p58, %p59
    %p62 = scmp.ne.s32.totalorder %s47, %s61
    %p63 = scmp.eq.s32.totalorder %s16, 0
    %p64 = por %p62, %p63
    %s66 = sadd.s32 %s65, 1
    %p69 = scmp.eq.s32.totalorder %s10, 1
    %p70 = scmp.ne.s32.totalorder %s65, %s67
    %p71 = scmp.eq.s32.totalorder %s10, 0
    %p72 = por %p70, %p71
    %p73 = scmp.ne.s32.totalorder %s65, %s67
    %p74 = scmp.eq.s32.totalorder %s15, 1
    %p75 = por %p73, %p74
    %p76 = scmp.ne.s32.totalorder %s67, %s68
    %p77 = scmp.eq.s32.totalorder %s15, 0
    %p78 = por %p76, %p77
    %p79 = scmp.ne.s32.totalorder %s67, %s68
    %p80 = scmp.eq.s32.totalorder %s16, 1
    %p81 = por %p79, %p80
    %p83 = scmp.ne.s32.totalorder %s68, %s82
    %p84 = scmp.eq.s32.totalorder %s16, 0
    %p85 = por %p83, %p84
    %s87 = sadd.s32 %s86, 1
    %p90 = scmp.eq.s32.totalorder %s10, 1
    %p91 = scmp.ne.s32.totalorder %s86, %s88
    %p92 = scmp.eq.s32.totalorder %s10, 0
    %p93 = por %p91, %p92
    %p94 = scmp.ne.s32.totalorder %s86, %s88
    %p95 = scmp.eq.s32.totalorder %s15, 1
    %p96 = por %p94, %p95
    %p97 = scmp.ne.s32.totalorder %s88, %s89
    %p98 = scmp.eq.s32.totalorder %s15, 0
    %p99 = por %p97, %p98
    %p100 = scmp.ne.s32.totalorder %s88, %s89
    %p101 = scmp.eq.s32.totalorder %s16, 1
    %p102 = por %p100, %p101
    %p104 = scmp.ne.s32.totalorder %s89, %s103
    %p105 = scmp.eq.s32.totalorder %s16, 0
    %p106 = por %p104, %p105
    %s107 = ssub.s32 %s10, %s17
    %p108 = scmp.eq.s32.totalorder %s107, 0
    %s110 = sadd.s32 %s109, 1
    %s111 = scalar_select %p108, %s109, %s110
    %p114 = pneg %p108
    %p115 = scmp.eq.s32.totalorder %s10, 1
    %p116 = por %p114, %p115
    %p117 = scmp.ne.s32.totalorder %s109, %s112
    %p118 = scmp.eq.s32.totalorder %s10, 0
    %p119 = por %p117, %p118
    %p120 = scmp.ne.s32.totalorder %s109, %s112
    %p121 = scmp.eq.s32.totalorder %s15, 1
    %p122 = por %p120, %p121
    %p123 = scmp.ne.s32.totalorder %s112, %s113
    %p124 = scmp.eq.s32.totalorder %s15, 0
    %p125 = por %p123, %p124
    %p126 = scmp.ne.s32.totalorder %s112, %s113
    %p127 = scmp.eq.s32.totalorder %s16, 1
    %p128 = por %p126, %p127
    %p130 = scmp.ne.s32.totalorder %s113, %s129
    %p131 = scmp.eq.s32.totalorder %s16, 0
    %p132 = por %p130, %p131
    %p133 = scmp.le.s32.totalorder 1, %s10
    %p134 = scmp.lt.s32.totalorder %s10, 3
    %p135 = pnand %p133, %p134
    %p136 = pneg %p135
    // Predicated region
    $region9: #{c3_forward_pallas.7} parent=5 // pred_check
      _
    $region10: #{c3_forward_pallas.7} parent=5 // pred_check_branch
      %138 = sbr.rel (%p135) target = $region12
    $region11: #{c3_forward_pallas.7} parent=5 // pred_region
      %s139 = ssub.s32 %s10, 1
      // Predicated region
      $region13: #{c3_forward_pallas.7} parent=11 // pred_check
        %p140 = pneg %p57
      $region14: #{c3_forward_pallas.7} parent=11 // pred_check_branch
        %142 = sbr.rel (%p140) target = $region16
      $region15: #{c3_forward_pallas.7} parent=11 // pred_region
        _
      $region16: #{c3_forward_pallas.7} parent=11 // pred_fallthru
        _
      // Predicated region
      $region17: #{c3_forward_pallas.7} parent=11 // pred_check
        %p143 = pneg %p78
      $region18: #{c3_forward_pallas.7} parent=11 // pred_check_branch
        %145 = sbr.rel (%p143) target = $region20
      $region19: #{c3_forward_pallas.7} parent=11 // pred_region
        _
      $region20: #{c3_forward_pallas.7} parent=11 // pred_fallthru
        _
      // Predicated region
      $region21: #{c3_forward_pallas.7} parent=11 // pred_check
        %p146 = pneg %p99
      $region22: #{c3_forward_pallas.7} parent=11 // pred_check_branch
        %148 = sbr.rel (%p146) target = $region24
      $region23: #{c3_forward_pallas.7} parent=11 // pred_region
        _
      $region24: #{c3_forward_pallas.7} parent=11 // pred_fallthru
        _
    $region12: #{c3_forward_pallas.7} parent=5 // pred_fallthru
      _
    %p149 = scmp.lt.s32.totalorder %s10, 2
    // Predicated region
    $region25: #{c3_forward_pallas.7} parent=5 // pred_check
      %p150 = pneg %p149
    $region26: #{c3_forward_pallas.7} parent=5 // pred_check_branch
      %152 = sbr.rel (%p150) target = $region28
    $region27: #{c3_forward_pallas.7} parent=5 // pred_region
      // Predicated region
      $region29: #{c3_forward_pallas.7} parent=27 // pred_check
        %p153 = pneg %p30
      $region30: #{c3_forward_pallas.7} parent=27 // pred_check_branch
        %155 = sbr.rel (%p153) target = $region32
      $region31: #{c3_forward_pallas.7} parent=27 // pred_region
        %s156 = smul.u32 32, %s10
        %p157 = scmp.lt.s32.totalorder %s156, 63
        %s158 = scalar_select %p157, %s156, 63
        %s159 = smul.addr %s158, 8
        %s160 = scalar_lea.vmem %s0, %s159
        %s161 = smul.u32 32, %s10
      $region32: #{c3_forward_pallas.7} parent=27 // pred_fallthru
        _
    $region28: #{c3_forward_pallas.7} parent=5 // pred_fallthru
      _
    %p162 = scmp.le.s32.totalorder 1, %s10
    %p163 = scmp.lt.s32.totalorder %s10, 3
    %p164 = pnand %p162, %p163
    %p165 = pneg %p164
    // Predicated region
    $region33: #{c3_forward_pallas.7} parent=5 // pred_check
      _
    $region34: #{c3_forward_pallas.7} parent=5 // pred_check_branch
      %167 = sbr.rel (%p164) target = $region36
    $region35: #{c3_forward_pallas.7} parent=5 // pred_region
      %s168 = ssub.s32 %s10, 1
      %s169 = smul.u32 32, %s15
      %p170 = scmp.lt.s32.totalorder %s169, 63
      %s171 = scalar_select %p170, %s169, 63
      %s172 = smul.addr %s171, 8
      %s173 = scalar_lea.vmem %s0, %s172
      %p174 = pneg %p36
      %p175 = pneg %p33
      %p176 = pneg %p57
      %p177 = pneg %p54
      %p178 = pneg %p78
      %p179 = pneg %p75
      %p180 = pneg %p99
      %p181 = pneg %p96
      %p182 = pneg %p125
      %p183 = pneg %p122
      %s184 = smul.u32 32, %s15
      %p185 = scmp.lt.s32.totalorder %s184, 63
      %s186 = scalar_select %p185, %s184, 63
      %s187 = smul.addr %s186, 8
      %s188 = scalar_lea.vmem %s4, %s187
      %s189 = smul.u32 32, %s15
      %p190 = scmp.lt.s32.totalorder %s189, 63
      %s191 = scalar_select %p190, %s189, 63
      %s192 = smul.addr %s191, 8
      %s193 = scalar_lea.vmem %s0, %s192
      %s194 = smul.u32 32, %s15
      %s195 = smul.u32 32, %s15
      %p196 = scmp.lt.s32.totalorder %s195, 63
      %s197 = scalar_select %p196, %s195, 63
      %s198 = smul.addr %s197, 8
      %s199 = scalar_lea.vmem %s4, %s198
      %s200 = smul.u32 32, %s15
      %v201 = vld [vmem:[%s193] sm:$0xff]
      %v202 = vld [vmem:[%s193 + $0x8] sm:$0xff]
      %v203 = vld [vmem:[%s193 + $0x10] sm:$0xff]
      %v204 = vld [vmem:[%s193 + $0x18] sm:$0xff]
      %v205 = vld [vmem:[%s193 + $0x20] sm:$0xff]
      %v206 = vld [vmem:[%s193 + $0x28] sm:$0xff]
      %v207 = vld [vmem:[%s193 + $0x30] sm:$0xff]
      %v208 = vld [vmem:[%s193 + $0x38] sm:$0xff]
      %v209 = vld [vmem:[%s193 + $0x40] sm:$0xff]
      %v210 = vld [vmem:[%s193 + $0x48] sm:$0xff]
      %v211 = vld [vmem:[%s193 + $0x50] sm:$0xff]
      %v212 = vld [vmem:[%s193 + $0x58] sm:$0xff]
      %v213 = vld [vmem:[%s193 + $0x60] sm:$0xff]
      %v214 = vld [vmem:[%s193 + $0x68] sm:$0xff]
      %v215 = vld [vmem:[%s193 + $0x70] sm:$0xff]
      %v216 = vld [vmem:[%s193 + $0x78] sm:$0xff]
      %v217 = vld [vmem:[%s193 + $0x80] sm:$0xff]
      %v218 = vld [vmem:[%s193 + $0x88] sm:$0xff]
      %v219 = vld [vmem:[%s193 + $0x90] sm:$0xff]
      %v220 = vld [vmem:[%s193 + $0x98] sm:$0xff]
      %v221 = vld [vmem:[%s193 + $0xa0] sm:$0xff]
      %v222 = vld [vmem:[%s193 + $0xa8] sm:$0xff]
      %v223 = vld [vmem:[%s193 + $0xb0] sm:$0xff]
      %v224 = vld [vmem:[%s193 + $0xb8] sm:$0xff]
      %v225 = vld [vmem:[%s193 + $0xc0] sm:$0xff]
      %v226 = vld [vmem:[%s193 + $0xc8] sm:$0xff]
      %v227 = vld [vmem:[%s193 + $0xd0] sm:$0xff]
      %v228 = vld [vmem:[%s193 + $0xd8] sm:$0xff]
      %v229 = vld [vmem:[%s193 + $0xe0] sm:$0xff]
      %v230 = vld [vmem:[%s193 + $0xe8] sm:$0xff]
      %v231 = vld [vmem:[%s193 + $0xf0] sm:$0xff]
      %v232 = vld [vmem:[%s193 + $0xf8] sm:$0xff]
      %v233 = vld [vmem:[%s1] sm:$0xff]
      %v234 = vld [vmem:[%s1 + $0x8] sm:$0xff]
      %vm235 = vcmask 130048
      %v237 = vsel %vm235, %v201, 0
      %v240 = vsel %vm235, %v202, 0
      %v243 = vsel %vm235, %v203, 0
      %v246 = vsel %vm235, %v204, 0
      %v249 = vsel %vm235, %v205, 0
      %v252 = vsel %vm235, %v206, 0
      %v255 = vsel %vm235, %v207, 0
      %v258 = vsel %vm235, %v208, 0
      %v261 = vsel %vm235, %v209, 0
      %v264 = vsel %vm235, %v210, 0
      %v267 = vsel %vm235, %v211, 0
      %v270 = vsel %vm235, %v212, 0
      %v273 = vsel %vm235, %v213, 0
      %v276 = vsel %vm235, %v214, 0
      %v279 = vsel %vm235, %v215, 0
      %v282 = vsel %vm235, %v216, 0
      %v285 = vsel %vm235, %v217, 0
      %v288 = vsel %vm235, %v218, 0
      %v291 = vsel %vm235, %v219, 0
      %v294 = vsel %vm235, %v220, 0
      %v297 = vsel %vm235, %v221, 0
      %v300 = vsel %vm235, %v222, 0
      %v303 = vsel %vm235, %v223, 0
      %v306 = vsel %vm235, %v224, 0
      %v309 = vsel %vm235, %v225, 0
      %v312 = vsel %vm235, %v226, 0
      %v315 = vsel %vm235, %v227, 0
      %v318 = vsel %vm235, %v228, 0
      %v321 = vsel %vm235, %v229, 0
      %v324 = vsel %vm235, %v230, 0
      %v327 = vsel %vm235, %v231, 0
      %v330 = vsel %vm235, %v232, 0
      %332 = vmatpush.msra.mxu0 0.0
      %333 = vmatpush.msra.mxu0 0.0
      %334 = vmatpush.msra.mxu0 0.0
      %335 = vmatpush.msra.mxu0 0.0
      %336 = vmatpush.msra.mxu0 0.0
      %337 = vmatpush.msra.mxu0 0.0
      %338 = vmatpush.msra.mxu0 0.0
      %339 = vmatpush.msra.mxu0 0.0
      %340 = vmatpush.msra.mxu0 0.0
      %341 = vmatpush.msra.mxu0 0.0
      %342 = vmatpush.msra.mxu0 0.0
      %343 = vmatpush.msra.mxu0 0.0
      %344 = vmatpush.msra.mxu0 0.0
      %345 = vmatpush.msra.mxu0 0.0
      %346 = vmatpush.msra.mxu0 %v234
      %347 = vmatpush.msra.mxu0 %v233
      %348 = vmatmul.f32.gmra.mxu0 %v237
      %v349 = vpop.f32.mrf.mxu0
      %v350 = vadd.f32 0.0, %v349
      %351 = vmatmul.f32.gmra.mxu0 %v240
      %v352 = vpop.f32.mrf.mxu0
      %v353 = vadd.f32 0.0, %v352
      %354 = vmatmul.f32.gmra.mxu0 %v243
      %v355 = vpop.f32.mrf.mxu0
      %v356 = vadd.f32 0.0, %v355
      %357 = vmatmul.f32.gmra.mxu0 %v246
      %v358 = vpop.f32.mrf.mxu0
      %v359 = vadd.f32 0.0, %v358
      %360 = vmatmul.f32.gmra.mxu0 %v249
      %v361 = vpop.f32.mrf.mxu0
      %v362 = vadd.f32 0.0, %v361
      %363 = vmatmul.f32.gmra.mxu0 %v252
      %v364 = vpop.f32.mrf.mxu0
      %v365 = vadd.f32 0.0, %v364
      %366 = vmatmul.f32.gmra.mxu0 %v255
      %v367 = vpop.f32.mrf.mxu0
      %v368 = vadd.f32 0.0, %v367
      %369 = vmatmul.f32.gmra.mxu0 %v258
      %v370 = vpop.f32.mrf.mxu0
      %v371 = vadd.f32 0.0, %v370
      %372 = vmatmul.f32.gmra.mxu0 %v261
      %v373 = vpop.f32.mrf.mxu0
      %v374 = vadd.f32 0.0, %v373
      %375 = vmatmul.f32.gmra.mxu0 %v264
      %v376 = vpop.f32.mrf.mxu0
      %v377 = vadd.f32 0.0, %v376
      %378 = vmatmul.f32.gmra.mxu0 %v267
      %v379 = vpop.f32.mrf.mxu0
      %v380 = vadd.f32 0.0, %v379
      %381 = vmatmul.f32.gmra.mxu0 %v270
      %v382 = vpop.f32.mrf.mxu0
      %v383 = vadd.f32 0.0, %v382
      %384 = vmatmul.f32.gmra.mxu0 %v273
      %v385 = vpop.f32.mrf.mxu0
      %v386 = vadd.f32 0.0, %v385
      %387 = vmatmul.f32.gmra.mxu0 %v276
      %v388 = vpop.f32.mrf.mxu0
      %v389 = vadd.f32 0.0, %v388
      %390 = vmatmul.f32.gmra.mxu0 %v279
      %v391 = vpop.f32.mrf.mxu0
      %v392 = vadd.f32 0.0, %v391
      %393 = vmatmul.f32.gmra.mxu0 %v282
      %v394 = vpop.f32.mrf.mxu0
      %v395 = vadd.f32 0.0, %v394
      %396 = vmatmul.f32.gmra.mxu0 %v285
      %v397 = vpop.f32.mrf.mxu0
      %v398 = vadd.f32 0.0, %v397
      %399 = vmatmul.f32.gmra.mxu0 %v288
      %v400 = vpop.f32.mrf.mxu0
      %v401 = vadd.f32 0.0, %v400
      %402 = vmatmul.f32.gmra.mxu0 %v291
      %v403 = vpop.f32.mrf.mxu0
      %v404 = vadd.f32 0.0, %v403
      %405 = vmatmul.f32.gmra.mxu0 %v294
      %v406 = vpop.f32.mrf.mxu0
      %v407 = vadd.f32 0.0, %v406
      %408 = vmatmul.f32.gmra.mxu0 %v297
      %v409 = vpop.f32.mrf.mxu0
      %v410 = vadd.f32 0.0, %v409
      %411 = vmatmul.f32.gmra.mxu0 %v300
      %v412 = vpop.f32.mrf.mxu0
      %v413 = vadd.f32 0.0, %v412
      %414 = vmatmul.f32.gmra.mxu0 %v303
      %v415 = vpop.f32.mrf.mxu0
      %v416 = vadd.f32 0.0, %v415
      %417 = vmatmul.f32.gmra.mxu0 %v306
      %v418 = vpop.f32.mrf.mxu0
      %v419 = vadd.f32 0.0, %v418
      %420 = vmatmul.f32.gmra.mxu0 %v309
      %v421 = vpop.f32.mrf.mxu0
      %v422 = vadd.f32 0.0, %v421
      %423 = vmatmul.f32.gmra.mxu0 %v312
      %v424 = vpop.f32.mrf.mxu0
      %v425 = vadd.f32 0.0, %v424
      %426 = vmatmul.f32.gmra.mxu0 %v315
      %v427 = vpop.f32.mrf.mxu0
      %v428 = vadd.f32 0.0, %v427
      %429 = vmatmul.f32.gmra.mxu0 %v318
      %v430 = vpop.f32.mrf.mxu0
      %v431 = vadd.f32 0.0, %v430
      %432 = vmatmul.f32.gmra.mxu0 %v321
      %v433 = vpop.f32.mrf.mxu0
      %v434 = vadd.f32 0.0, %v433
      %435 = vmatmul.f32.gmra.mxu0 %v324
      %v436 = vpop.f32.mrf.mxu0
      %v437 = vadd.f32 0.0, %v436
      %438 = vmatmul.f32.gmra.mxu0 %v327
      %v439 = vpop.f32.mrf.mxu0
      %v440 = vadd.f32 0.0, %v439
      %441 = vmatmul.f32.gmra.mxu0 %v330
      %v442 = vpop.f32.mrf.mxu0
      %v443 = vadd.f32 0.0, %v442
      %444 = vdwg.mxu0
      %v445 = vld [vmem:[%s2] sm:$0x1]
      %v447 = vperm.slane %v445, 0
      %v449 = vmul.f32 %v350, %v447
      %v450 = vmul.f32 %v353, %v447
      %v451 = vmul.f32 %v356, %v447
      %v452 = vmul.f32 %v359, %v447
      %v453 = vmul.f32 %v362, %v447
      %v454 = vmul.f32 %v365, %v447
      %v455 = vmul.f32 %v368, %v447
      %v456 = vmul.f32 %v371, %v447
      %v457 = vmul.f32 %v374, %v447
      %v458 = vmul.f32 %v377, %v447
      %v459 = vmul.f32 %v380, %v447
      %v460 = vmul.f32 %v383, %v447
      %v461 = vmul.f32 %v386, %v447
      %v462 = vmul.f32 %v389, %v447
      %v463 = vmul.f32 %v392, %v447
      %v464 = vmul.f32 %v395, %v447
      %v465 = vmul.f32 %v398, %v447
      %v466 = vmul.f32 %v401, %v447
      %v467 = vmul.f32 %v404, %v447
      %v468 = vmul.f32 %v407, %v447
      %v469 = vmul.f32 %v410, %v447
      %v470 = vmul.f32 %v413, %v447
      %v471 = vmul.f32 %v416, %v447
      %v472 = vmul.f32 %v419, %v447
      %v473 = vmul.f32 %v422, %v447
      %v474 = vmul.f32 %v425, %v447
      %v475 = vmul.f32 %v428, %v447
      %v476 = vmul.f32 %v431, %v447
      %v477 = vmul.f32 %v434, %v447
      %v478 = vmul.f32 %v437, %v447
      %v479 = vmul.f32 %v440, %v447
      %v480 = vmul.f32 %v443, %v447
      %v481 = vld [vmem:[%s3] sm:$0x1]
      %v483 = vperm.slane %v481, 0
      %v485 = vadd.f32 %v449, %v483
      %v486 = vadd.f32 %v450, %v483
      %v487 = vadd.f32 %v451, %v483
      %v488 = vadd.f32 %v452, %v483
      %v489 = vadd.f32 %v453, %v483
      %v490 = vadd.f32 %v454, %v483
      %v491 = vadd.f32 %v455, %v483
      %v492 = vadd.f32 %v456, %v483
      %v493 = vadd.f32 %v457, %v483
      %v494 = vadd.f32 %v458, %v483
      %v495 = vadd.f32 %v459, %v483
      %v496 = vadd.f32 %v460, %v483
      %v497 = vadd.f32 %v461, %v483
      %v498 = vadd.f32 %v462, %v483
      %v499 = vadd.f32 %v463, %v483
      %v500 = vadd.f32 %v464, %v483
      %v501 = vadd.f32 %v465, %v483
      %v502 = vadd.f32 %v466, %v483
      %v503 = vadd.f32 %v467, %v483
      %v504 = vadd.f32 %v468, %v483
      %v505 = vadd.f32 %v469, %v483
      %v506 = vadd.f32 %v470, %v483
      %v507 = vadd.f32 %v471, %v483
      %v508 = vadd.f32 %v472, %v483
      %v509 = vadd.f32 %v473, %v483
      %v510 = vadd.f32 %v474, %v483
      %v511 = vadd.f32 %v475, %v483
      %v512 = vadd.f32 %v476, %v483
      %v513 = vadd.f32 %v477, %v483
      %v514 = vadd.f32 %v478, %v483
      %v515 = vadd.f32 %v479, %v483
      %v516 = vadd.f32 %v480, %v483
      %v517 = vxor.u32 %v485, 2147483648
      %v518 = vxor.u32 %v486, 2147483648
      %v519 = vxor.u32 %v487, 2147483648
      %v520 = vxor.u32 %v488, 2147483648
      %v521 = vxor.u32 %v489, 2147483648
      %v522 = vxor.u32 %v490, 2147483648
      %v523 = vxor.u32 %v491, 2147483648
      %v524 = vxor.u32 %v492, 2147483648
      %v525 = vxor.u32 %v493, 2147483648
      %v526 = vxor.u32 %v494, 2147483648
      %v527 = vxor.u32 %v495, 2147483648
      %v528 = vxor.u32 %v496, 2147483648
      %v529 = vxor.u32 %v497, 2147483648
      %v530 = vxor.u32 %v498, 2147483648
      %v531 = vxor.u32 %v499, 2147483648
      %v532 = vxor.u32 %v500, 2147483648
      %v533 = vxor.u32 %v501, 2147483648
      %v534 = vxor.u32 %v502, 2147483648
      %v535 = vxor.u32 %v503, 2147483648
      %v536 = vxor.u32 %v504, 2147483648
      %v537 = vxor.u32 %v505, 2147483648
      %v538 = vxor.u32 %v506, 2147483648
      %v539 = vxor.u32 %v507, 2147483648
      %v540 = vxor.u32 %v508, 2147483648
      %v541 = vxor.u32 %v509, 2147483648
      %v542 = vxor.u32 %v510, 2147483648
      %v543 = vxor.u32 %v511, 2147483648
      %v544 = vxor.u32 %v512, 2147483648
      %v545 = vxor.u32 %v513, 2147483648
      %v546 = vxor.u32 %v514, 2147483648
      %v547 = vxor.u32 %v515, 2147483648
      %v548 = vxor.u32 %v516, 2147483648
      %v549 = vmul.f32 %v517, 1.442695
      %v550 = vpow.pop %v549
      %v551 = vmul.f32 %v518, 1.442695
      %v552 = vpow.pop %v551
      %v553 = vmul.f32 %v519, 1.442695
      %v554 = vpow.pop %v553
      %v555 = vmul.f32 %v520, 1.442695
      %v556 = vpow.pop %v555
      %v557 = vmul.f32 %v521, 1.442695
      %v558 = vpow.pop %v557
      %v559 = vmul.f32 %v522, 1.442695
      %v560 = vpow.pop %v559
      %v561 = vmul.f32 %v523, 1.442695
      %v562 = vpow.pop %v561
      %v563 = vmul.f32 %v524, 1.442695
      %v564 = vpow.pop %v563
      %v565 = vmul.f32 %v525, 1.442695
      %v566 = vpow.pop %v565
      %v567 = vmul.f32 %v526, 1.442695
      %v568 = vpow.pop %v567
      %v569 = vmul.f32 %v527, 1.442695
      %v570 = vpow.pop %v569
      %v571 = vmul.f32 %v528, 1.442695
      %v572 = vpow.pop %v571
      %v573 = vmul.f32 %v529, 1.442695
      %v574 = vpow.pop %v573
      %v575 = vmul.f32 %v530, 1.442695
      %v576 = vpow.pop %v575
      %v577 = vmul.f32 %v531, 1.442695
      %v578 = vpow.pop %v577
      %v579 = vmul.f32 %v532, 1.442695
      %v580 = vpow.pop %v579
      %v581 = vmul.f32 %v533, 1.442695
      %v582 = vpow.pop %v581
      %v583 = vmul.f32 %v534, 1.442695
      %v584 = vpow.pop %v583
      %v585 = vmul.f32 %v535, 1.442695
      %v586 = vpow.pop %v585
      %v587 = vmul.f32 %v536, 1.442695
      %v588 = vpow.pop %v587
      %v589 = vmul.f32 %v537, 1.442695
      %v590 = vpow.pop %v589
      %v591 = vmul.f32 %v538, 1.442695
      %v592 = vpow.pop %v591
      %v593 = vmul.f32 %v539, 1.442695
      %v594 = vpow.pop %v593
      %v595 = vmul.f32 %v540, 1.442695
      %v596 = vpow.pop %v595
      %v597 = vmul.f32 %v541, 1.442695
      %v598 = vpow.pop %v597
      %v599 = vmul.f32 %v542, 1.442695
      %v600 = vpow.pop %v599
      %v601 = vmul.f32 %v543, 1.442695
      %v602 = vpow.pop %v601
      %v603 = vmul.f32 %v544, 1.442695
      %v604 = vpow.pop %v603
      %v605 = vmul.f32 %v545, 1.442695
      %v606 = vpow.pop %v605
      %v607 = vmul.f32 %v546, 1.442695
      %v608 = vpow.pop %v607
      %v609 = vmul.f32 %v547, 1.442695
      %v610 = vpow.pop %v609
      %v611 = vmul.f32 %v548, 1.442695
      %v612 = vpow.pop %v611
      %v613 = vadd.f32 %v550, 1.0
      %v614 = vadd.f32 %v552, 1.0
      %v615 = vadd.f32 %v554, 1.0
      %v616 = vadd.f32 %v556, 1.0
      %v617 = vadd.f32 %v558, 1.0
      %v618 = vadd.f32 %v560, 1.0
      %v619 = vadd.f32 %v562, 1.0
      %v620 = vadd.f32 %v564, 1.0
      %v621 = vadd.f32 %v566, 1.0
      %v622 = vadd.f32 %v568, 1.0
      %v623 = vadd.f32 %v570, 1.0
      %v624 = vadd.f32 %v572, 1.0
      %v625 = vadd.f32 %v574, 1.0
      %v626 = vadd.f32 %v576, 1.0
      %v627 = vadd.f32 %v578, 1.0
      %v628 = vadd.f32 %v580, 1.0
      %v629 = vadd.f32 %v582, 1.0
      %v630 = vadd.f32 %v584, 1.0
      %v631 = vadd.f32 %v586, 1.0
      %v632 = vadd.f32 %v588, 1.0
      %v633 = vadd.f32 %v590, 1.0
      %v634 = vadd.f32 %v592, 1.0
      %v635 = vadd.f32 %v594, 1.0
      %v636 = vadd.f32 %v596, 1.0
      %v637 = vadd.f32 %v598, 1.0
      %v638 = vadd.f32 %v600, 1.0
      %v639 = vadd.f32 %v602, 1.0
      %v640 = vadd.f32 %v604, 1.0
      %v641 = vadd.f32 %v606, 1.0
      %v642 = vadd.f32 %v608, 1.0
      %v643 = vadd.f32 %v610, 1.0
      %v644 = vadd.f32 %v612, 1.0
      %v645 = vrcp.pop %v613
      %v646 = vmul.f32 %v613, %v645
      %v647 = vsub.f32 1.0, %v646
      %v648 = vmul.f32 %v645, %v647
      %v649 = vadd.f32 %v645, %v648
      %vm650 = vweird.f32 %v613
      %vm651 = vweird.f32 %v645
      %vm652 = vmor %vm650, %vm651
      %v653 = vsel %vm652, %v645, %v649
      %v654 = vand.u32 2147483647, %v613
      %vm655 = vcmp.eq.f32.partialorder %v654, 8.507059e+37
      %v656 = vand.u32 %v613, 2147483648
      %v657 = vor.u32 1.1754944e-38, %v656
      %v658 = vsel %vm655, %v657, %v653
      %v659 = vmul.f32 1.0, %v658
      %v660 = vrcp.pop %v614
      %v661 = vmul.f32 %v614, %v660
      %v662 = vsub.f32 1.0, %v661
      %v663 = vmul.f32 %v660, %v662
      %v664 = vadd.f32 %v660, %v663
      %vm665 = vweird.f32 %v614
      %vm666 = vweird.f32 %v660
      %vm667 = vmor %vm665, %vm666
      %v668 = vsel %vm667, %v660, %v664
      %v669 = vand.u32 2147483647, %v614
      %vm670 = vcmp.eq.f32.partialorder %v669, 8.507059e+37
      %v671 = vand.u32 %v614, 2147483648
      %v672 = vor.u32 1.1754944e-38, %v671
      %v673 = vsel %vm670, %v672, %v668
      %v674 = vmul.f32 1.0, %v673
      %v675 = vrcp.pop %v615
      %v676 = vmul.f32 %v615, %v675
      %v677 = vsub.f32 1.0, %v676
      %v678 = vmul.f32 %v675, %v677
      %v679 = vadd.f32 %v675, %v678
      %vm680 = vweird.f32 %v615
      %vm681 = vweird.f32 %v675
      %vm682 = vmor %vm680, %vm681
      %v683 = vsel %vm682, %v675, %v679
      %v684 = vand.u32 2147483647, %v615
      %vm685 = vcmp.eq.f32.partialorder %v684, 8.507059e+37
      %v686 = vand.u32 %v615, 2147483648
      %v687 = vor.u32 1.1754944e-38, %v686
      %v688 = vsel %vm685, %v687, %v683
      %v689 = vmul.f32 1.0, %v688
      %v690 = vrcp.pop %v616
      %v691 = vmul.f32 %v616, %v690
      %v692 = vsub.f32 1.0, %v691
      %v693 = vmul.f32 %v690, %v692
      %v694 = vadd.f32 %v690, %v693
      %vm695 = vweird.f32 %v616
      %vm696 = vweird.f32 %v690
      %vm697 = vmor %vm695, %vm696
      %v698 = vsel %vm697, %v690, %v694
      %v699 = vand.u32 2147483647, %v616
      %vm700 = vcmp.eq.f32.partialorder %v699, 8.507059e+37
      %v701 = vand.u32 %v616, 2147483648
      %v702 = vor.u32 1.1754944e-38, %v701
      %v703 = vsel %vm700, %v702, %v698
      %v704 = vmul.f32 1.0, %v703
      %v705 = vrcp.pop %v617
      %v706 = vmul.f32 %v617, %v705
      %v707 = vsub.f32 1.0, %v706
      %v708 = vmul.f32 %v705, %v707
      %v709 = vadd.f32 %v705, %v708
      %vm710 = vweird.f32 %v617
      %vm711 = vweird.f32 %v705
      %vm712 = vmor %vm710, %vm711
      %v713 = vsel %vm712, %v705, %v709
      %v714 = vand.u32 2147483647, %v617
      %vm715 = vcmp.eq.f32.partialorder %v714, 8.507059e+37
      %v716 = vand.u32 %v617, 2147483648
      %v717 = vor.u32 1.1754944e-38, %v716
      %v718 = vsel %vm715, %v717, %v713
      %v719 = vmul.f32 1.0, %v718
      %v720 = vrcp.pop %v618
      %v721 = vmul.f32 %v618, %v720
      %v722 = vsub.f32 1.0, %v721
      %v723 = vmul.f32 %v720, %v722
      %v724 = vadd.f32 %v720, %v723
      %vm725 = vweird.f32 %v618
      %vm726 = vweird.f32 %v720
      %vm727 = vmor %vm725, %vm726
      %v728 = vsel %vm727, %v720, %v724
      %v729 = vand.u32 2147483647, %v618
      %vm730 = vcmp.eq.f32.partialorder %v729, 8.507059e+37
      %v731 = vand.u32 %v618, 2147483648
      %v732 = vor.u32 1.1754944e-38, %v731
      %v733 = vsel %vm730, %v732, %v728
      %v734 = vmul.f32 1.0, %v733
      %v735 = vrcp.pop %v619
      %v736 = vmul.f32 %v619, %v735
      %v737 = vsub.f32 1.0, %v736
      %v738 = vmul.f32 %v735, %v737
      %v739 = vadd.f32 %v735, %v738
      %vm740 = vweird.f32 %v619
      %vm741 = vweird.f32 %v735
      %vm742 = vmor %vm740, %vm741
      %v743 = vsel %vm742, %v735, %v739
      %v744 = vand.u32 2147483647, %v619
      %vm745 = vcmp.eq.f32.partialorder %v744, 8.507059e+37
      %v746 = vand.u32 %v619, 2147483648
      %v747 = vor.u32 1.1754944e-38, %v746
      %v748 = vsel %vm745, %v747, %v743
      %v749 = vmul.f32 1.0, %v748
      %v750 = vrcp.pop %v620
      %v751 = vmul.f32 %v620, %v750
      %v752 = vsub.f32 1.0, %v751
      %v753 = vmul.f32 %v750, %v752
      %v754 = vadd.f32 %v750, %v753
      %vm755 = vweird.f32 %v620
      %vm756 = vweird.f32 %v750
      %vm757 = vmor %vm755, %vm756
      %v758 = vsel %vm757, %v750, %v754
      %v759 = vand.u32 2147483647, %v620
      %vm760 = vcmp.eq.f32.partialorder %v759, 8.507059e+37
      %v761 = vand.u32 %v620, 2147483648
      %v762 = vor.u32 1.1754944e-38, %v761
      %v763 = vsel %vm760, %v762, %v758
      %v764 = vmul.f32 1.0, %v763
      %v765 = vrcp.pop %v621
      %v766 = vmul.f32 %v621, %v765
      %v767 = vsub.f32 1.0, %v766
      %v768 = vmul.f32 %v765, %v767
      %v769 = vadd.f32 %v765, %v768
      %vm770 = vweird.f32 %v621
      %vm771 = vweird.f32 %v765
      %vm772 = vmor %vm770, %vm771
      %v773 = vsel %vm772, %v765, %v769
      %v774 = vand.u32 2147483647, %v621
      %vm775 = vcmp.eq.f32.partialorder %v774, 8.507059e+37
      %v776 = vand.u32 %v621, 2147483648
      %v777 = vor.u32 1.1754944e-38, %v776
      %v778 = vsel %vm775, %v777, %v773
      %v779 = vmul.f32 1.0, %v778
      %v780 = vrcp.pop %v622
      %v781 = vmul.f32 %v622, %v780
      %v782 = vsub.f32 1.0, %v781
      %v783 = vmul.f32 %v780, %v782
      %v784 = vadd.f32 %v780, %v783
      %vm785 = vweird.f32 %v622
      %vm786 = vweird.f32 %v780
      %vm787 = vmor %vm785, %vm786
      %v788 = vsel %vm787, %v780, %v784
      %v789 = vand.u32 2147483647, %v622
      %vm790 = vcmp.eq.f32.partialorder %v789, 8.507059e+37
      %v791 = vand.u32 %v622, 2147483648
      %v792 = vor.u32 1.1754944e-38, %v791
      %v793 = vsel %vm790, %v792, %v788
      %v794 = vmul.f32 1.0, %v793
      %v795 = vrcp.pop %v623
      %v796 = vmul.f32 %v623, %v795
      %v797 = vsub.f32 1.0, %v796
      %v798 = vmul.f32 %v795, %v797
      %v799 = vadd.f32 %v795, %v798
      %vm800 = vweird.f32 %v623
      %vm801 = vweird.f32 %v795
      %vm802 = vmor %vm800, %vm801
      %v803 = vsel %vm802, %v795, %v799
      %v804 = vand.u32 2147483647, %v623
      %vm805 = vcmp.eq.f32.partialorder %v804, 8.507059e+37
      %v806 = vand.u32 %v623, 2147483648
      %v807 = vor.u32 1.1754944e-38, %v806
      %v808 = vsel %vm805, %v807, %v803
      %v809 = vmul.f32 1.0, %v808
      %v810 = vrcp.pop %v624
      %v811 = vmul.f32 %v624, %v810
      %v812 = vsub.f32 1.0, %v811
      %v813 = vmul.f32 %v810, %v812
      %v814 = vadd.f32 %v810, %v813
      %vm815 = vweird.f32 %v624
      %vm816 = vweird.f32 %v810
      %vm817 = vmor %vm815, %vm816
      %v818 = vsel %vm817, %v810, %v814
      %v819 = vand.u32 2147483647, %v624
      %vm820 = vcmp.eq.f32.partialorder %v819, 8.507059e+37
      %v821 = vand.u32 %v624, 2147483648
      %v822 = vor.u32 1.1754944e-38, %v821
      %v823 = vsel %vm820, %v822, %v818
      %v824 = vmul.f32 1.0, %v823
      %v825 = vrcp.pop %v625
      %v826 = vmul.f32 %v625, %v825
      %v827 = vsub.f32 1.0, %v826
      %v828 = vmul.f32 %v825, %v827
      %v829 = vadd.f32 %v825, %v828
      %vm830 = vweird.f32 %v625
      %vm831 = vweird.f32 %v825
      %vm832 = vmor %vm830, %vm831
      %v833 = vsel %vm832, %v825, %v829
      %v834 = vand.u32 2147483647, %v625
      %vm835 = vcmp.eq.f32.partialorder %v834, 8.507059e+37
      %v836 = vand.u32 %v625, 2147483648
      %v837 = vor.u32 1.1754944e-38, %v836
      %v838 = vsel %vm835, %v837, %v833
      %v839 = vmul.f32 1.0, %v838
      %v840 = vrcp.pop %v626
      %v841 = vmul.f32 %v626, %v840
      %v842 = vsub.f32 1.0, %v841
      %v843 = vmul.f32 %v840, %v842
      %v844 = vadd.f32 %v840, %v843
      %vm845 = vweird.f32 %v626
      %vm846 = vweird.f32 %v840
      %vm847 = vmor %vm845, %vm846
      %v848 = vsel %vm847, %v840, %v844
      %v849 = vand.u32 2147483647, %v626
      %vm850 = vcmp.eq.f32.partialorder %v849, 8.507059e+37
      %v851 = vand.u32 %v626, 2147483648
      %v852 = vor.u32 1.1754944e-38, %v851
      %v853 = vsel %vm850, %v852, %v848
      %v854 = vmul.f32 1.0, %v853
      %v855 = vrcp.pop %v627
      %v856 = vmul.f32 %v627, %v855
      %v857 = vsub.f32 1.0, %v856
      %v858 = vmul.f32 %v855, %v857
      %v859 = vadd.f32 %v855, %v858
      %vm860 = vweird.f32 %v627
      %vm861 = vweird.f32 %v855
      %vm862 = vmor %vm860, %vm861
      %v863 = vsel %vm862, %v855, %v859
      %v864 = vand.u32 2147483647, %v627
      %vm865 = vcmp.eq.f32.partialorder %v864, 8.507059e+37
      %v866 = vand.u32 %v627, 2147483648
      %v867 = vor.u32 1.1754944e-38, %v866
      %v868 = vsel %vm865, %v867, %v863
      %v869 = vmul.f32 1.0, %v868
      %v870 = vrcp.pop %v628
      %v871 = vmul.f32 %v628, %v870
      %v872 = vsub.f32 1.0, %v871
      %v873 = vmul.f32 %v870, %v872
      %v874 = vadd.f32 %v870, %v873
      %vm875 = vweird.f32 %v628
      %vm876 = vweird.f32 %v870
      %vm877 = vmor %vm875, %vm876
      %v878 = vsel %vm877, %v870, %v874
      %v879 = vand.u32 2147483647, %v628
      %vm880 = vcmp.eq.f32.partialorder %v879, 8.507059e+37
      %v881 = vand.u32 %v628, 2147483648
      %v882 = vor.u32 1.1754944e-38, %v881
      %v883 = vsel %vm880, %v882, %v878
      %v884 = vmul.f32 1.0, %v883
      %v885 = vrcp.pop %v629
      %v886 = vmul.f32 %v629, %v885
      %v887 = vsub.f32 1.0, %v886
      %v888 = vmul.f32 %v885, %v887
      %v889 = vadd.f32 %v885, %v888
      %vm890 = vweird.f32 %v629
      %vm891 = vweird.f32 %v885
      %vm892 = vmor %vm890, %vm891
      %v893 = vsel %vm892, %v885, %v889
      %v894 = vand.u32 2147483647, %v629
      %vm895 = vcmp.eq.f32.partialorder %v894, 8.507059e+37
      %v896 = vand.u32 %v629, 2147483648
      %v897 = vor.u32 1.1754944e-38, %v896
      %v898 = vsel %vm895, %v897, %v893
      %v899 = vmul.f32 1.0, %v898
      %v900 = vrcp.pop %v630
      %v901 = vmul.f32 %v630, %v900
      %v902 = vsub.f32 1.0, %v901
      %v903 = vmul.f32 %v900, %v902
      %v904 = vadd.f32 %v900, %v903
      %vm905 = vweird.f32 %v630
      %vm906 = vweird.f32 %v900
      %vm907 = vmor %vm905, %vm906
      %v908 = vsel %vm907, %v900, %v904
      %v909 = vand.u32 2147483647, %v630
      %vm910 = vcmp.eq.f32.partialorder %v909, 8.507059e+37
      %v911 = vand.u32 %v630, 2147483648
      %v912 = vor.u32 1.1754944e-38, %v911
      %v913 = vsel %vm910, %v912, %v908
      %v914 = vmul.f32 1.0, %v913
      %v915 = vrcp.pop %v631
      %v916 = vmul.f32 %v631, %v915
      %v917 = vsub.f32 1.0, %v916
      %v918 = vmul.f32 %v915, %v917
      %v919 = vadd.f32 %v915, %v918
      %vm920 = vweird.f32 %v631
      %vm921 = vweird.f32 %v915
      %vm922 = vmor %vm920, %vm921
      %v923 = vsel %vm922, %v915, %v919
      %v924 = vand.u32 2147483647, %v631
      %vm925 = vcmp.eq.f32.partialorder %v924, 8.507059e+37
      %v926 = vand.u32 %v631, 2147483648
      %v927 = vor.u32 1.1754944e-38, %v926
      %v928 = vsel %vm925, %v927, %v923
      %v929 = vmul.f32 1.0, %v928
      %v930 = vrcp.pop %v632
      %v931 = vmul.f32 %v632, %v930
      %v932 = vsub.f32 1.0, %v931
      %v933 = vmul.f32 %v930, %v932
      %v934 = vadd.f32 %v930, %v933
      %vm935 = vweird.f32 %v632
      %vm936 = vweird.f32 %v930
      %vm937 = vmor %vm935, %vm936
      %v938 = vsel %vm937, %v930, %v934
      %v939 = vand.u32 2147483647, %v632
      %vm940 = vcmp.eq.f32.partialorder %v939, 8.507059e+37
      %v941 = vand.u32 %v632, 2147483648
      %v942 = vor.u32 1.1754944e-38, %v941
      %v943 = vsel %vm940, %v942, %v938
      %v944 = vmul.f32 1.0, %v943
      %v945 = vrcp.pop %v633
      %v946 = vmul.f32 %v633, %v945
      %v947 = vsub.f32 1.0, %v946
      %v948 = vmul.f32 %v945, %v947
      %v949 = vadd.f32 %v945, %v948
      %vm950 = vweird.f32 %v633
      %vm951 = vweird.f32 %v945
      %vm952 = vmor %vm950, %vm951
      %v953 = vsel %vm952, %v945, %v949
      %v954 = vand.u32 2147483647, %v633
      %vm955 = vcmp.eq.f32.partialorder %v954, 8.507059e+37
      %v956 = vand.u32 %v633, 2147483648
      %v957 = vor.u32 1.1754944e-38, %v956
      %v958 = vsel %vm955, %v957, %v953
      %v959 = vmul.f32 1.0, %v958
      %v960 = vrcp.pop %v634
      %v961 = vmul.f32 %v634, %v960
      %v962 = vsub.f32 1.0, %v961
      %v963 = vmul.f32 %v960, %v962
      %v964 = vadd.f32 %v960, %v963
      %vm965 = vweird.f32 %v634
      %vm966 = vweird.f32 %v960
      %vm967 = vmor %vm965, %vm966
      %v968 = vsel %vm967, %v960, %v964
      %v969 = vand.u32 2147483647, %v634
      %vm970 = vcmp.eq.f32.partialorder %v969, 8.507059e+37
      %v971 = vand.u32 %v634, 2147483648
      %v972 = vor.u32 1.1754944e-38, %v971
      %v973 = vsel %vm970, %v972, %v968
      %v974 = vmul.f32 1.0, %v973
      %v975 = vrcp.pop %v635
      %v976 = vmul.f32 %v635, %v975
      %v977 = vsub.f32 1.0, %v976
      %v978 = vmul.f32 %v975, %v977
      %v979 = vadd.f32 %v975, %v978
      %vm980 = vweird.f32 %v635
      %vm981 = vweird.f32 %v975
      %vm982 = vmor %vm980, %vm981
      %v983 = vsel %vm982, %v975, %v979
      %v984 = vand.u32 2147483647, %v635
      %vm985 = vcmp.eq.f32.partialorder %v984, 8.507059e+37
      %v986 = vand.u32 %v635, 2147483648
      %v987 = vor.u32 1.1754944e-38, %v986
      %v988 = vsel %vm985, %v987, %v983
      %v989 = vmul.f32 1.0, %v988
      %v990 = vrcp.pop %v636
      %v991 = vmul.f32 %v636, %v990
      %v992 = vsub.f32 1.0, %v991
      %v993 = vmul.f32 %v990, %v992
      %v994 = vadd.f32 %v990, %v993
      %vm995 = vweird.f32 %v636
      %vm996 = vweird.f32 %v990
      %vm997 = vmor %vm995, %vm996
      %v998 = vsel %vm997, %v990, %v994
      %v999 = vand.u32 2147483647, %v636
      %vm1000 = vcmp.eq.f32.partialorder %v999, 8.507059e+37
      %v1001 = vand.u32 %v636, 2147483648
      %v1002 = vor.u32 1.1754944e-38, %v1001
      %v1003 = vsel %vm1000, %v1002, %v998
      %v1004 = vmul.f32 1.0, %v1003
      %v1005 = vrcp.pop %v637
      %v1006 = vmul.f32 %v637, %v1005
      %v1007 = vsub.f32 1.0, %v1006
      %v1008 = vmul.f32 %v1005, %v1007
      %v1009 = vadd.f32 %v1005, %v1008
      %vm1010 = vweird.f32 %v637
      %vm1011 = vweird.f32 %v1005
      %vm1012 = vmor %vm1010, %vm1011
      %v1013 = vsel %vm1012, %v1005, %v1009
      %v1014 = vand.u32 2147483647, %v637
      %vm1015 = vcmp.eq.f32.partialorder %v1014, 8.507059e+37
      %v1016 = vand.u32 %v637, 2147483648
      %v1017 = vor.u32 1.1754944e-38, %v1016
      %v1018 = vsel %vm1015, %v1017, %v1013
      %v1019 = vmul.f32 1.0, %v1018
      %v1020 = vrcp.pop %v638
      %v1021 = vmul.f32 %v638, %v1020
      %v1022 = vsub.f32 1.0, %v1021
      %v1023 = vmul.f32 %v1020, %v1022
      %v1024 = vadd.f32 %v1020, %v1023
      %vm1025 = vweird.f32 %v638
      %vm1026 = vweird.f32 %v1020
      %vm1027 = vmor %vm1025, %vm1026
      %v1028 = vsel %vm1027, %v1020, %v1024
      %v1029 = vand.u32 2147483647, %v638
      %vm1030 = vcmp.eq.f32.partialorder %v1029, 8.507059e+37
      %v1031 = vand.u32 %v638, 2147483648
      %v1032 = vor.u32 1.1754944e-38, %v1031
      %v1033 = vsel %vm1030, %v1032, %v1028
      %v1034 = vmul.f32 1.0, %v1033
      %v1035 = vrcp.pop %v639
      %v1036 = vmul.f32 %v639, %v1035
      %v1037 = vsub.f32 1.0, %v1036
      %v1038 = vmul.f32 %v1035, %v1037
      %v1039 = vadd.f32 %v1035, %v1038
      %vm1040 = vweird.f32 %v639
      %vm1041 = vweird.f32 %v1035
      %vm1042 = vmor %vm1040, %vm1041
      %v1043 = vsel %vm1042, %v1035, %v1039
      %v1044 = vand.u32 2147483647, %v639
      %vm1045 = vcmp.eq.f32.partialorder %v1044, 8.507059e+37
      %v1046 = vand.u32 %v639, 2147483648
      %v1047 = vor.u32 1.1754944e-38, %v1046
      %v1048 = vsel %vm1045, %v1047, %v1043
      %v1049 = vmul.f32 1.0, %v1048
      %v1050 = vrcp.pop %v640
      %v1051 = vmul.f32 %v640, %v1050
      %v1052 = vsub.f32 1.0, %v1051
      %v1053 = vmul.f32 %v1050, %v1052
      %v1054 = vadd.f32 %v1050, %v1053
      %vm1055 = vweird.f32 %v640
      %vm1056 = vweird.f32 %v1050
      %vm1057 = vmor %vm1055, %vm1056
      %v1058 = vsel %vm1057, %v1050, %v1054
      %v1059 = vand.u32 2147483647, %v640
      %vm1060 = vcmp.eq.f32.partialorder %v1059, 8.507059e+37
      %v1061 = vand.u32 %v640, 2147483648
      %v1062 = vor.u32 1.1754944e-38, %v1061
      %v1063 = vsel %vm1060, %v1062, %v1058
      %v1064 = vmul.f32 1.0, %v1063
      %v1065 = vrcp.pop %v641
      %v1066 = vmul.f32 %v641, %v1065
      %v1067 = vsub.f32 1.0, %v1066
      %v1068 = vmul.f32 %v1065, %v1067
      %v1069 = vadd.f32 %v1065, %v1068
      %vm1070 = vweird.f32 %v641
      %vm1071 = vweird.f32 %v1065
      %vm1072 = vmor %vm1070, %vm1071
      %v1073 = vsel %vm1072, %v1065, %v1069
      %v1074 = vand.u32 2147483647, %v641
      %vm1075 = vcmp.eq.f32.partialorder %v1074, 8.507059e+37
      %v1076 = vand.u32 %v641, 2147483648
      %v1077 = vor.u32 1.1754944e-38, %v1076
      %v1078 = vsel %vm1075, %v1077, %v1073
      %v1079 = vmul.f32 1.0, %v1078
      %v1080 = vrcp.pop %v642
      %v1081 = vmul.f32 %v642, %v1080
      %v1082 = vsub.f32 1.0, %v1081
      %v1083 = vmul.f32 %v1080, %v1082
      %v1084 = vadd.f32 %v1080, %v1083
      %vm1085 = vweird.f32 %v642
      %vm1086 = vweird.f32 %v1080
      %vm1087 = vmor %vm1085, %vm1086
      %v1088 = vsel %vm1087, %v1080, %v1084
      %v1089 = vand.u32 2147483647, %v642
      %vm1090 = vcmp.eq.f32.partialorder %v1089, 8.507059e+37
      %v1091 = vand.u32 %v642, 2147483648
      %v1092 = vor.u32 1.1754944e-38, %v1091
      %v1093 = vsel %vm1090, %v1092, %v1088
      %v1094 = vmul.f32 1.0, %v1093
      %v1095 = vrcp.pop %v643
      %v1096 = vmul.f32 %v643, %v1095
      %v1097 = vsub.f32 1.0, %v1096
      %v1098 = vmul.f32 %v1095, %v1097
      %v1099 = vadd.f32 %v1095, %v1098
      %vm1100 = vweird.f32 %v643
      %vm1101 = vweird.f32 %v1095
      %vm1102 = vmor %vm1100, %vm1101
      %v1103 = vsel %vm1102, %v1095, %v1099
      %v1104 = vand.u32 2147483647, %v643
      %vm1105 = vcmp.eq.f32.partialorder %v1104, 8.507059e+37
      %v1106 = vand.u32 %v643, 2147483648
      %v1107 = vor.u32 1.1754944e-38, %v1106
      %v1108 = vsel %vm1105, %v1107, %v1103
      %v1109 = vmul.f32 1.0, %v1108
      %v1110 = vrcp.pop %v644
      %v1111 = vmul.f32 %v644, %v1110
      %v1112 = vsub.f32 1.0, %v1111
      %v1113 = vmul.f32 %v1110, %v1112
      %v1114 = vadd.f32 %v1110, %v1113
      %vm1115 = vweird.f32 %v644
      %vm1116 = vweird.f32 %v1110
      %vm1117 = vmor %vm1115, %vm1116
      %v1118 = vsel %vm1117, %v1110, %v1114
      %v1119 = vand.u32 2147483647, %v644
      %vm1120 = vcmp.eq.f32.partialorder %v1119, 8.507059e+37
      %v1121 = vand.u32 %v644, 2147483648
      %v1122 = vor.u32 1.1754944e-38, %v1121
      %v1123 = vsel %vm1120, %v1122, %v1118
      %v1124 = vmul.f32 1.0, %v1123
      %v1125 = vmul.f32 %v485, %v659
      %v1126 = vmul.f32 %v486, %v674
      %v1127 = vmul.f32 %v487, %v689
      %v1128 = vmul.f32 %v488, %v704
      %v1129 = vmul.f32 %v489, %v719
      %v1130 = vmul.f32 %v490, %v734
      %v1131 = vmul.f32 %v491, %v749
      %v1132 = vmul.f32 %v492, %v764
      %v1133 = vmul.f32 %v493, %v779
      %v1134 = vmul.f32 %v494, %v794
      %v1135 = vmul.f32 %v495, %v809
      %v1136 = vmul.f32 %v496, %v824
      %v1137 = vmul.f32 %v497, %v839
      %v1138 = vmul.f32 %v498, %v854
      %v1139 = vmul.f32 %v499, %v869
      %v1140 = vmul.f32 %v500, %v884
      %v1141 = vmul.f32 %v501, %v899
      %v1142 = vmul.f32 %v502, %v914
      %v1143 = vmul.f32 %v503, %v929
      %v1144 = vmul.f32 %v504, %v944
      %v1145 = vmul.f32 %v505, %v959
      %v1146 = vmul.f32 %v506, %v974
      %v1147 = vmul.f32 %v507, %v989
      %v1148 = vmul.f32 %v508, %v1004
      %v1149 = vmul.f32 %v509, %v1019
      %v1150 = vmul.f32 %v510, %v1034
      %v1151 = vmul.f32 %v511, %v1049
      %v1152 = vmul.f32 %v512, %v1064
      %v1153 = vmul.f32 %v513, %v1079
      %v1154 = vmul.f32 %v514, %v1094
      %v1155 = vmul.f32 %v515, %v1109
      %v1156 = vmul.f32 %v516, %v1124
      %1157 = vst.msk [vmem:[%s199] sm:$0xff] %vm235, %v1125
      %1158 = vst.msk [vmem:[%s199 + $0x8] sm:$0xff] %vm235, %v1126
      %1159 = vst.msk [vmem:[%s199 + $0x10] sm:$0xff] %vm235, %v1127
      %1160 = vst.msk [vmem:[%s199 + $0x18] sm:$0xff] %vm235, %v1128
      %1161 = vst.msk [vmem:[%s199 + $0x20] sm:$0xff] %vm235, %v1129
      %1162 = vst.msk [vmem:[%s199 + $0x28] sm:$0xff] %vm235, %v1130
      %1163 = vst.msk [vmem:[%s199 + $0x30] sm:$0xff] %vm235, %v1131
      %1164 = vst.msk [vmem:[%s199 + $0x38] sm:$0xff] %vm235, %v1132
      %1165 = vst.msk [vmem:[%s199 + $0x40] sm:$0xff] %vm235, %v1133
      %1166 = vst.msk [vmem:[%s199 + $0x48] sm:$0xff] %vm235, %v1134
      %1167 = vst.msk [vmem:[%s199 + $0x50] sm:$0xff] %vm235, %v1135
      %1168 = vst.msk [vmem:[%s199 + $0x58] sm:$0xff] %vm235, %v1136
      %1169 = vst.msk [vmem:[%s199 + $0x60] sm:$0xff] %vm235, %v1137
      %1170 = vst.msk [vmem:[%s199 + $0x68] sm:$0xff] %vm235, %v1138
      %1171 = vst.msk [vmem:[%s199 + $0x70] sm:$0xff] %vm235, %v1139
      %1172 = vst.msk [vmem:[%s199 + $0x78] sm:$0xff] %vm235, %v1140
      %1173 = vst.msk [vmem:[%s199 + $0x80] sm:$0xff] %vm235, %v1141
      %1174 = vst.msk [vmem:[%s199 + $0x88] sm:$0xff] %vm235, %v1142
      %1175 = vst.msk [vmem:[%s199 + $0x90] sm:$0xff] %vm235, %v1143
      %1176 = vst.msk [vmem:[%s199 + $0x98] sm:$0xff] %vm235, %v1144
      %1177 = vst.msk [vmem:[%s199 + $0xa0] sm:$0xff] %vm235, %v1145
      %1178 = vst.msk [vmem:[%s199 + $0xa8] sm:$0xff] %vm235, %v1146
      %1179 = vst.msk [vmem:[%s199 + $0xb0] sm:$0xff] %vm235, %v1147
      %1180 = vst.msk [vmem:[%s199 + $0xb8] sm:$0xff] %vm235, %v1148
      %1181 = vst.msk [vmem:[%s199 + $0xc0] sm:$0xff] %vm235, %v1149
      %1182 = vst.msk [vmem:[%s199 + $0xc8] sm:$0xff] %vm235, %v1150
      %1183 = vst.msk [vmem:[%s199 + $0xd0] sm:$0xff] %vm235, %v1151
      %1184 = vst.msk [vmem:[%s199 + $0xd8] sm:$0xff] %vm235, %v1152
      %1185 = vst.msk [vmem:[%s199 + $0xe0] sm:$0xff] %vm235, %v1153
      %1186 = vst.msk [vmem:[%s199 + $0xe8] sm:$0xff] %vm235, %v1154
      %1187 = vst.msk [vmem:[%s199 + $0xf0] sm:$0xff] %vm235, %v1155
      %1188 = vst.msk [vmem:[%s199 + $0xf8] sm:$0xff] %vm235, %v1156
      %s1189 = smul.u32 32, %s15
      %p1190 = scmp.lt.s32.totalorder %s1189, 63
      %s1191 = scalar_select %p1190, %s1189, 63
      %s1192 = smul.addr %s1191, 8
      %s1193 = scalar_lea.vmem %s4, %s1192
      // Predicated region
      $region37: #{c3_forward_pallas.7} parent=35 // pred_check
        %p1194 = pneg %p122
      $region38: #{c3_forward_pallas.7} parent=35 // pred_check_branch
        %1196 = sbr.rel (%p1194) target = $region40
      $region39: #{c3_forward_pallas.7} parent=35 // pred_region
        %s1197 = smul.u32 32, %s15
      $region40: #{c3_forward_pallas.7} parent=35 // pred_fallthru
        _
    $region36: #{c3_forward_pallas.7} parent=5 // pred_fallthru
      _
    %p1198 = scmp.le.s32.totalorder 2, %s10
    // Predicated region
    $region41: #{c3_forward_pallas.7} parent=5 // pred_check
      %p1199 = pneg %p1198
    $region42: #{c3_forward_pallas.7} parent=5 // pred_check_branch
      %1201 = sbr.rel (%p1199) target = $region44
    $region43: #{c3_forward_pallas.7} parent=5 // pred_region
      %s1202 = ssub.s32 %s10, 2
      // Predicated region
      $region45: #{c3_forward_pallas.7} parent=43 // pred_check
        %p1203 = pneg %p128
      $region46: #{c3_forward_pallas.7} parent=43 // pred_check_branch
        %1205 = sbr.rel (%p1203) target = $region48
      $region47: #{c3_forward_pallas.7} parent=43 // pred_region
        %s1206 = smul.u32 32, %s16
        %p1207 = scmp.lt.s32.totalorder %s1206, 63
        %s1208 = scalar_select %p1207, %s1206, 63
        %s1209 = smul.addr %s1208, 8
        %s1210 = scalar_lea.vmem %s4, %s1209
      $region48: #{c3_forward_pallas.7} parent=43 // pred_fallthru
        _
    $region44: #{c3_forward_pallas.7} parent=5 // pred_fallthru
      _
  $region6: #{c3_forward_pallas.7} parent=0 // loop_footer
    %s14 = sadd.s32 1, %s10
  $region7: #{c3_forward_pallas.7} parent=0 // loop_footer_branch
    %9 = sbr.rel target = $region3
  $region8: #{c3_forward_pallas.7} parent=0 // loop_exit
    _

// kernel: c3_forward_pallas.13
$region0: #{c3_forward_pallas.13}
  #allocation0 [shape = 'u32[]', space=smem, size = 0x4, offset = 0x4, fixed_abs, tag = 'smem constant byte address 0x4 - core index']
  #allocation1 [shape = 'u32[72,128]{1,0:T(1,128)}', space=vmem, size = 0x9000, scoped, tag = 'internal scratch']
  %s0 = inlined_call_operand.vmem [shape: f32[512,16], index: 0, kind: input, shape index: {}]
  %s1 = inlined_call_operand.vmem [shape: f32[512,16], index: 1, kind: input, shape index: {}]
  %s2 = inlined_call_operand.vmem [shape: f32[16,32], index: 2, kind: input, shape index: {}]
  %s3 = inlined_call_operand.vmem [shape: f32[16,32], index: 3, kind: input, shape index: {}]
  %s4 = inlined_call_operand.vmem [shape: f32[1,32], index: 4, kind: input, shape index: {}]
  %s5 = inlined_call_operand.vmem [shape: f32[1,32], index: 5, kind: input, shape index: {}]
  %s6 = inlined_call_operand.hbm [shape: f32[512,32], index: 6, kind: output, shape index: {}]
  %s7 = sld [smem:[#allocation0]]
  $region57: #{c3_forward_pallas.13} parent=0
    _
  %s9 = ssub.s32 1, %s7
  %s10 = scalar_select 0, %s9, %s7
  $region1: #{c3_forward_pallas.13} parent=0
    #allocation2 [shape = 'u8[262144]{0}', space=vmem, size = 0x40000, scoped, tag = 'output window, operand 0']
    #allocation3 [shape = 's32[2]{0}', space=sflag, size = 0x8, scoped, tag = 'scoped memory for c3_forward_pallas.13']
    %11 = vsyncpa [#allocation3], 0
    %s12 = scalar_lea.sflag [#allocation3], 1
    %13 = vsyncpa %s12, 0
    loop: start=0, step=1, limit=4
    $region2: #{c3_forward_pallas.13} parent=1 // loop_pre_header
      _
    $region3: #{c3_forward_pallas.13} parent=1 // loop_header
      %s15 = sphi 0, %s19
      %p16 = scmp.ge.s32.totalorder %s15, 4
      %s25 = sphi 0, %s27
      %s28 = sphi 0, %s25
      %s29 = sphi 0, %s28
      %s45 = sphi 0, %s29
      %s51 = sphi 0, %s53
      %s54 = sphi 0, %s51
      %s55 = sphi 0, %s54
      %s71 = sphi 0, %s55
      %s75 = sphi 0, %s75
      %s77 = sphi 0, %s75
      %s78 = sphi 0, %s77
      %s92 = sphi 0, %s78
      %s96 = sphi 0, %s96
      %s98 = sphi 0, %s96
      %s99 = sphi 0, %s98
      %s113 = sphi 0, %s99
      %s117 = sphi 0, %s117
      %s119 = sphi 0, %s117
      %s120 = sphi 0, %s119
      %s134 = sphi 0, %s120
      %s138 = sphi 0, %s138
      %s140 = sphi 0, %s138
      %s141 = sphi 0, %s140
      %s155 = sphi 0, %s141
      %s161 = sphi 0, %s163
      %s164 = sphi 0, %s161
      %s165 = sphi 0, %s164
      %s181 = sphi 0, %s165
    $region4: #{c3_forward_pallas.13} parent=1 // loop_header_branch
      %18 = sbr.rel (%p16) target = $region8
    $region5: #{c3_forward_pallas.13} parent=1 // loop_body
      %s20 = ssub.s32 %s15, 1
      %s21 = ssub.s32 %s15, 2
      %s22 = sadd.s32 %s15, 1
      %s23 = ssub.s32 %s15, %s22
      %p24 = scmp.eq.s32.totalorder %s23, 0
      %s26 = sadd.s32 %s25, 1
      %s27 = scalar_select %p24, %s25, %s26
      %p30 = pneg %p24
      %p31 = scmp.eq.s32.totalorder %s15, 1
      %p32 = por %p30, %p31
      %p33 = scmp.ne.s32.totalorder %s25, %s28
      %p34 = scmp.eq.s32.totalorder %s15, 0
      %p35 = por %p33, %p34
      %p36 = scmp.ne.s32.totalorder %s25, %s28
      %p37 = scmp.eq.s32.totalorder %s20, 1
      %p38 = por %p36, %p37
      %p39 = scmp.ne.s32.totalorder %s28, %s29
      %p40 = scmp.eq.s32.totalorder %s20, 0
      %p41 = por %p39, %p40
      %p42 = scmp.ne.s32.totalorder %s28, %s29
      %p43 = scmp.eq.s32.totalorder %s21, 1
      %p44 = por %p42, %p43
      %p46 = scmp.ne.s32.totalorder %s29, %s45
      %p47 = scmp.eq.s32.totalorder %s21, 0
      %p48 = por %p46, %p47
      %s49 = ssub.s32 %s15, %s22
      %p50 = scmp.eq.s32.totalorder %s49, 0
      %s52 = sadd.s32 %s51, 1
      %s53 = scalar_select %p50, %s51, %s52
      %p56 = pneg %p50
      %p57 = scmp.eq.s32.totalorder %s15, 1
      %p58 = por %p56, %p57
      %p59 = scmp.ne.s32.totalorder %s51, %s54
      %p60 = scmp.eq.s32.totalorder %s15, 0
      %p61 = por %p59, %p60
      %p62 = scmp.ne.s32.totalorder %s51, %s54
      %p63 = scmp.eq.s32.totalorder %s20, 1
      %p64 = por %p62, %p63
      %p65 = scmp.ne.s32.totalorder %s54, %s55
      %p66 = scmp.eq.s32.totalorder %s20, 0
      %p67 = por %p65, %p66
      %p68 = scmp.ne.s32.totalorder %s54, %s55
      %p69 = scmp.eq.s32.totalorder %s21, 1
      %p70 = por %p68, %p69
      %p72 = scmp.ne.s32.totalorder %s55, %s71
      %p73 = scmp.eq.s32.totalorder %s21, 0
      %p74 = por %p72, %p73
      %s76 = sadd.s32 %s75, 1
      %p79 = scmp.eq.s32.totalorder %s15, 1
      %p80 = scmp.ne.s32.totalorder %s75, %s77
      %p81 = scmp.eq.s32.totalorder %s15, 0
      %p82 = por %p80, %p81
      %p83 = scmp.ne.s32.totalorder %s75, %s77
      %p84 = scmp.eq.s32.totalorder %s20, 1
      %p85 = por %p83, %p84
      %p86 = scmp.ne.s32.totalorder %s77, %s78
      %p87 = scmp.eq.s32.totalorder %s20, 0
      %p88 = por %p86, %p87
      %p89 = scmp.ne.s32.totalorder %s77, %s78
      %p90 = scmp.eq.s32.totalorder %s21, 1
      %p91 = por %p89, %p90
      %p93 = scmp.ne.s32.totalorder %s78, %s92
      %p94 = scmp.eq.s32.totalorder %s21, 0
      %p95 = por %p93, %p94
      %s97 = sadd.s32 %s96, 1
      %p100 = scmp.eq.s32.totalorder %s15, 1
      %p101 = scmp.ne.s32.totalorder %s96, %s98
      %p102 = scmp.eq.s32.totalorder %s15, 0
      %p103 = por %p101, %p102
      %p104 = scmp.ne.s32.totalorder %s96, %s98
      %p105 = scmp.eq.s32.totalorder %s20, 1
      %p106 = por %p104, %p105
      %p107 = scmp.ne.s32.totalorder %s98, %s99
      %p108 = scmp.eq.s32.totalorder %s20, 0
      %p109 = por %p107, %p108
      %p110 = scmp.ne.s32.totalorder %s98, %s99
      %p111 = scmp.eq.s32.totalorder %s21, 1
      %p112 = por %p110, %p111
      %p114 = scmp.ne.s32.totalorder %s99, %s113
      %p115 = scmp.eq.s32.totalorder %s21, 0
      %p116 = por %p114, %p115
      %s118 = sadd.s32 %s117, 1
      %p121 = scmp.eq.s32.totalorder %s15, 1
      %p122 = scmp.ne.s32.totalorder %s117, %s119
      %p123 = scmp.eq.s32.totalorder %s15, 0
      %p124 = por %p122, %p123
      %p125 = scmp.ne.s32.totalorder %s117, %s119
      %p126 = scmp.eq.s32.totalorder %s20, 1
      %p127 = por %p125, %p126
      %p128 = scmp.ne.s32.totalorder %s119, %s120
      %p129 = scmp.eq.s32.totalorder %s20, 0
      %p130 = por %p128, %p129
      %p131 = scmp.ne.s32.totalorder %s119, %s120
      %p132 = scmp.eq.s32.totalorder %s21, 1
      %p133 = por %p131, %p132
      %p135 = scmp.ne.s32.totalorder %s120, %s134
      %p136 = scmp.eq.s32.totalorder %s21, 0
      %p137 = por %p135, %p136
      %s139 = sadd.s32 %s138, 1
      %p142 = scmp.eq.s32.totalorder %s15, 1
      %p143 = scmp.ne.s32.totalorder %s138, %s140
      %p144 = scmp.eq.s32.totalorder %s15, 0
      %p145 = por %p143, %p144
      %p146 = scmp.ne.s32.totalorder %s138, %s140
      %p147 = scmp.eq.s32.totalorder %s20, 1
      %p148 = por %p146, %p147
      %p149 = scmp.ne.s32.totalorder %s140, %s141
      %p150 = scmp.eq.s32.totalorder %s20, 0
      %p151 = por %p149, %p150
      %p152 = scmp.ne.s32.totalorder %s140, %s141
      %p153 = scmp.eq.s32.totalorder %s21, 1
      %p154 = por %p152, %p153
      %p156 = scmp.ne.s32.totalorder %s141, %s155
      %p157 = scmp.eq.s32.totalorder %s21, 0
      %p158 = por %p156, %p157
      %s159 = ssub.s32 %s15, %s22
      %p160 = scmp.eq.s32.totalorder %s159, 0
      %s162 = sadd.s32 %s161, 1
      %s163 = scalar_select %p160, %s161, %s162
      %p166 = pneg %p160
      %p167 = scmp.eq.s32.totalorder %s15, 1
      %p168 = por %p166, %p167
      %p169 = scmp.ne.s32.totalorder %s161, %s164
      %p170 = scmp.eq.s32.totalorder %s15, 0
      %p171 = por %p169, %p170
      %p172 = scmp.ne.s32.totalorder %s161, %s164
      %p173 = scmp.eq.s32.totalorder %s20, 1
      %p174 = por %p172, %p173
      %p175 = scmp.ne.s32.totalorder %s164, %s165
      %p176 = scmp.eq.s32.totalorder %s20, 0
      %p177 = por %p175, %p176
      %p178 = scmp.ne.s32.totalorder %s164, %s165
      %p179 = scmp.eq.s32.totalorder %s21, 1
      %p180 = por %p178, %p179
      %p182 = scmp.ne.s32.totalorder %s165, %s181
      %p183 = scmp.eq.s32.totalorder %s21, 0
      %p184 = por %p182, %p183
      %p185 = scmp.le.s32.totalorder 1, %s15
      %p186 = scmp.lt.s32.totalorder %s15, 3
      %p187 = pnand %p185, %p186
      %p188 = pneg %p187
      // Predicated region
      $region9: #{c3_forward_pallas.13} parent=5 // pred_check
        _
      $region10: #{c3_forward_pallas.13} parent=5 // pred_check_branch
        %190 = sbr.rel (%p187) target = $region12
      $region11: #{c3_forward_pallas.13} parent=5 // pred_region
        %s191 = ssub.s32 %s15, 1
        // Predicated region
        $region13: #{c3_forward_pallas.13} parent=11 // pred_check
          %p192 = pneg %p88
        $region14: #{c3_forward_pallas.13} parent=11 // pred_check_branch
          %194 = sbr.rel (%p192) target = $region16
        $region15: #{c3_forward_pallas.13} parent=11 // pred_region
          _
        $region16: #{c3_forward_pallas.13} parent=11 // pred_fallthru
          _
        // Predicated region
        $region17: #{c3_forward_pallas.13} parent=11 // pred_check
          %p195 = pneg %p109
        $region18: #{c3_forward_pallas.13} parent=11 // pred_check_branch
          %197 = sbr.rel (%p195) target = $region20
        $region19: #{c3_forward_pallas.13} parent=11 // pred_region
          _
        $region20: #{c3_forward_pallas.13} parent=11 // pred_fallthru
          _
        // Predicated region
        $region21: #{c3_forward_pallas.13} parent=11 // pred_check
          %p198 = pneg %p130
        $region22: #{c3_forward_pallas.13} parent=11 // pred_check_branch
          %200 = sbr.rel (%p198) target = $region24
        $region23: #{c3_forward_pallas.13} parent=11 // pred_region
          _
        $region24: #{c3_forward_pallas.13} parent=11 // pred_fallthru
          _
        // Predicated region
        $region25: #{c3_forward_pallas.13} parent=11 // pred_check
          %p201 = pneg %p151
        $region26: #{c3_forward_pallas.13} parent=11 // pred_check_branch
          %203 = sbr.rel (%p201) target = $region28
        $region27: #{c3_forward_pallas.13} parent=11 // pred_region
          _
        $region28: #{c3_forward_pallas.13} parent=11 // pred_fallthru
          _
      $region12: #{c3_forward_pallas.13} parent=5 // pred_fallthru
        _
      %p204 = scmp.lt.s32.totalorder %s15, 2
      // Predicated region
      $region29: #{c3_forward_pallas.13} parent=5 // pred_check
        %p205 = pneg %p204
      $region30: #{c3_forward_pallas.13} parent=5 // pred_check_branch
        %207 = sbr.rel (%p205) target = $region32
      $region31: #{c3_forward_pallas.13} parent=5 // pred_region
        // Predicated region
        $region33: #{c3_forward_pallas.13} parent=31 // pred_check
          %p208 = pneg %p35
        $region34: #{c3_forward_pallas.13} parent=31 // pred_check_branch
          %210 = sbr.rel (%p208) target = $region36
        $region35: #{c3_forward_pallas.13} parent=31 // pred_region
          %s211 = smul.u32 32, %s15
          %p212 = scmp.lt.s32.totalorder %s211, 63
          %s213 = scalar_select %p212, %s211, 63
          %s214 = smul.addr %s213, 8
          %s215 = scalar_lea.vmem %s0, %s214
          %s216 = smul.u32 32, %s15
        $region36: #{c3_forward_pallas.13} parent=31 // pred_fallthru
          _
        // Predicated region
        $region37: #{c3_forward_pallas.13} parent=31 // pred_check
          %p217 = pneg %p61
        $region38: #{c3_forward_pallas.13} parent=31 // pred_check_branch
          %219 = sbr.rel (%p217) target = $region40
        $region39: #{c3_forward_pallas.13} parent=31 // pred_region
          %s220 = smul.u32 32, %s15
          %p221 = scmp.lt.s32.totalorder %s220, 63
          %s222 = scalar_select %p221, %s220, 63
          %s223 = smul.addr %s222, 8
          %s224 = scalar_lea.vmem %s1, %s223
          %s225 = smul.u32 32, %s15
        $region40: #{c3_forward_pallas.13} parent=31 // pred_fallthru
          _
      $region32: #{c3_forward_pallas.13} parent=5 // pred_fallthru
        _
      %p226 = scmp.le.s32.totalorder 1, %s15
      %p227 = scmp.lt.s32.totalorder %s15, 3
      %p228 = pnand %p226, %p227
      %p229 = pneg %p228
      // Predicated region
      $region41: #{c3_forward_pallas.13} parent=5 // pred_check
        _
      $region42: #{c3_forward_pallas.13} parent=5 // pred_check_branch
        %231 = sbr.rel (%p228) target = $region44
      $region43: #{c3_forward_pallas.13} parent=5 // pred_region
        %s232 = ssub.s32 %s15, 1
        %s233 = smul.u32 32, %s20
        %p234 = scmp.lt.s32.totalorder %s233, 63
        %s235 = scalar_select %p234, %s233, 63
        %s236 = smul.addr %s235, 8
        %s237 = scalar_lea.vmem %s0, %s236
        %p238 = pneg %p41
        %p239 = pneg %p38
        %s240 = smul.u32 32, %s20
        %p241 = scmp.lt.s32.totalorder %s240, 63
        %s242 = scalar_select %p241, %s240, 63
        %s243 = smul.addr %s242, 8
        %s244 = scalar_lea.vmem %s1, %s243
        %p245 = pneg %p67
        %p246 = pneg %p64
        %p247 = pneg %p88
        %p248 = pneg %p85
        %p249 = pneg %p109
        %p250 = pneg %p106
        %p251 = pneg %p130
        %p252 = pneg %p127
        %p253 = pneg %p151
        %p254 = pneg %p148
        %p255 = pneg %p177
        %p256 = pneg %p174
        %s257 = sand.u32 %s164, 1
        %s258 = scalar_lea.sflag [#allocation3], %s257
        %s259 = sand.u32 %s164, 1
        %s260 = smul.addr %s259, 256
        %s261 = scalar_lea.vmem [#allocation2], %s260
        %s262 = smul.u32 32, %s20
        %p263 = scmp.lt.s32.totalorder %s262, 63
        %s264 = scalar_select %p263, %s262, 63
        %s265 = smul.addr %s264, 8
        %s266 = scalar_lea.vmem %s0, %s265
        %s267 = smul.u32 32, %s20
        %s268 = smul.u32 32, %s20
        %p269 = scmp.lt.s32.totalorder %s268, 63
        %s270 = scalar_select %p269, %s268, 63
        %s271 = smul.addr %s270, 8
        %s272 = scalar_lea.vmem %s1, %s271
        %s273 = smul.u32 32, %s20
        %s274 = smul.u32 32, %s20
        %v275 = vld [vmem:[%s266] sm:$0xff]
        %v276 = vld [vmem:[%s266 + $0x8] sm:$0xff]
        %v277 = vld [vmem:[%s266 + $0x10] sm:$0xff]
        %v278 = vld [vmem:[%s266 + $0x18] sm:$0xff]
        %v279 = vld [vmem:[%s266 + $0x20] sm:$0xff]
        %v280 = vld [vmem:[%s266 + $0x28] sm:$0xff]
        %v281 = vld [vmem:[%s266 + $0x30] sm:$0xff]
        %v282 = vld [vmem:[%s266 + $0x38] sm:$0xff]
        %v283 = vld [vmem:[%s266 + $0x40] sm:$0xff]
        %v284 = vld [vmem:[%s266 + $0x48] sm:$0xff]
        %v285 = vld [vmem:[%s266 + $0x50] sm:$0xff]
        %v286 = vld [vmem:[%s266 + $0x58] sm:$0xff]
        %v287 = vld [vmem:[%s266 + $0x60] sm:$0xff]
        %v288 = vld [vmem:[%s266 + $0x68] sm:$0xff]
        %v289 = vld [vmem:[%s266 + $0x70] sm:$0xff]
        %v290 = vld [vmem:[%s266 + $0x78] sm:$0xff]
        %v291 = vld [vmem:[%s266 + $0x80] sm:$0xff]
        %v292 = vld [vmem:[%s266 + $0x88] sm:$0xff]
        %v293 = vld [vmem:[%s266 + $0x90] sm:$0xff]
        %v294 = vld [vmem:[%s266 + $0x98] sm:$0xff]
        %v295 = vld [vmem:[%s266 + $0xa0] sm:$0xff]
        %v296 = vld [vmem:[%s266 + $0xa8] sm:$0xff]
        %v297 = vld [vmem:[%s266 + $0xb0] sm:$0xff]
        %v298 = vld [vmem:[%s266 + $0xb8] sm:$0xff]
        %v299 = vld [vmem:[%s266 + $0xc0] sm:$0xff]
        %v300 = vld [vmem:[%s266 + $0xc8] sm:$0xff]
        %v301 = vld [vmem:[%s266 + $0xd0] sm:$0xff]
        %v302 = vld [vmem:[%s266 + $0xd8] sm:$0xff]
        %v303 = vld [vmem:[%s266 + $0xe0] sm:$0xff]
        %v304 = vld [vmem:[%s266 + $0xe8] sm:$0xff]
        %v305 = vld [vmem:[%s266 + $0xf0] sm:$0xff]
        %v306 = vld [vmem:[%s266 + $0xf8] sm:$0xff]
        %v307 = vld [vmem:[%s2] sm:$0xff]
        %v308 = vld [vmem:[%s2 + $0x8] sm:$0xff]
        %v309 = vld [vmem:[%s272] sm:$0xff]
        %v310 = vld [vmem:[%s272 + $0x8] sm:$0xff]
        %v311 = vld [vmem:[%s272 + $0x10] sm:$0xff]
        %v312 = vld [vmem:[%s272 + $0x18] sm:$0xff]
        %v313 = vld [vmem:[%s272 + $0x20] sm:$0xff]
        %v314 = vld [vmem:[%s272 + $0x28] sm:$0xff]
        %v315 = vld [vmem:[%s272 + $0x30] sm:$0xff]
        %v316 = vld [vmem:[%s272 + $0x38] sm:$0xff]
        %v317 = vld [vmem:[%s272 + $0x40] sm:$0xff]
        %v318 = vld [vmem:[%s272 + $0x48] sm:$0xff]
        %v319 = vld [vmem:[%s272 + $0x50] sm:$0xff]
        %v320 = vld [vmem:[%s272 + $0x58] sm:$0xff]
        %v321 = vld [vmem:[%s272 + $0x60] sm:$0xff]
        %v322 = vld [vmem:[%s272 + $0x68] sm:$0xff]
        %v323 = vld [vmem:[%s272 + $0x70] sm:$0xff]
        %v324 = vld [vmem:[%s272 + $0x78] sm:$0xff]
        %v325 = vld [vmem:[%s272 + $0x80] sm:$0xff]
        %v326 = vld [vmem:[%s272 + $0x88] sm:$0xff]
        %v327 = vld [vmem:[%s272 + $0x90] sm:$0xff]
        %v328 = vld [vmem:[%s272 + $0x98] sm:$0xff]
        %v329 = vld [vmem:[%s272 + $0xa0] sm:$0xff]
        %v330 = vld [vmem:[%s272 + $0xa8] sm:$0xff]
        %v331 = vld [vmem:[%s272 + $0xb0] sm:$0xff]
        %v332 = vld [vmem:[%s272 + $0xb8] sm:$0xff]
        %v333 = vld [vmem:[%s272 + $0xc0] sm:$0xff]
        %v334 = vld [vmem:[%s272 + $0xc8] sm:$0xff]
        %v335 = vld [vmem:[%s272 + $0xd0] sm:$0xff]
        %v336 = vld [vmem:[%s272 + $0xd8] sm:$0xff]
        %v337 = vld [vmem:[%s272 + $0xe0] sm:$0xff]
        %v338 = vld [vmem:[%s272 + $0xe8] sm:$0xff]
        %v339 = vld [vmem:[%s272 + $0xf0] sm:$0xff]
        %v340 = vld [vmem:[%s272 + $0xf8] sm:$0xff]
        %v341 = vld [vmem:[%s3] sm:$0xff]
        %v342 = vld [vmem:[%s3 + $0x8] sm:$0xff]
        %vm343 = vcmask 130048
        %v345 = vsel %vm343, %v309, 0
        %v348 = vsel %vm343, %v310, 0
        %v351 = vsel %vm343, %v311, 0
        %v354 = vsel %vm343, %v312, 0
        %v357 = vsel %vm343, %v313, 0
        %v360 = vsel %vm343, %v314, 0
        %v363 = vsel %vm343, %v315, 0
        %v366 = vsel %vm343, %v316, 0
        %v369 = vsel %vm343, %v317, 0
        %v372 = vsel %vm343, %v318, 0
        %v375 = vsel %vm343, %v319, 0
        %v378 = vsel %vm343, %v320, 0
        %v381 = vsel %vm343, %v321, 0
        %v384 = vsel %vm343, %v322, 0
        %v387 = vsel %vm343, %v323, 0
        %v390 = vsel %vm343, %v324, 0
        %v393 = vsel %vm343, %v325, 0
        %v396 = vsel %vm343, %v326, 0
        %v399 = vsel %vm343, %v327, 0
        %v402 = vsel %vm343, %v328, 0
        %v405 = vsel %vm343, %v329, 0
        %v408 = vsel %vm343, %v330, 0
        %v411 = vsel %vm343, %v331, 0
        %v414 = vsel %vm343, %v332, 0
        %v417 = vsel %vm343, %v333, 0
        %v420 = vsel %vm343, %v334, 0
        %v423 = vsel %vm343, %v335, 0
        %v426 = vsel %vm343, %v336, 0
        %v429 = vsel %vm343, %v337, 0
        %v432 = vsel %vm343, %v338, 0
        %v435 = vsel %vm343, %v339, 0
        %v438 = vsel %vm343, %v340, 0
        %440 = vmatpush.msra.mxu0 0.0
        %441 = vmatpush.msra.mxu0 0.0
        %442 = vmatpush.msra.mxu0 0.0
        %443 = vmatpush.msra.mxu0 0.0
        %444 = vmatpush.msra.mxu0 0.0
        %445 = vmatpush.msra.mxu0 0.0
        %446 = vmatpush.msra.mxu0 0.0
        %447 = vmatpush.msra.mxu0 0.0
        %448 = vmatpush.msra.mxu0 0.0
        %449 = vmatpush.msra.mxu0 0.0
        %450 = vmatpush.msra.mxu0 0.0
        %451 = vmatpush.msra.mxu0 0.0
        %452 = vmatpush.msra.mxu0 0.0
        %453 = vmatpush.msra.mxu0 0.0
        %454 = vmatpush.msra.mxu0 %v342
        %455 = vmatpush.msra.mxu0 %v341
        %456 = vmatmul.f32.gmra.mxu0 %v345
        %v457 = vpop.f32.mrf.mxu0
        %v458 = vadd.f32 0.0, %v457
        %459 = vmatmul.f32.gmra.mxu0 %v348
        %v460 = vpop.f32.mrf.mxu0
        %v461 = vadd.f32 0.0, %v460
        %462 = vmatmul.f32.gmra.mxu0 %v351
        %v463 = vpop.f32.mrf.mxu0
        %v464 = vadd.f32 0.0, %v463
        %465 = vmatmul.f32.gmra.mxu0 %v354
        %v466 = vpop.f32.mrf.mxu0
        %v467 = vadd.f32 0.0, %v466
        %468 = vmatmul.f32.gmra.mxu0 %v357
        %v469 = vpop.f32.mrf.mxu0
        %v470 = vadd.f32 0.0, %v469
        %471 = vmatmul.f32.gmra.mxu0 %v360
        %v472 = vpop.f32.mrf.mxu0
        %v473 = vadd.f32 0.0, %v472
        %474 = vmatmul.f32.gmra.mxu0 %v363
        %v475 = vpop.f32.mrf.mxu0
        %v476 = vadd.f32 0.0, %v475
        %477 = vmatmul.f32.gmra.mxu0 %v366
        %v478 = vpop.f32.mrf.mxu0
        %v479 = vadd.f32 0.0, %v478
        %480 = vmatmul.f32.gmra.mxu0 %v369
        %v481 = vpop.f32.mrf.mxu0
        %v482 = vadd.f32 0.0, %v481
        %483 = vmatmul.f32.gmra.mxu0 %v372
        %v484 = vpop.f32.mrf.mxu0
        %v485 = vadd.f32 0.0, %v484
        %486 = vmatmul.f32.gmra.mxu0 %v375
        %v487 = vpop.f32.mrf.mxu0
        %v488 = vadd.f32 0.0, %v487
        %489 = vmatmul.f32.gmra.mxu0 %v378
        %v490 = vpop.f32.mrf.mxu0
        %v491 = vadd.f32 0.0, %v490
        %492 = vmatmul.f32.gmra.mxu0 %v381
        %v493 = vpop.f32.mrf.mxu0
        %v494 = vadd.f32 0.0, %v493
        %495 = vmatmul.f32.gmra.mxu0 %v384
        %v496 = vpop.f32.mrf.mxu0
        %v497 = vadd.f32 0.0, %v496
        %498 = vmatmul.f32.gmra.mxu0 %v387
        %v499 = vpop.f32.mrf.mxu0
        %v500 = vadd.f32 0.0, %v499
        %501 = vmatmul.f32.gmra.mxu0 %v390
        %v502 = vpop.f32.mrf.mxu0
        %v503 = vadd.f32 0.0, %v502
        %504 = vmatmul.f32.gmra.mxu0 %v393
        %v505 = vpop.f32.mrf.mxu0
        %v506 = vadd.f32 0.0, %v505
        %507 = vmatmul.f32.gmra.mxu0 %v396
        %v508 = vpop.f32.mrf.mxu0
        %v509 = vadd.f32 0.0, %v508
        %510 = vmatmul.f32.gmra.mxu0 %v399
        %v511 = vpop.f32.mrf.mxu0
        %v512 = vadd.f32 0.0, %v511
        %513 = vmatmul.f32.gmra.mxu0 %v402
        %v514 = vpop.f32.mrf.mxu0
        %v515 = vadd.f32 0.0, %v514
        %516 = vmatmul.f32.gmra.mxu0 %v405
        %v517 = vpop.f32.mrf.mxu0
        %v518 = vadd.f32 0.0, %v517
        %519 = vmatmul.f32.gmra.mxu0 %v408
        %v520 = vpop.f32.mrf.mxu0
        %v521 = vadd.f32 0.0, %v520
        %522 = vmatmul.f32.gmra.mxu0 %v411
        %v523 = vpop.f32.mrf.mxu0
        %v524 = vadd.f32 0.0, %v523
        %525 = vmatmul.f32.gmra.mxu0 %v414
        %v526 = vpop.f32.mrf.mxu0
        %v527 = vadd.f32 0.0, %v526
        %528 = vmatmul.f32.gmra.mxu0 %v417
        %v529 = vpop.f32.mrf.mxu0
        %v530 = vadd.f32 0.0, %v529
        %531 = vmatmul.f32.gmra.mxu0 %v420
        %v532 = vpop.f32.mrf.mxu0
        %v533 = vadd.f32 0.0, %v532
        %534 = vmatmul.f32.gmra.mxu0 %v423
        %v535 = vpop.f32.mrf.mxu0
        %v536 = vadd.f32 0.0, %v535
        %537 = vmatmul.f32.gmra.mxu0 %v426
        %v538 = vpop.f32.mrf.mxu0
        %v539 = vadd.f32 0.0, %v538
        %540 = vmatmul.f32.gmra.mxu0 %v429
        %v541 = vpop.f32.mrf.mxu0
        %v542 = vadd.f32 0.0, %v541
        %543 = vmatmul.f32.gmra.mxu0 %v432
        %v544 = vpop.f32.mrf.mxu0
        %v545 = vadd.f32 0.0, %v544
        %546 = vmatmul.f32.gmra.mxu0 %v435
        %v547 = vpop.f32.mrf.mxu0
        %v548 = vadd.f32 0.0, %v547
        %549 = vmatmul.f32.gmra.mxu0 %v438
        %v550 = vpop.f32.mrf.mxu0
        %v551 = vadd.f32 0.0, %v550
        %552 = vdwg.mxu0
        %v554 = vsel %vm343, %v275, 0
        %v557 = vsel %vm343, %v276, 0
        %v560 = vsel %vm343, %v277, 0
        %v563 = vsel %vm343, %v278, 0
        %v566 = vsel %vm343, %v279, 0
        %v569 = vsel %vm343, %v280, 0
        %v572 = vsel %vm343, %v281, 0
        %v575 = vsel %vm343, %v282, 0
        %v578 = vsel %vm343, %v283, 0
        %v581 = vsel %vm343, %v284, 0
        %v584 = vsel %vm343, %v285, 0
        %v587 = vsel %vm343, %v286, 0
        %v590 = vsel %vm343, %v287, 0
        %v593 = vsel %vm343, %v288, 0
        %v596 = vsel %vm343, %v289, 0
        %v599 = vsel %vm343, %v290, 0
        %v602 = vsel %vm343, %v291, 0
        %v605 = vsel %vm343, %v292, 0
        %v608 = vsel %vm343, %v293, 0
        %v611 = vsel %vm343, %v294, 0
        %v614 = vsel %vm343, %v295, 0
        %v617 = vsel %vm343, %v296, 0
        %v620 = vsel %vm343, %v297, 0
        %v623 = vsel %vm343, %v298, 0
        %v626 = vsel %vm343, %v299, 0
        %v629 = vsel %vm343, %v300, 0
        %v632 = vsel %vm343, %v301, 0
        %v635 = vsel %vm343, %v302, 0
        %v638 = vsel %vm343, %v303, 0
        %v641 = vsel %vm343, %v304, 0
        %v644 = vsel %vm343, %v305, 0
        %v647 = vsel %vm343, %v306, 0
        %649 = vmatpush.msra.mxu0 0.0
        %650 = vmatpush.msra.mxu0 0.0
        %651 = vmatpush.msra.mxu0 0.0
        %652 = vmatpush.msra.mxu0 0.0
        %653 = vmatpush.msra.mxu0 0.0
        %654 = vmatpush.msra.mxu0 0.0
        %655 = vmatpush.msra.mxu0 0.0
        %656 = vmatpush.msra.mxu0 0.0
        %657 = vmatpush.msra.mxu0 0.0
        %658 = vmatpush.msra.mxu0 0.0
        %659 = vmatpush.msra.mxu0 0.0
        %660 = vmatpush.msra.mxu0 0.0
        %661 = vmatpush.msra.mxu0 0.0
        %662 = vmatpush.msra.mxu0 0.0
        %663 = vmatpush.msra.mxu0 %v308
        %664 = vmatpush.msra.mxu0 %v307
        %665 = vmatmul.f32.gmra.mxu0 %v554
        %v666 = vpop.f32.mrf.mxu0
        %v667 = vadd.f32 %v458, %v666
        %668 = vmatmul.f32.gmra.mxu0 %v557
        %v669 = vpop.f32.mrf.mxu0
        %v670 = vadd.f32 %v461, %v669
        %671 = vmatmul.f32.gmra.mxu0 %v560
        %v672 = vpop.f32.mrf.mxu0
        %v673 = vadd.f32 %v464, %v672
        %674 = vmatmul.f32.gmra.mxu0 %v563
        %v675 = vpop.f32.mrf.mxu0
        %v676 = vadd.f32 %v467, %v675
        %677 = vmatmul.f32.gmra.mxu0 %v566
        %v678 = vpop.f32.mrf.mxu0
        %v679 = vadd.f32 %v470, %v678
        %680 = vmatmul.f32.gmra.mxu0 %v569
        %v681 = vpop.f32.mrf.mxu0
        %v682 = vadd.f32 %v473, %v681
        %683 = vmatmul.f32.gmra.mxu0 %v572
        %v684 = vpop.f32.mrf.mxu0
        %v685 = vadd.f32 %v476, %v684
        %686 = vmatmul.f32.gmra.mxu0 %v575
        %v687 = vpop.f32.mrf.mxu0
        %v688 = vadd.f32 %v479, %v687
        %689 = vmatmul.f32.gmra.mxu0 %v578
        %v690 = vpop.f32.mrf.mxu0
        %v691 = vadd.f32 %v482, %v690
        %692 = vmatmul.f32.gmra.mxu0 %v581
        %v693 = vpop.f32.mrf.mxu0
        %v694 = vadd.f32 %v485, %v693
        %695 = vmatmul.f32.gmra.mxu0 %v584
        %v696 = vpop.f32.mrf.mxu0
        %v697 = vadd.f32 %v488, %v696
        %698 = vmatmul.f32.gmra.mxu0 %v587
        %v699 = vpop.f32.mrf.mxu0
        %v700 = vadd.f32 %v491, %v699
        %701 = vmatmul.f32.gmra.mxu0 %v590
        %v702 = vpop.f32.mrf.mxu0
        %v703 = vadd.f32 %v494, %v702
        %704 = vmatmul.f32.gmra.mxu0 %v593
        %v705 = vpop.f32.mrf.mxu0
        %v706 = vadd.f32 %v497, %v705
        %707 = vmatmul.f32.gmra.mxu0 %v596
        %v708 = vpop.f32.mrf.mxu0
        %v709 = vadd.f32 %v500, %v708
        %710 = vmatmul.f32.gmra.mxu0 %v599
        %v711 = vpop.f32.mrf.mxu0
        %v712 = vadd.f32 %v503, %v711
        %713 = vmatmul.f32.gmra.mxu0 %v602
        %v714 = vpop.f32.mrf.mxu0
        %v715 = vadd.f32 %v506, %v714
        %716 = vmatmul.f32.gmra.mxu0 %v605
        %v717 = vpop.f32.mrf.mxu0
        %v718 = vadd.f32 %v509, %v717
        %719 = vmatmul.f32.gmra.mxu0 %v608
        %v720 = vpop.f32.mrf.mxu0
        %v721 = vadd.f32 %v512, %v720
        %722 = vmatmul.f32.gmra.mxu0 %v611
        %v723 = vpop.f32.mrf.mxu0
        %v724 = vadd.f32 %v515, %v723
        %725 = vmatmul.f32.gmra.mxu0 %v614
        %v726 = vpop.f32.mrf.mxu0
        %v727 = vadd.f32 %v518, %v726
        %728 = vmatmul.f32.gmra.mxu0 %v617
        %v729 = vpop.f32.mrf.mxu0
        %v730 = vadd.f32 %v521, %v729
        %731 = vmatmul.f32.gmra.mxu0 %v620
        %v732 = vpop.f32.mrf.mxu0
        %v733 = vadd.f32 %v524, %v732
        %734 = vmatmul.f32.gmra.mxu0 %v623
        %v735 = vpop.f32.mrf.mxu0
        %v736 = vadd.f32 %v527, %v735
        %737 = vmatmul.f32.gmra.mxu0 %v626
        %v738 = vpop.f32.mrf.mxu0
        %v739 = vadd.f32 %v530, %v738
        %740 = vmatmul.f32.gmra.mxu0 %v629
        %v741 = vpop.f32.mrf.mxu0
        %v742 = vadd.f32 %v533, %v741
        %743 = vmatmul.f32.gmra.mxu0 %v632
        %v744 = vpop.f32.mrf.mxu0
        %v745 = vadd.f32 %v536, %v744
        %746 = vmatmul.f32.gmra.mxu0 %v635
        %v747 = vpop.f32.mrf.mxu0
        %v748 = vadd.f32 %v539, %v747
        %749 = vmatmul.f32.gmra.mxu0 %v638
        %v750 = vpop.f32.mrf.mxu0
        %v751 = vadd.f32 %v542, %v750
        %752 = vmatmul.f32.gmra.mxu0 %v641
        %v753 = vpop.f32.mrf.mxu0
        %v754 = vadd.f32 %v545, %v753
        %755 = vmatmul.f32.gmra.mxu0 %v644
        %v756 = vpop.f32.mrf.mxu0
        %v757 = vadd.f32 %v548, %v756
        %758 = vmatmul.f32.gmra.mxu0 %v647
        %v759 = vpop.f32.mrf.mxu0
        %v760 = vadd.f32 %v551, %v759
        %761 = vdwg.mxu0
        %v762 = vld [vmem:[%s4] sm:$0x1]
        %v764 = vperm.slane %v762, 0
        %v766 = vmul.f32 %v667, %v764
        %v767 = vmul.f32 %v670, %v764
        %v768 = vmul.f32 %v673, %v764
        %v769 = vmul.f32 %v676, %v764
        %v770 = vmul.f32 %v679, %v764
        %v771 = vmul.f32 %v682, %v764
        %v772 = vmul.f32 %v685, %v764
        %v773 = vmul.f32 %v688, %v764
        %v774 = vmul.f32 %v691, %v764
        %v775 = vmul.f32 %v694, %v764
        %v776 = vmul.f32 %v697, %v764
        %v777 = vmul.f32 %v700, %v764
        %v778 = vmul.f32 %v703, %v764
        %v779 = vmul.f32 %v706, %v764
        %v780 = vmul.f32 %v709, %v764
        %v781 = vmul.f32 %v712, %v764
        %v782 = vmul.f32 %v715, %v764
        %v783 = vmul.f32 %v718, %v764
        %v784 = vmul.f32 %v721, %v764
        %v785 = vmul.f32 %v724, %v764
        %v786 = vmul.f32 %v727, %v764
        %v787 = vmul.f32 %v730, %v764
        %v788 = vmul.f32 %v733, %v764
        %v789 = vmul.f32 %v736, %v764
        %v790 = vmul.f32 %v739, %v764
        %v791 = vmul.f32 %v742, %v764
        %v792 = vmul.f32 %v745, %v764
        %v793 = vmul.f32 %v748, %v764
        %v794 = vmul.f32 %v751, %v764
        %v795 = vmul.f32 %v754, %v764
        %v796 = vmul.f32 %v757, %v764
        %v797 = vmul.f32 %v760, %v764
        %v798 = vld [vmem:[%s5] sm:$0x1]
        %v800 = vperm.slane %v798, 0
        %v802 = vadd.f32 %v766, %v800
        %v803 = vadd.f32 %v767, %v800
        %v804 = vadd.f32 %v768, %v800
        %v805 = vadd.f32 %v769, %v800
        %v806 = vadd.f32 %v770, %v800
        %v807 = vadd.f32 %v771, %v800
        %v808 = vadd.f32 %v772, %v800
        %v809 = vadd.f32 %v773, %v800
        %v810 = vadd.f32 %v774, %v800
        %v811 = vadd.f32 %v775, %v800
        %v812 = vadd.f32 %v776, %v800
        %v813 = vadd.f32 %v777, %v800
        %v814 = vadd.f32 %v778, %v800
        %v815 = vadd.f32 %v779, %v800
        %v816 = vadd.f32 %v780, %v800
        %v817 = vadd.f32 %v781, %v800
        %v818 = vadd.f32 %v782, %v800
        %v819 = vadd.f32 %v783, %v800
        %v820 = vadd.f32 %v784, %v800
        %v821 = vadd.f32 %v785, %v800
        %v822 = vadd.f32 %v786, %v800
        %v823 = vadd.f32 %v787, %v800
        %v824 = vadd.f32 %v788, %v800
        %v825 = vadd.f32 %v789, %v800
        %v826 = vadd.f32 %v790, %v800
        %v827 = vadd.f32 %v791, %v800
        %v828 = vadd.f32 %v792, %v800
        %v829 = vadd.f32 %v793, %v800
        %v830 = vadd.f32 %v794, %v800
        %v831 = vadd.f32 %v795, %v800
        %v832 = vadd.f32 %v796, %v800
        %v833 = vadd.f32 %v797, %v800
        %v834 = vxor.u32 %v802, 2147483648
        %v835 = vxor.u32 %v803, 2147483648
        %v836 = vxor.u32 %v804, 2147483648
        %v837 = vxor.u32 %v805, 2147483648
        %v838 = vxor.u32 %v806, 2147483648
        %v839 = vxor.u32 %v807, 2147483648
        %v840 = vxor.u32 %v808, 2147483648
        %v841 = vxor.u32 %v809, 2147483648
        %v842 = vxor.u32 %v810, 2147483648
        %v843 = vxor.u32 %v811, 2147483648
        %v844 = vxor.u32 %v812, 2147483648
        %v845 = vxor.u32 %v813, 2147483648
        %v846 = vxor.u32 %v814, 2147483648
        %v847 = vxor.u32 %v815, 2147483648
        %v848 = vxor.u32 %v816, 2147483648
        %v849 = vxor.u32 %v817, 2147483648
        %v850 = vxor.u32 %v818, 2147483648
        %v851 = vxor.u32 %v819, 2147483648
        %v852 = vxor.u32 %v820, 2147483648
        %v853 = vxor.u32 %v821, 2147483648
        %v854 = vxor.u32 %v822, 2147483648
        %v855 = vxor.u32 %v823, 2147483648
        %v856 = vxor.u32 %v824, 2147483648
        %v857 = vxor.u32 %v825, 2147483648
        %v858 = vxor.u32 %v826, 2147483648
        %v859 = vxor.u32 %v827, 2147483648
        %v860 = vxor.u32 %v828, 2147483648
        %v861 = vxor.u32 %v829, 2147483648
        %v862 = vxor.u32 %v830, 2147483648
        %v863 = vxor.u32 %v831, 2147483648
        %v864 = vxor.u32 %v832, 2147483648
        %v865 = vxor.u32 %v833, 2147483648
        %v866 = vmul.f32 %v834, 1.442695
        %v867 = vpow.pop %v866
        %v868 = vmul.f32 %v835, 1.442695
        %v869 = vpow.pop %v868
        %v870 = vmul.f32 %v836, 1.442695
        %v871 = vpow.pop %v870
        %v872 = vmul.f32 %v837, 1.442695
        %v873 = vpow.pop %v872
        %v874 = vmul.f32 %v838, 1.442695
        %v875 = vpow.pop %v874
        %v876 = vmul.f32 %v839, 1.442695
        %v877 = vpow.pop %v876
        %v878 = vmul.f32 %v840, 1.442695
        %v879 = vpow.pop %v878
        %v880 = vmul.f32 %v841, 1.442695
        %v881 = vpow.pop %v880
        %v882 = vmul.f32 %v842, 1.442695
        %v883 = vpow.pop %v882
        %v884 = vmul.f32 %v843, 1.442695
        %v885 = vpow.pop %v884
        %v886 = vmul.f32 %v844, 1.442695
        %v887 = vpow.pop %v886
        %v888 = vmul.f32 %v845, 1.442695
        %v889 = vpow.pop %v888
        %v890 = vmul.f32 %v846, 1.442695
        %v891 = vpow.pop %v890
        %v892 = vmul.f32 %v847, 1.442695
        %v893 = vpow.pop %v892
        %v894 = vmul.f32 %v848, 1.442695
        %v895 = vpow.pop %v894
        %v896 = vmul.f32 %v849, 1.442695
        %v897 = vpow.pop %v896
        %v898 = vmul.f32 %v850, 1.442695
        %v899 = vpow.pop %v898
        %v900 = vmul.f32 %v851, 1.442695
        %v901 = vpow.pop %v900
        %v902 = vmul.f32 %v852, 1.442695
        %v903 = vpow.pop %v902
        %v904 = vmul.f32 %v853, 1.442695
        %v905 = vpow.pop %v904
        %v906 = vmul.f32 %v854, 1.442695
        %v907 = vpow.pop %v906
        %v908 = vmul.f32 %v855, 1.442695
        %v909 = vpow.pop %v908
        %v910 = vmul.f32 %v856, 1.442695
        %v911 = vpow.pop %v910
        %v912 = vmul.f32 %v857, 1.442695
        %v913 = vpow.pop %v912
        %v914 = vmul.f32 %v858, 1.442695
        %v915 = vpow.pop %v914
        %v916 = vmul.f32 %v859, 1.442695
        %v917 = vpow.pop %v916
        %v918 = vmul.f32 %v860, 1.442695
        %v919 = vpow.pop %v918
        %v920 = vmul.f32 %v861, 1.442695
        %v921 = vpow.pop %v920
        %v922 = vmul.f32 %v862, 1.442695
        %v923 = vpow.pop %v922
        %v924 = vmul.f32 %v863, 1.442695
        %v925 = vpow.pop %v924
        %v926 = vmul.f32 %v864, 1.442695
        %v927 = vpow.pop %v926
        %v928 = vmul.f32 %v865, 1.442695
        %v929 = vpow.pop %v928
        %v930 = vadd.f32 %v867, 1.0
        %v931 = vadd.f32 %v869, 1.0
        %v932 = vadd.f32 %v871, 1.0
        %v933 = vadd.f32 %v873, 1.0
        %v934 = vadd.f32 %v875, 1.0
        %v935 = vadd.f32 %v877, 1.0
        %v936 = vadd.f32 %v879, 1.0
        %v937 = vadd.f32 %v881, 1.0
        %v938 = vadd.f32 %v883, 1.0
        %v939 = vadd.f32 %v885, 1.0
        %v940 = vadd.f32 %v887, 1.0
        %v941 = vadd.f32 %v889, 1.0
        %v942 = vadd.f32 %v891, 1.0
        %v943 = vadd.f32 %v893, 1.0
        %v944 = vadd.f32 %v895, 1.0
        %v945 = vadd.f32 %v897, 1.0
        %v946 = vadd.f32 %v899, 1.0
        %v947 = vadd.f32 %v901, 1.0
        %v948 = vadd.f32 %v903, 1.0
        %v949 = vadd.f32 %v905, 1.0
        %v950 = vadd.f32 %v907, 1.0
        %v951 = vadd.f32 %v909, 1.0
        %v952 = vadd.f32 %v911, 1.0
        %v953 = vadd.f32 %v913, 1.0
        %v954 = vadd.f32 %v915, 1.0
        %v955 = vadd.f32 %v917, 1.0
        %v956 = vadd.f32 %v919, 1.0
        %v957 = vadd.f32 %v921, 1.0
        %v958 = vadd.f32 %v923, 1.0
        %v959 = vadd.f32 %v925, 1.0
        %v960 = vadd.f32 %v927, 1.0
        %v961 = vadd.f32 %v929, 1.0
        %v962 = vrcp.pop %v930
        %v963 = vmul.f32 %v930, %v962
        %v964 = vsub.f32 1.0, %v963
        %v965 = vmul.f32 %v962, %v964
        %v966 = vadd.f32 %v962, %v965
        %vm967 = vweird.f32 %v930
        %vm968 = vweird.f32 %v962
        %vm969 = vmor %vm967, %vm968
        %v970 = vsel %vm969, %v962, %v966
        %v971 = vand.u32 2147483647, %v930
        %vm972 = vcmp.eq.f32.partialorder %v971, 8.507059e+37
        %v973 = vand.u32 %v930, 2147483648
        %v974 = vor.u32 1.1754944e-38, %v973
        %v975 = vsel %vm972, %v974, %v970
        %v976 = vmul.f32 1.0, %v975
        %v977 = vrcp.pop %v931
        %v978 = vmul.f32 %v931, %v977
        %v979 = vsub.f32 1.0, %v978
        %v980 = vmul.f32 %v977, %v979
        %v981 = vadd.f32 %v977, %v980
        %vm982 = vweird.f32 %v931
        %vm983 = vweird.f32 %v977
        %vm984 = vmor %vm982, %vm983
        %v985 = vsel %vm984, %v977, %v981
        %v986 = vand.u32 2147483647, %v931
        %vm987 = vcmp.eq.f32.partialorder %v986, 8.507059e+37
        %v988 = vand.u32 %v931, 2147483648
        %v989 = vor.u32 1.1754944e-38, %v988
        %v990 = vsel %vm987, %v989, %v985
        %v991 = vmul.f32 1.0, %v990
        %v992 = vrcp.pop %v932
        %v993 = vmul.f32 %v932, %v992
        %v994 = vsub.f32 1.0, %v993
        %v995 = vmul.f32 %v992, %v994
        %v996 = vadd.f32 %v992, %v995
        %vm997 = vweird.f32 %v932
        %vm998 = vweird.f32 %v992
        %vm999 = vmor %vm997, %vm998
        %v1000 = vsel %vm999, %v992, %v996
        %v1001 = vand.u32 2147483647, %v932
        %vm1002 = vcmp.eq.f32.partialorder %v1001, 8.507059e+37
        %v1003 = vand.u32 %v932, 2147483648
        %v1004 = vor.u32 1.1754944e-38, %v1003
        %v1005 = vsel %vm1002, %v1004, %v1000
        %v1006 = vmul.f32 1.0, %v1005
        %v1007 = vrcp.pop %v933
        %v1008 = vmul.f32 %v933, %v1007
        %v1009 = vsub.f32 1.0, %v1008
        %v1010 = vmul.f32 %v1007, %v1009
        %v1011 = vadd.f32 %v1007, %v1010
        %vm1012 = vweird.f32 %v933
        %vm1013 = vweird.f32 %v1007
        %vm1014 = vmor %vm1012, %vm1013
        %v1015 = vsel %vm1014, %v1007, %v1011
        %v1016 = vand.u32 2147483647, %v933
        %vm1017 = vcmp.eq.f32.partialorder %v1016, 8.507059e+37
        %v1018 = vand.u32 %v933, 2147483648
        %v1019 = vor.u32 1.1754944e-38, %v1018
        %v1020 = vsel %vm1017, %v1019, %v1015
        %v1021 = vmul.f32 1.0, %v1020
        %v1022 = vrcp.pop %v934
        %v1023 = vmul.f32 %v934, %v1022
        %v1024 = vsub.f32 1.0, %v1023
        %v1025 = vmul.f32 %v1022, %v1024
        %v1026 = vadd.f32 %v1022, %v1025
        %vm1027 = vweird.f32 %v934
        %vm1028 = vweird.f32 %v1022
        %vm1029 = vmor %vm1027, %vm1028
        %v1030 = vsel %vm1029, %v1022, %v1026
        %v1031 = vand.u32 2147483647, %v934
        %vm1032 = vcmp.eq.f32.partialorder %v1031, 8.507059e+37
        %v1033 = vand.u32 %v934, 2147483648
        %v1034 = vor.u32 1.1754944e-38, %v1033
        %v1035 = vsel %vm1032, %v1034, %v1030
        %v1036 = vmul.f32 1.0, %v1035
        %v1037 = vrcp.pop %v935
        %v1038 = vmul.f32 %v935, %v1037
        %v1039 = vsub.f32 1.0, %v1038
        %v1040 = vmul.f32 %v1037, %v1039
        %v1041 = vadd.f32 %v1037, %v1040
        %vm1042 = vweird.f32 %v935
        %vm1043 = vweird.f32 %v1037
        %vm1044 = vmor %vm1042, %vm1043
        %v1045 = vsel %vm1044, %v1037, %v1041
        %v1046 = vand.u32 2147483647, %v935
        %vm1047 = vcmp.eq.f32.partialorder %v1046, 8.507059e+37
        %v1048 = vand.u32 %v935, 2147483648
        %v1049 = vor.u32 1.1754944e-38, %v1048
        %v1050 = vsel %vm1047, %v1049, %v1045
        %v1051 = vmul.f32 1.0, %v1050
        %v1052 = vrcp.pop %v936
        %v1053 = vmul.f32 %v936, %v1052
        %v1054 = vsub.f32 1.0, %v1053
        %v1055 = vmul.f32 %v1052, %v1054
        %v1056 = vadd.f32 %v1052, %v1055
        %vm1057 = vweird.f32 %v936
        %vm1058 = vweird.f32 %v1052
        %vm1059 = vmor %vm1057, %vm1058
        %v1060 = vsel %vm1059, %v1052, %v1056
        %v1061 = vand.u32 2147483647, %v936
        %vm1062 = vcmp.eq.f32.partialorder %v1061, 8.507059e+37
        %v1063 = vand.u32 %v936, 2147483648
        %v1064 = vor.u32 1.1754944e-38, %v1063
        %v1065 = vsel %vm1062, %v1064, %v1060
        %v1066 = vmul.f32 1.0, %v1065
        %v1067 = vrcp.pop %v937
        %v1068 = vmul.f32 %v937, %v1067
        %v1069 = vsub.f32 1.0, %v1068
        %v1070 = vmul.f32 %v1067, %v1069
        %v1071 = vadd.f32 %v1067, %v1070
        %vm1072 = vweird.f32 %v937
        %vm1073 = vweird.f32 %v1067
        %vm1074 = vmor %vm1072, %vm1073
        %v1075 = vsel %vm1074, %v1067, %v1071
        %v1076 = vand.u32 2147483647, %v937
        %vm1077 = vcmp.eq.f32.partialorder %v1076, 8.507059e+37
        %v1078 = vand.u32 %v937, 2147483648
        %v1079 = vor.u32 1.1754944e-38, %v1078
        %v1080 = vsel %vm1077, %v1079, %v1075
        %v1081 = vmul.f32 1.0, %v1080
        %v1082 = vrcp.pop %v938
        %v1083 = vmul.f32 %v938, %v1082
        %v1084 = vsub.f32 1.0, %v1083
        %v1085 = vmul.f32 %v1082, %v1084
        %v1086 = vadd.f32 %v1082, %v1085
        %vm1087 = vweird.f32 %v938
        %vm1088 = vweird.f32 %v1082
        %vm1089 = vmor %vm1087, %vm1088
        %v1090 = vsel %vm1089, %v1082, %v1086
        %v1091 = vand.u32 2147483647, %v938
        %vm1092 = vcmp.eq.f32.partialorder %v1091, 8.507059e+37
        %v1093 = vand.u32 %v938, 2147483648
        %v1094 = vor.u32 1.1754944e-38, %v1093
        %v1095 = vsel %vm1092, %v1094, %v1090
        %v1096 = vmul.f32 1.0, %v1095
        %v1097 = vrcp.pop %v939
        %v1098 = vmul.f32 %v939, %v1097
        %v1099 = vsub.f32 1.0, %v1098
        %v1100 = vmul.f32 %v1097, %v1099
        %v1101 = vadd.f32 %v1097, %v1100
        %vm1102 = vweird.f32 %v939
        %vm1103 = vweird.f32 %v1097
        %vm1104 = vmor %vm1102, %vm1103
        %v1105 = vsel %vm1104, %v1097, %v1101
        %v1106 = vand.u32 2147483647, %v939
        %vm1107 = vcmp.eq.f32.partialorder %v1106, 8.507059e+37
        %v1108 = vand.u32 %v939, 2147483648
        %v1109 = vor.u32 1.1754944e-38, %v1108
        %v1110 = vsel %vm1107, %v1109, %v1105
        %v1111 = vmul.f32 1.0, %v1110
        %v1112 = vrcp.pop %v940
        %v1113 = vmul.f32 %v940, %v1112
        %v1114 = vsub.f32 1.0, %v1113
        %v1115 = vmul.f32 %v1112, %v1114
        %v1116 = vadd.f32 %v1112, %v1115
        %vm1117 = vweird.f32 %v940
        %vm1118 = vweird.f32 %v1112
        %vm1119 = vmor %vm1117, %vm1118
        %v1120 = vsel %vm1119, %v1112, %v1116
        %v1121 = vand.u32 2147483647, %v940
        %vm1122 = vcmp.eq.f32.partialorder %v1121, 8.507059e+37
        %v1123 = vand.u32 %v940, 2147483648
        %v1124 = vor.u32 1.1754944e-38, %v1123
        %v1125 = vsel %vm1122, %v1124, %v1120
        %v1126 = vmul.f32 1.0, %v1125
        %v1127 = vrcp.pop %v941
        %v1128 = vmul.f32 %v941, %v1127
        %v1129 = vsub.f32 1.0, %v1128
        %v1130 = vmul.f32 %v1127, %v1129
        %v1131 = vadd.f32 %v1127, %v1130
        %vm1132 = vweird.f32 %v941
        %vm1133 = vweird.f32 %v1127
        %vm1134 = vmor %vm1132, %vm1133
        %v1135 = vsel %vm1134, %v1127, %v1131
        %v1136 = vand.u32 2147483647, %v941
        %vm1137 = vcmp.eq.f32.partialorder %v1136, 8.507059e+37
        %v1138 = vand.u32 %v941, 2147483648
        %v1139 = vor.u32 1.1754944e-38, %v1138
        %v1140 = vsel %vm1137, %v1139, %v1135
        %v1141 = vmul.f32 1.0, %v1140
        %v1142 = vrcp.pop %v942
        %v1143 = vmul.f32 %v942, %v1142
        %v1144 = vsub.f32 1.0, %v1143
        %v1145 = vmul.f32 %v1142, %v1144
        %v1146 = vadd.f32 %v1142, %v1145
        %vm1147 = vweird.f32 %v942
        %vm1148 = vweird.f32 %v1142
        %vm1149 = vmor %vm1147, %vm1148
        %v1150 = vsel %vm1149, %v1142, %v1146
        %v1151 = vand.u32 2147483647, %v942
        %vm1152 = vcmp.eq.f32.partialorder %v1151, 8.507059e+37
        %v1153 = vand.u32 %v942, 2147483648
        %v1154 = vor.u32 1.1754944e-38, %v1153
        %v1155 = vsel %vm1152, %v1154, %v1150
        %v1156 = vmul.f32 1.0, %v1155
        %v1157 = vrcp.pop %v943
        %v1158 = vmul.f32 %v943, %v1157
        %v1159 = vsub.f32 1.0, %v1158
        %v1160 = vmul.f32 %v1157, %v1159
        %v1161 = vadd.f32 %v1157, %v1160
        %vm1162 = vweird.f32 %v943
        %vm1163 = vweird.f32 %v1157
        %vm1164 = vmor %vm1162, %vm1163
        %v1165 = vsel %vm1164, %v1157, %v1161
        %v1166 = vand.u32 2147483647, %v943
        %vm1167 = vcmp.eq.f32.partialorder %v1166, 8.507059e+37
        %v1168 = vand.u32 %v943, 2147483648
        %v1169 = vor.u32 1.1754944e-38, %v1168
        %v1170 = vsel %vm1167, %v1169, %v1165
        %v1171 = vmul.f32 1.0, %v1170
        %v1172 = vrcp.pop %v944
        %v1173 = vmul.f32 %v944, %v1172
        %v1174 = vsub.f32 1.0, %v1173
        %v1175 = vmul.f32 %v1172, %v1174
        %v1176 = vadd.f32 %v1172, %v1175
        %vm1177 = vweird.f32 %v944
        %vm1178 = vweird.f32 %v1172
        %vm1179 = vmor %vm1177, %vm1178
        %v1180 = vsel %vm1179, %v1172, %v1176
        %v1181 = vand.u32 2147483647, %v944
        %vm1182 = vcmp.eq.f32.partialorder %v1181, 8.507059e+37
        %v1183 = vand.u32 %v944, 2147483648
        %v1184 = vor.u32 1.1754944e-38, %v1183
        %v1185 = vsel %vm1182, %v1184, %v1180
        %v1186 = vmul.f32 1.0, %v1185
        %v1187 = vrcp.pop %v945
        %v1188 = vmul.f32 %v945, %v1187
        %v1189 = vsub.f32 1.0, %v1188
        %v1190 = vmul.f32 %v1187, %v1189
        %v1191 = vadd.f32 %v1187, %v1190
        %vm1192 = vweird.f32 %v945
        %vm1193 = vweird.f32 %v1187
        %vm1194 = vmor %vm1192, %vm1193
        %v1195 = vsel %vm1194, %v1187, %v1191
        %v1196 = vand.u32 2147483647, %v945
        %vm1197 = vcmp.eq.f32.partialorder %v1196, 8.507059e+37
        %v1198 = vand.u32 %v945, 2147483648
        %v1199 = vor.u32 1.1754944e-38, %v1198
        %v1200 = vsel %vm1197, %v1199, %v1195
        %v1201 = vmul.f32 1.0, %v1200
        %v1202 = vrcp.pop %v946
        %v1203 = vmul.f32 %v946, %v1202
        %v1204 = vsub.f32 1.0, %v1203
        %v1205 = vmul.f32 %v1202, %v1204
        %v1206 = vadd.f32 %v1202, %v1205
        %vm1207 = vweird.f32 %v946
        %vm1208 = vweird.f32 %v1202
        %vm1209 = vmor %vm1207, %vm1208
        %v1210 = vsel %vm1209, %v1202, %v1206
        %v1211 = vand.u32 2147483647, %v946
        %vm1212 = vcmp.eq.f32.partialorder %v1211, 8.507059e+37
        %v1213 = vand.u32 %v946, 2147483648
        %v1214 = vor.u32 1.1754944e-38, %v1213
        %v1215 = vsel %vm1212, %v1214, %v1210
        %v1216 = vmul.f32 1.0, %v1215
        %v1217 = vrcp.pop %v947
        %v1218 = vmul.f32 %v947, %v1217
        %v1219 = vsub.f32 1.0, %v1218
        %v1220 = vmul.f32 %v1217, %v1219
        %v1221 = vadd.f32 %v1217, %v1220
        %vm1222 = vweird.f32 %v947
        %vm1223 = vweird.f32 %v1217
        %vm1224 = vmor %vm1222, %vm1223
        %v1225 = vsel %vm1224, %v1217, %v1221
        %v1226 = vand.u32 2147483647, %v947
        %vm1227 = vcmp.eq.f32.partialorder %v1226, 8.507059e+37
        %v1228 = vand.u32 %v947, 2147483648
        %v1229 = vor.u32 1.1754944e-38, %v1228
        %v1230 = vsel %vm1227, %v1229, %v1225
        %v1231 = vmul.f32 1.0, %v1230
        %v1232 = vrcp.pop %v948
        %v1233 = vmul.f32 %v948, %v1232
        %v1234 = vsub.f32 1.0, %v1233
        %v1235 = vmul.f32 %v1232, %v1234
        %v1236 = vadd.f32 %v1232, %v1235
        %vm1237 = vweird.f32 %v948
        %vm1238 = vweird.f32 %v1232
        %vm1239 = vmor %vm1237, %vm1238
        %v1240 = vsel %vm1239, %v1232, %v1236
        %v1241 = vand.u32 2147483647, %v948
        %vm1242 = vcmp.eq.f32.partialorder %v1241, 8.507059e+37
        %v1243 = vand.u32 %v948, 2147483648
        %v1244 = vor.u32 1.1754944e-38, %v1243
        %v1245 = vsel %vm1242, %v1244, %v1240
        %v1246 = vmul.f32 1.0, %v1245
        %v1247 = vrcp.pop %v949
        %v1248 = vmul.f32 %v949, %v1247
        %v1249 = vsub.f32 1.0, %v1248
        %v1250 = vmul.f32 %v1247, %v1249
        %v1251 = vadd.f32 %v1247, %v1250
        %vm1252 = vweird.f32 %v949
        %vm1253 = vweird.f32 %v1247
        %vm1254 = vmor %vm1252, %vm1253
        %v1255 = vsel %vm1254, %v1247, %v1251
        %v1256 = vand.u32 2147483647, %v949
        %vm1257 = vcmp.eq.f32.partialorder %v1256, 8.507059e+37
        %v1258 = vand.u32 %v949, 2147483648
        %v1259 = vor.u32 1.1754944e-38, %v1258
        %v1260 = vsel %vm1257, %v1259, %v1255
        %v1261 = vmul.f32 1.0, %v1260
        %v1262 = vrcp.pop %v950
        %v1263 = vmul.f32 %v950, %v1262
        %v1264 = vsub.f32 1.0, %v1263
        %v1265 = vmul.f32 %v1262, %v1264
        %v1266 = vadd.f32 %v1262, %v1265
        %vm1267 = vweird.f32 %v950
        %vm1268 = vweird.f32 %v1262
        %vm1269 = vmor %vm1267, %vm1268
        %v1270 = vsel %vm1269, %v1262, %v1266
        %v1271 = vand.u32 2147483647, %v950
        %vm1272 = vcmp.eq.f32.partialorder %v1271, 8.507059e+37
        %v1273 = vand.u32 %v950, 2147483648
        %v1274 = vor.u32 1.1754944e-38, %v1273
        %v1275 = vsel %vm1272, %v1274, %v1270
        %v1276 = vmul.f32 1.0, %v1275
        %v1277 = vrcp.pop %v951
        %v1278 = vmul.f32 %v951, %v1277
        %v1279 = vsub.f32 1.0, %v1278
        %v1280 = vmul.f32 %v1277, %v1279
        %v1281 = vadd.f32 %v1277, %v1280
        %vm1282 = vweird.f32 %v951
        %vm1283 = vweird.f32 %v1277
        %vm1284 = vmor %vm1282, %vm1283
        %v1285 = vsel %vm1284, %v1277, %v1281
        %v1286 = vand.u32 2147483647, %v951
        %vm1287 = vcmp.eq.f32.partialorder %v1286, 8.507059e+37
        %v1288 = vand.u32 %v951, 2147483648
        %v1289 = vor.u32 1.1754944e-38, %v1288
        %v1290 = vsel %vm1287, %v1289, %v1285
        %v1291 = vmul.f32 1.0, %v1290
        %v1292 = vrcp.pop %v952
        %v1293 = vmul.f32 %v952, %v1292
        %v1294 = vsub.f32 1.0, %v1293
        %v1295 = vmul.f32 %v1292, %v1294
        %v1296 = vadd.f32 %v1292, %v1295
        %vm1297 = vweird.f32 %v952
        %vm1298 = vweird.f32 %v1292
        %vm1299 = vmor %vm1297, %vm1298
        %v1300 = vsel %vm1299, %v1292, %v1296
        %v1301 = vand.u32 2147483647, %v952
        %vm1302 = vcmp.eq.f32.partialorder %v1301, 8.507059e+37
        %v1303 = vand.u32 %v952, 2147483648
        %v1304 = vor.u32 1.1754944e-38, %v1303
        %v1305 = vsel %vm1302, %v1304, %v1300
        %v1306 = vmul.f32 1.0, %v1305
        %v1307 = vrcp.pop %v953
        %v1308 = vmul.f32 %v953, %v1307
        %v1309 = vsub.f32 1.0, %v1308
        %v1310 = vmul.f32 %v1307, %v1309
        %v1311 = vadd.f32 %v1307, %v1310
        %vm1312 = vweird.f32 %v953
        %vm1313 = vweird.f32 %v1307
        %vm1314 = vmor %vm1312, %vm1313
        %v1315 = vsel %vm1314, %v1307, %v1311
        %v1316 = vand.u32 2147483647, %v953
        %vm1317 = vcmp.eq.f32.partialorder %v1316, 8.507059e+37
        %v1318 = vand.u32 %v953, 2147483648
        %v1319 = vor.u32 1.1754944e-38, %v1318
        %v1320 = vsel %vm1317, %v1319, %v1315
        %v1321 = vmul.f32 1.0, %v1320
        %v1322 = vrcp.pop %v954
        %v1323 = vmul.f32 %v954, %v1322
        %v1324 = vsub.f32 1.0, %v1323
        %v1325 = vmul.f32 %v1322, %v1324
        %v1326 = vadd.f32 %v1322, %v1325
        %vm1327 = vweird.f32 %v954
        %vm1328 = vweird.f32 %v1322
        %vm1329 = vmor %vm1327, %vm1328
        %v1330 = vsel %vm1329, %v1322, %v1326
        %v1331 = vand.u32 2147483647, %v954
        %vm1332 = vcmp.eq.f32.partialorder %v1331, 8.507059e+37
        %v1333 = vand.u32 %v954, 2147483648
        %v1334 = vor.u32 1.1754944e-38, %v1333
        %v1335 = vsel %vm1332, %v1334, %v1330
        %v1336 = vmul.f32 1.0, %v1335
        %v1337 = vrcp.pop %v955
        %v1338 = vmul.f32 %v955, %v1337
        %v1339 = vsub.f32 1.0, %v1338
        %v1340 = vmul.f32 %v1337, %v1339
        %v1341 = vadd.f32 %v1337, %v1340
        %vm1342 = vweird.f32 %v955
        %vm1343 = vweird.f32 %v1337
        %vm1344 = vmor %vm1342, %vm1343
        %v1345 = vsel %vm1344, %v1337, %v1341
        %v1346 = vand.u32 2147483647, %v955
        %vm1347 = vcmp.eq.f32.partialorder %v1346, 8.507059e+37
        %v1348 = vand.u32 %v955, 2147483648
        %v1349 = vor.u32 1.1754944e-38, %v1348
        %v1350 = vsel %vm1347, %v1349, %v1345
        %v1351 = vmul.f32 1.0, %v1350
        %v1352 = vrcp.pop %v956
        %v1353 = vmul.f32 %v956, %v1352
        %v1354 = vsub.f32 1.0, %v1353
        %v1355 = vmul.f32 %v1352, %v1354
        %v1356 = vadd.f32 %v1352, %v1355
        %vm1357 = vweird.f32 %v956
        %vm1358 = vweird.f32 %v1352
        %vm1359 = vmor %vm1357, %vm1358
        %v1360 = vsel %vm1359, %v1352, %v1356
        %v1361 = vand.u32 2147483647, %v956
        %vm1362 = vcmp.eq.f32.partialorder %v1361, 8.507059e+37
        %v1363 = vand.u32 %v956, 2147483648
        %v1364 = vor.u32 1.1754944e-38, %v1363
        %v1365 = vsel %vm1362, %v1364, %v1360
        %v1366 = vmul.f32 1.0, %v1365
        %v1367 = vrcp.pop %v957
        %v1368 = vmul.f32 %v957, %v1367
        %v1369 = vsub.f32 1.0, %v1368
        %v1370 = vmul.f32 %v1367, %v1369
        %v1371 = vadd.f32 %v1367, %v1370
        %vm1372 = vweird.f32 %v957
        %vm1373 = vweird.f32 %v1367
        %vm1374 = vmor %vm1372, %vm1373
        %v1375 = vsel %vm1374, %v1367, %v1371
        %v1376 = vand.u32 2147483647, %v957
        %vm1377 = vcmp.eq.f32.partialorder %v1376, 8.507059e+37
        %v1378 = vand.u32 %v957, 2147483648
        %v1379 = vor.u32 1.1754944e-38, %v1378
        %v1380 = vsel %vm1377, %v1379, %v1375
        %v1381 = vmul.f32 1.0, %v1380
        %v1382 = vrcp.pop %v958
        %v1383 = vmul.f32 %v958, %v1382
        %v1384 = vsub.f32 1.0, %v1383
        %v1385 = vmul.f32 %v1382, %v1384
        %v1386 = vadd.f32 %v1382, %v1385
        %vm1387 = vweird.f32 %v958
        %vm1388 = vweird.f32 %v1382
        %vm1389 = vmor %vm1387, %vm1388
        %v1390 = vsel %vm1389, %v1382, %v1386
        %v1391 = vand.u32 2147483647, %v958
        %vm1392 = vcmp.eq.f32.partialorder %v1391, 8.507059e+37
        %v1393 = vand.u32 %v958, 2147483648
        %v1394 = vor.u32 1.1754944e-38, %v1393
        %v1395 = vsel %vm1392, %v1394, %v1390
        %v1396 = vmul.f32 1.0, %v1395
        %v1397 = vrcp.pop %v959
        %v1398 = vmul.f32 %v959, %v1397
        %v1399 = vsub.f32 1.0, %v1398
        %v1400 = vmul.f32 %v1397, %v1399
        %v1401 = vadd.f32 %v1397, %v1400
        %vm1402 = vweird.f32 %v959
        %vm1403 = vweird.f32 %v1397
        %vm1404 = vmor %vm1402, %vm1403
        %v1405 = vsel %vm1404, %v1397, %v1401
        %v1406 = vand.u32 2147483647, %v959
        %vm1407 = vcmp.eq.f32.partialorder %v1406, 8.507059e+37
        %v1408 = vand.u32 %v959, 2147483648
        %v1409 = vor.u32 1.1754944e-38, %v1408
        %v1410 = vsel %vm1407, %v1409, %v1405
        %v1411 = vmul.f32 1.0, %v1410
        %v1412 = vrcp.pop %v960
        %v1413 = vmul.f32 %v960, %v1412
        %v1414 = vsub.f32 1.0, %v1413
        %v1415 = vmul.f32 %v1412, %v1414
        %v1416 = vadd.f32 %v1412, %v1415
        %vm1417 = vweird.f32 %v960
        %vm1418 = vweird.f32 %v1412
        %vm1419 = vmor %vm1417, %vm1418
        %v1420 = vsel %vm1419, %v1412, %v1416
        %v1421 = vand.u32 2147483647, %v960
        %vm1422 = vcmp.eq.f32.partialorder %v1421, 8.507059e+37
        %v1423 = vand.u32 %v960, 2147483648
        %v1424 = vor.u32 1.1754944e-38, %v1423
        %v1425 = vsel %vm1422, %v1424, %v1420
        %v1426 = vmul.f32 1.0, %v1425
        %v1427 = vrcp.pop %v961
        %v1428 = vmul.f32 %v961, %v1427
        %v1429 = vsub.f32 1.0, %v1428
        %v1430 = vmul.f32 %v1427, %v1429
        %v1431 = vadd.f32 %v1427, %v1430
        %vm1432 = vweird.f32 %v961
        %vm1433 = vweird.f32 %v1427
        %vm1434 = vmor %vm1432, %vm1433
        %v1435 = vsel %vm1434, %v1427, %v1431
        %v1436 = vand.u32 2147483647, %v961
        %vm1437 = vcmp.eq.f32.partialorder %v1436, 8.507059e+37
        %v1438 = vand.u32 %v961, 2147483648
        %v1439 = vor.u32 1.1754944e-38, %v1438
        %v1440 = vsel %vm1437, %v1439, %v1435
        %v1441 = vmul.f32 1.0, %v1440
        %v1442 = vmul.f32 %v802, %v976
        %v1443 = vmul.f32 %v803, %v991
        %v1444 = vmul.f32 %v804, %v1006
        %v1445 = vmul.f32 %v805, %v1021
        %v1446 = vmul.f32 %v806, %v1036
        %v1447 = vmul.f32 %v807, %v1051
        %v1448 = vmul.f32 %v808, %v1066
        %v1449 = vmul.f32 %v809, %v1081
        %v1450 = vmul.f32 %v810, %v1096
        %v1451 = vmul.f32 %v811, %v1111
        %v1452 = vmul.f32 %v812, %v1126
        %v1453 = vmul.f32 %v813, %v1141
        %v1454 = vmul.f32 %v814, %v1156
        %v1455 = vmul.f32 %v815, %v1171
        %v1456 = vmul.f32 %v816, %v1186
        %v1457 = vmul.f32 %v817, %v1201
        %v1458 = vmul.f32 %v818, %v1216
        %v1459 = vmul.f32 %v819, %v1231
        %v1460 = vmul.f32 %v820, %v1246
        %v1461 = vmul.f32 %v821, %v1261
        %v1462 = vmul.f32 %v822, %v1276
        %v1463 = vmul.f32 %v823, %v1291
        %v1464 = vmul.f32 %v824, %v1306
        %v1465 = vmul.f32 %v825, %v1321
        %v1466 = vmul.f32 %v826, %v1336
        %v1467 = vmul.f32 %v827, %v1351
        %v1468 = vmul.f32 %v828, %v1366
        %v1469 = vmul.f32 %v829, %v1381
        %v1470 = vmul.f32 %v830, %v1396
        %v1471 = vmul.f32 %v831, %v1411
        %v1472 = vmul.f32 %v832, %v1426
        %v1473 = vmul.f32 %v833, %v1441
        %vm1474 = vcmask 261120
        %1475 = vst.msk [vmem:[%s261] sm:$0xff] %vm1474, %v1442
        %1476 = vst.msk [vmem:[%s261 + $0x8] sm:$0xff] %vm1474, %v1443
        %1477 = vst.msk [vmem:[%s261 + $0x10] sm:$0xff] %vm1474, %v1444
        %1478 = vst.msk [vmem:[%s261 + $0x18] sm:$0xff] %vm1474, %v1445
        %1479 = vst.msk [vmem:[%s261 + $0x20] sm:$0xff] %vm1474, %v1446
        %1480 = vst.msk [vmem:[%s261 + $0x28] sm:$0xff] %vm1474, %v1447
        %1481 = vst.msk [vmem:[%s261 + $0x30] sm:$0xff] %vm1474, %v1448
        %1482 = vst.msk [vmem:[%s261 + $0x38] sm:$0xff] %vm1474, %v1449
        %1483 = vst.msk [vmem:[%s261 + $0x40] sm:$0xff] %vm1474, %v1450
        %1484 = vst.msk [vmem:[%s261 + $0x48] sm:$0xff] %vm1474, %v1451
        %1485 = vst.msk [vmem:[%s261 + $0x50] sm:$0xff] %vm1474, %v1452
        %1486 = vst.msk [vmem:[%s261 + $0x58] sm:$0xff] %vm1474, %v1453
        %1487 = vst.msk [vmem:[%s261 + $0x60] sm:$0xff] %vm1474, %v1454
        %1488 = vst.msk [vmem:[%s261 + $0x68] sm:$0xff] %vm1474, %v1455
        %1489 = vst.msk [vmem:[%s261 + $0x70] sm:$0xff] %vm1474, %v1456
        %1490 = vst.msk [vmem:[%s261 + $0x78] sm:$0xff] %vm1474, %v1457
        %1491 = vst.msk [vmem:[%s261 + $0x80] sm:$0xff] %vm1474, %v1458
        %1492 = vst.msk [vmem:[%s261 + $0x88] sm:$0xff] %vm1474, %v1459
        %1493 = vst.msk [vmem:[%s261 + $0x90] sm:$0xff] %vm1474, %v1460
        %1494 = vst.msk [vmem:[%s261 + $0x98] sm:$0xff] %vm1474, %v1461
        %1495 = vst.msk [vmem:[%s261 + $0xa0] sm:$0xff] %vm1474, %v1462
        %1496 = vst.msk [vmem:[%s261 + $0xa8] sm:$0xff] %vm1474, %v1463
        %1497 = vst.msk [vmem:[%s261 + $0xb0] sm:$0xff] %vm1474, %v1464
        %1498 = vst.msk [vmem:[%s261 + $0xb8] sm:$0xff] %vm1474, %v1465
        %1499 = vst.msk [vmem:[%s261 + $0xc0] sm:$0xff] %vm1474, %v1466
        %1500 = vst.msk [vmem:[%s261 + $0xc8] sm:$0xff] %vm1474, %v1467
        %1501 = vst.msk [vmem:[%s261 + $0xd0] sm:$0xff] %vm1474, %v1468
        %1502 = vst.msk [vmem:[%s261 + $0xd8] sm:$0xff] %vm1474, %v1469
        %1503 = vst.msk [vmem:[%s261 + $0xe0] sm:$0xff] %vm1474, %v1470
        %1504 = vst.msk [vmem:[%s261 + $0xe8] sm:$0xff] %vm1474, %v1471
        %1505 = vst.msk [vmem:[%s261 + $0xf0] sm:$0xff] %vm1474, %v1472
        %1506 = vst.msk [vmem:[%s261 + $0xf8] sm:$0xff] %vm1474, %v1473
        %s1507 = sand.u32 %s164, 1
        %s1508 = scalar_lea.sflag [#allocation3], %s1507
        %s1509 = sand.u32 %s164, 1
        %s1510 = smul.addr %s1509, 256
        %s1511 = scalar_lea.vmem [#allocation2], %s1510
        // Predicated region
        $region45: #{c3_forward_pallas.13} parent=43 // pred_check
          %p1512 = pneg %p174
        $region46: #{c3_forward_pallas.13} parent=43 // pred_check_branch
          %1514 = sbr.rel (%p1512) target = $region48
        $region47: #{c3_forward_pallas.13} parent=43 // pred_region
          %s1515 = smul.u32 32, %s20
          %1517 = vsyncadd %s1508, 0
          %s1518 = smul.addr %s1515, 8
          %s1519 = scalar_lea.hbm %s6, %s1518
          %s1520 = sshll.u32 %s1511, 4
          %s1521 = int_to_ptr.vmem [resolvable:$true] %s1520
          %s1522 = sshll.u32 %s1519, 4
          %s1523 = int_to_ptr.hbm [resolvable:$true] %s1522
          %1528 = dma.vmem_to_hbm [thread:$0]  %s1521, 4096, %s1523, %s1508, 128, 128, 8
        $region48: #{c3_forward_pallas.13} parent=43 // pred_fallthru
          _
      $region44: #{c3_forward_pallas.13} parent=5 // pred_fallthru
        _
      %p1529 = scmp.le.s32.totalorder 2, %s15
      // Predicated region
      $region49: #{c3_forward_pallas.13} parent=5 // pred_check
        %p1530 = pneg %p1529
      $region50: #{c3_forward_pallas.13} parent=5 // pred_check_branch
        %1532 = sbr.rel (%p1530) target = $region52
      $region51: #{c3_forward_pallas.13} parent=5 // pred_region
        %s1533 = ssub.s32 %s15, 2
        // Predicated region
        $region53: #{c3_forward_pallas.13} parent=51 // pred_check
          %p1534 = pneg %p180
        $region54: #{c3_forward_pallas.13} parent=51 // pred_check_branch
          %1536 = sbr.rel (%p1534) target = $region56
        $region55: #{c3_forward_pallas.13} parent=51 // pred_region
          %s1537 = sand.u32 %s165, 1
          %s1538 = scalar_lea.sflag [#allocation3], %s1537
          %s1539 = sand.u32 %s165, 1
          %s1540 = smul.addr %s1539, 256
          %s1541 = scalar_lea.vmem [#allocation2], %s1540
          %1543 = dma.done %s1538, 4096
        $region56: #{c3_forward_pallas.13} parent=51 // pred_fallthru
          _
      $region52: #{c3_forward_pallas.13} parent=5 // pred_fallthru
        _
    $region6: #{c3_forward_pallas.13} parent=1 // loop_footer
      %s19 = sadd.s32 1, %s15
    $region7: #{c3_forward_pallas.13} parent=1 // loop_footer_branch
      %14 = sbr.rel target = $region3
    $region8: #{c3_forward_pallas.13} parent=1 // loop_exit
      _
    %1544 = vsyncpa [#allocation3], 1
    %s1545 = scalar_lea.sflag [#allocation3], 1
    %1546 = vsyncpa %s1545, 1

// kernel: c3_forward_pallas.10
$region0: #{c3_forward_pallas.10}
  #allocation0 [shape = 'u32[]', space=smem, size = 0x4, offset = 0x4, fixed_abs, tag = 'smem constant byte address 0x4 - core index']
  #allocation1 [shape = 'u32[72,128]{1,0:T(1,128)}', space=vmem, size = 0x9000, scoped, tag = 'internal scratch']
  %s0 = inlined_call_operand.vmem [shape: f32[512,144], index: 0, kind: input, shape index: {}]
  %s1 = inlined_call_operand.vmem [shape: f32[144,16], index: 1, kind: input, shape index: {}]
  %s2 = inlined_call_operand.vmem [shape: f32[1,16], index: 2, kind: input, shape index: {}]
  %s3 = inlined_call_operand.vmem [shape: f32[1,16], index: 3, kind: input, shape index: {}]
  %s4 = inlined_call_operand.vmem [shape: f32[512,16], index: 4, kind: input, shape index: {}]
  %s5 = inlined_call_operand.vmem [shape: f32[512,16], index: 5, kind: output, shape index: {}]
  %s6 = sld [smem:[#allocation0]]
  $region53: #{c3_forward_pallas.10} parent=0
    _
  %s8 = ssub.s32 1, %s6
  %s9 = scalar_select 0, %s8, %s6
  loop: start=0, step=1, limit=4
  $region2: #{c3_forward_pallas.10} parent=0 // loop_pre_header
    _
  $region3: #{c3_forward_pallas.10} parent=0 // loop_header
    %s11 = sphi 0, %s15
    %p12 = scmp.ge.s32.totalorder %s11, 4
    %s21 = sphi 0, %s23
    %s24 = sphi 0, %s21
    %s25 = sphi 0, %s24
    %s41 = sphi 0, %s25
    %s45 = sphi 0, %s45
    %s47 = sphi 0, %s45
    %s48 = sphi 0, %s47
    %s62 = sphi 0, %s48
    %s66 = sphi 0, %s66
    %s68 = sphi 0, %s66
    %s69 = sphi 0, %s68
    %s83 = sphi 0, %s69
    %s87 = sphi 0, %s87
    %s89 = sphi 0, %s87
    %s90 = sphi 0, %s89
    %s104 = sphi 0, %s90
    %s110 = sphi 0, %s112
    %s113 = sphi 0, %s110
    %s114 = sphi 0, %s113
    %s130 = sphi 0, %s114
    %s136 = sphi 0, %s138
    %s139 = sphi 0, %s136
    %s140 = sphi 0, %s139
    %s156 = sphi 0, %s140
  $region4: #{c3_forward_pallas.10} parent=0 // loop_header_branch
    %14 = sbr.rel (%p12) target = $region8
  $region5: #{c3_forward_pallas.10} parent=0 // loop_body
    %s16 = ssub.s32 %s11, 1
    %s17 = ssub.s32 %s11, 2
    %s18 = sadd.s32 %s11, 1
    %s19 = ssub.s32 %s11, %s18
    %p20 = scmp.eq.s32.totalorder %s19, 0
    %s22 = sadd.s32 %s21, 1
    %s23 = scalar_select %p20, %s21, %s22
    %p26 = pneg %p20
    %p27 = scmp.eq.s32.totalorder %s11, 1
    %p28 = por %p26, %p27
    %p29 = scmp.ne.s32.totalorder %s21, %s24
    %p30 = scmp.eq.s32.totalorder %s11, 0
    %p31 = por %p29, %p30
    %p32 = scmp.ne.s32.totalorder %s21, %s24
    %p33 = scmp.eq.s32.totalorder %s16, 1
    %p34 = por %p32, %p33
    %p35 = scmp.ne.s32.totalorder %s24, %s25
    %p36 = scmp.eq.s32.totalorder %s16, 0
    %p37 = por %p35, %p36
    %p38 = scmp.ne.s32.totalorder %s24, %s25
    %p39 = scmp.eq.s32.totalorder %s17, 1
    %p40 = por %p38, %p39
    %p42 = scmp.ne.s32.totalorder %s25, %s41
    %p43 = scmp.eq.s32.totalorder %s17, 0
    %p44 = por %p42, %p43
    %s46 = sadd.s32 %s45, 1
    %p49 = scmp.eq.s32.totalorder %s11, 1
    %p50 = scmp.ne.s32.totalorder %s45, %s47
    %p51 = scmp.eq.s32.totalorder %s11, 0
    %p52 = por %p50, %p51
    %p53 = scmp.ne.s32.totalorder %s45, %s47
    %p54 = scmp.eq.s32.totalorder %s16, 1
    %p55 = por %p53, %p54
    %p56 = scmp.ne.s32.totalorder %s47, %s48
    %p57 = scmp.eq.s32.totalorder %s16, 0
    %p58 = por %p56, %p57
    %p59 = scmp.ne.s32.totalorder %s47, %s48
    %p60 = scmp.eq.s32.totalorder %s17, 1
    %p61 = por %p59, %p60
    %p63 = scmp.ne.s32.totalorder %s48, %s62
    %p64 = scmp.eq.s32.totalorder %s17, 0
    %p65 = por %p63, %p64
    %s67 = sadd.s32 %s66, 1
    %p70 = scmp.eq.s32.totalorder %s11, 1
    %p71 = scmp.ne.s32.totalorder %s66, %s68
    %p72 = scmp.eq.s32.totalorder %s11, 0
    %p73 = por %p71, %p72
    %p74 = scmp.ne.s32.totalorder %s66, %s68
    %p75 = scmp.eq.s32.totalorder %s16, 1
    %p76 = por %p74, %p75
    %p77 = scmp.ne.s32.totalorder %s68, %s69
    %p78 = scmp.eq.s32.totalorder %s16, 0
    %p79 = por %p77, %p78
    %p80 = scmp.ne.s32.totalorder %s68, %s69
    %p81 = scmp.eq.s32.totalorder %s17, 1
    %p82 = por %p80, %p81
    %p84 = scmp.ne.s32.totalorder %s69, %s83
    %p85 = scmp.eq.s32.totalorder %s17, 0
    %p86 = por %p84, %p85
    %s88 = sadd.s32 %s87, 1
    %p91 = scmp.eq.s32.totalorder %s11, 1
    %p92 = scmp.ne.s32.totalorder %s87, %s89
    %p93 = scmp.eq.s32.totalorder %s11, 0
    %p94 = por %p92, %p93
    %p95 = scmp.ne.s32.totalorder %s87, %s89
    %p96 = scmp.eq.s32.totalorder %s16, 1
    %p97 = por %p95, %p96
    %p98 = scmp.ne.s32.totalorder %s89, %s90
    %p99 = scmp.eq.s32.totalorder %s16, 0
    %p100 = por %p98, %p99
    %p101 = scmp.ne.s32.totalorder %s89, %s90
    %p102 = scmp.eq.s32.totalorder %s17, 1
    %p103 = por %p101, %p102
    %p105 = scmp.ne.s32.totalorder %s90, %s104
    %p106 = scmp.eq.s32.totalorder %s17, 0
    %p107 = por %p105, %p106
    %s108 = ssub.s32 %s11, %s18
    %p109 = scmp.eq.s32.totalorder %s108, 0
    %s111 = sadd.s32 %s110, 1
    %s112 = scalar_select %p109, %s110, %s111
    %p115 = pneg %p109
    %p116 = scmp.eq.s32.totalorder %s11, 1
    %p117 = por %p115, %p116
    %p118 = scmp.ne.s32.totalorder %s110, %s113
    %p119 = scmp.eq.s32.totalorder %s11, 0
    %p120 = por %p118, %p119
    %p121 = scmp.ne.s32.totalorder %s110, %s113
    %p122 = scmp.eq.s32.totalorder %s16, 1
    %p123 = por %p121, %p122
    %p124 = scmp.ne.s32.totalorder %s113, %s114
    %p125 = scmp.eq.s32.totalorder %s16, 0
    %p126 = por %p124, %p125
    %p127 = scmp.ne.s32.totalorder %s113, %s114
    %p128 = scmp.eq.s32.totalorder %s17, 1
    %p129 = por %p127, %p128
    %p131 = scmp.ne.s32.totalorder %s114, %s130
    %p132 = scmp.eq.s32.totalorder %s17, 0
    %p133 = por %p131, %p132
    %s134 = ssub.s32 %s11, %s18
    %p135 = scmp.eq.s32.totalorder %s134, 0
    %s137 = sadd.s32 %s136, 1
    %s138 = scalar_select %p135, %s136, %s137
    %p141 = pneg %p135
    %p142 = scmp.eq.s32.totalorder %s11, 1
    %p143 = por %p141, %p142
    %p144 = scmp.ne.s32.totalorder %s136, %s139
    %p145 = scmp.eq.s32.totalorder %s11, 0
    %p146 = por %p144, %p145
    %p147 = scmp.ne.s32.totalorder %s136, %s139
    %p148 = scmp.eq.s32.totalorder %s16, 1
    %p149 = por %p147, %p148
    %p150 = scmp.ne.s32.totalorder %s139, %s140
    %p151 = scmp.eq.s32.totalorder %s16, 0
    %p152 = por %p150, %p151
    %p153 = scmp.ne.s32.totalorder %s139, %s140
    %p154 = scmp.eq.s32.totalorder %s17, 1
    %p155 = por %p153, %p154
    %p157 = scmp.ne.s32.totalorder %s140, %s156
    %p158 = scmp.eq.s32.totalorder %s17, 0
    %p159 = por %p157, %p158
    %p160 = scmp.le.s32.totalorder 1, %s11
    %p161 = scmp.lt.s32.totalorder %s11, 3
    %p162 = pnand %p160, %p161
    %p163 = pneg %p162
    // Predicated region
    $region9: #{c3_forward_pallas.10} parent=5 // pred_check
      _
    $region10: #{c3_forward_pallas.10} parent=5 // pred_check_branch
      %165 = sbr.rel (%p162) target = $region12
    $region11: #{c3_forward_pallas.10} parent=5 // pred_region
      %s166 = ssub.s32 %s11, 1
      // Predicated region
      $region13: #{c3_forward_pallas.10} parent=11 // pred_check
        %p167 = pneg %p58
      $region14: #{c3_forward_pallas.10} parent=11 // pred_check_branch
        %169 = sbr.rel (%p167) target = $region16
      $region15: #{c3_forward_pallas.10} parent=11 // pred_region
        _
      $region16: #{c3_forward_pallas.10} parent=11 // pred_fallthru
        _
      // Predicated region
      $region17: #{c3_forward_pallas.10} parent=11 // pred_check
        %p170 = pneg %p79
      $region18: #{c3_forward_pallas.10} parent=11 // pred_check_branch
        %172 = sbr.rel (%p170) target = $region20
      $region19: #{c3_forward_pallas.10} parent=11 // pred_region
        _
      $region20: #{c3_forward_pallas.10} parent=11 // pred_fallthru
        _
      // Predicated region
      $region21: #{c3_forward_pallas.10} parent=11 // pred_check
        %p173 = pneg %p100
      $region22: #{c3_forward_pallas.10} parent=11 // pred_check_branch
        %175 = sbr.rel (%p173) target = $region24
      $region23: #{c3_forward_pallas.10} parent=11 // pred_region
        _
      $region24: #{c3_forward_pallas.10} parent=11 // pred_fallthru
        _
    $region12: #{c3_forward_pallas.10} parent=5 // pred_fallthru
      _
    %p176 = scmp.lt.s32.totalorder %s11, 2
    // Predicated region
    $region25: #{c3_forward_pallas.10} parent=5 // pred_check
      %p177 = pneg %p176
    $region26: #{c3_forward_pallas.10} parent=5 // pred_check_branch
      %179 = sbr.rel (%p177) target = $region28
    $region27: #{c3_forward_pallas.10} parent=5 // pred_region
      // Predicated region
      $region29: #{c3_forward_pallas.10} parent=27 // pred_check
        %p180 = pneg %p31
      $region30: #{c3_forward_pallas.10} parent=27 // pred_check_branch
        %182 = sbr.rel (%p180) target = $region32
      $region31: #{c3_forward_pallas.10} parent=27 // pred_region
        %s183 = smul.u32 32, %s11
        %p184 = scmp.lt.s32.totalorder %s183, 63
        %s185 = scalar_select %p184, %s183, 63
        %s186 = smul.addr %s185, 2
        %s187 = smul.addr %s186, 8
        %s188 = scalar_lea.vmem %s0, %s187
        %s189 = smul.u32 32, %s11
      $region32: #{c3_forward_pallas.10} parent=27 // pred_fallthru
        _
      // Predicated region
      $region33: #{c3_forward_pallas.10} parent=27 // pred_check
        %p190 = pneg %p120
      $region34: #{c3_forward_pallas.10} parent=27 // pred_check_branch
        %192 = sbr.rel (%p190) target = $region36
      $region35: #{c3_forward_pallas.10} parent=27 // pred_region
        %s193 = smul.u32 32, %s11
        %p194 = scmp.lt.s32.totalorder %s193, 63
        %s195 = scalar_select %p194, %s193, 63
        %s196 = smul.addr %s195, 8
        %s197 = scalar_lea.vmem %s4, %s196
        %s198 = smul.u32 32, %s11
      $region36: #{c3_forward_pallas.10} parent=27 // pred_fallthru
        _
    $region28: #{c3_forward_pallas.10} parent=5 // pred_fallthru
      _
    %p199 = scmp.le.s32.totalorder 1, %s11
    %p200 = scmp.lt.s32.totalorder %s11, 3
    %p201 = pnand %p199, %p200
    %p202 = pneg %p201
    // Predicated region
    $region37: #{c3_forward_pallas.10} parent=5 // pred_check
      _
    $region38: #{c3_forward_pallas.10} parent=5 // pred_check_branch
      %204 = sbr.rel (%p201) target = $region40
    $region39: #{c3_forward_pallas.10} parent=5 // pred_region
      %s205 = ssub.s32 %s11, 1
      %s206 = smul.u32 32, %s16
      %p207 = scmp.lt.s32.totalorder %s206, 63
      %s208 = scalar_select %p207, %s206, 63
      %s209 = smul.addr %s208, 2
      %s210 = smul.addr %s209, 8
      %s211 = scalar_lea.vmem %s0, %s210
      %p212 = pneg %p37
      %p213 = pneg %p34
      %p214 = pneg %p58
      %p215 = pneg %p55
      %p216 = pneg %p79
      %p217 = pneg %p76
      %p218 = pneg %p100
      %p219 = pneg %p97
      %s220 = smul.u32 32, %s16
      %p221 = scmp.lt.s32.totalorder %s220, 63
      %s222 = scalar_select %p221, %s220, 63
      %s223 = smul.addr %s222, 8
      %s224 = scalar_lea.vmem %s4, %s223
      %p225 = pneg %p126
      %p226 = pneg %p123
      %p227 = pneg %p152
      %p228 = pneg %p149
      %s229 = smul.u32 32, %s16
      %p230 = scmp.lt.s32.totalorder %s229, 63
      %s231 = scalar_select %p230, %s229, 63
      %s232 = smul.addr %s231, 8
      %s233 = scalar_lea.vmem %s5, %s232
      %s234 = smul.u32 32, %s16
      %p235 = scmp.lt.s32.totalorder %s234, 63
      %s236 = scalar_select %p235, %s234, 63
      %s237 = smul.addr %s236, 2
      %s238 = smul.addr %s237, 8
      %s239 = scalar_lea.vmem %s0, %s238
      %s240 = smul.u32 32, %s16
      %s241 = smul.u32 32, %s16
      %p242 = scmp.lt.s32.totalorder %s241, 63
      %s243 = scalar_select %p242, %s241, 63
      %s244 = smul.addr %s243, 8
      %s245 = scalar_lea.vmem %s4, %s244
      %s246 = smul.u32 32, %s16
      %s247 = smul.u32 32, %s16
      %p248 = scmp.lt.s32.totalorder %s247, 63
      %s249 = scalar_select %p248, %s247, 63
      %s250 = smul.addr %s249, 8
      %s251 = scalar_lea.vmem %s5, %s250
      %s252 = smul.u32 32, %s16
      %v253 = vld [vmem:[%s239] sm:$0xff]
      %v254 = vld [vmem:[%s239 + $0x8] sm:$0xff]
      %v255 = vld [vmem:[%s239 + $0x10] sm:$0xff]
      %v256 = vld [vmem:[%s239 + $0x18] sm:$0xff]
      %v257 = vld [vmem:[%s239 + $0x20] sm:$0xff]
      %v258 = vld [vmem:[%s239 + $0x28] sm:$0xff]
      %v259 = vld [vmem:[%s239 + $0x30] sm:$0xff]
      %v260 = vld [vmem:[%s239 + $0x38] sm:$0xff]
      %v261 = vld [vmem:[%s239 + $0x40] sm:$0xff]
      %v262 = vld [vmem:[%s239 + $0x48] sm:$0xff]
      %v263 = vld [vmem:[%s239 + $0x50] sm:$0xff]
      %v264 = vld [vmem:[%s239 + $0x58] sm:$0xff]
      %v265 = vld [vmem:[%s239 + $0x60] sm:$0xff]
      %v266 = vld [vmem:[%s239 + $0x68] sm:$0xff]
      %v267 = vld [vmem:[%s239 + $0x70] sm:$0xff]
      %v268 = vld [vmem:[%s239 + $0x78] sm:$0xff]
      %v269 = vld [vmem:[%s239 + $0x80] sm:$0xff]
      %v270 = vld [vmem:[%s239 + $0x88] sm:$0xff]
      %v271 = vld [vmem:[%s239 + $0x90] sm:$0xff]
      %v272 = vld [vmem:[%s239 + $0x98] sm:$0xff]
      %v273 = vld [vmem:[%s239 + $0xa0] sm:$0xff]
      %v274 = vld [vmem:[%s239 + $0xa8] sm:$0xff]
      %v275 = vld [vmem:[%s239 + $0xb0] sm:$0xff]
      %v276 = vld [vmem:[%s239 + $0xb8] sm:$0xff]
      %v277 = vld [vmem:[%s239 + $0xc0] sm:$0xff]
      %v278 = vld [vmem:[%s239 + $0xc8] sm:$0xff]
      %v279 = vld [vmem:[%s239 + $0xd0] sm:$0xff]
      %v280 = vld [vmem:[%s239 + $0xd8] sm:$0xff]
      %v281 = vld [vmem:[%s239 + $0xe0] sm:$0xff]
      %v282 = vld [vmem:[%s239 + $0xe8] sm:$0xff]
      %v283 = vld [vmem:[%s239 + $0xf0] sm:$0xff]
      %v284 = vld [vmem:[%s239 + $0xf8] sm:$0xff]
      %v285 = vld [vmem:[%s239 + $0x100] sm:$0xff]
      %v286 = vld [vmem:[%s239 + $0x108] sm:$0xff]
      %v287 = vld [vmem:[%s239 + $0x110] sm:$0xff]
      %v288 = vld [vmem:[%s239 + $0x118] sm:$0xff]
      %v289 = vld [vmem:[%s239 + $0x120] sm:$0xff]
      %v290 = vld [vmem:[%s239 + $0x128] sm:$0xff]
      %v291 = vld [vmem:[%s239 + $0x130] sm:$0xff]
      %v292 = vld [vmem:[%s239 + $0x138] sm:$0xff]
      %v293 = vld [vmem:[%s239 + $0x140] sm:$0xff]
      %v294 = vld [vmem:[%s239 + $0x148] sm:$0xff]
      %v295 = vld [vmem:[%s239 + $0x150] sm:$0xff]
      %v296 = vld [vmem:[%s239 + $0x158] sm:$0xff]
      %v297 = vld [vmem:[%s239 + $0x160] sm:$0xff]
      %v298 = vld [vmem:[%s239 + $0x168] sm:$0xff]
      %v299 = vld [vmem:[%s239 + $0x170] sm:$0xff]
      %v300 = vld [vmem:[%s239 + $0x178] sm:$0xff]
      %v301 = vld [vmem:[%s239 + $0x180] sm:$0xff]
      %v302 = vld [vmem:[%s239 + $0x188] sm:$0xff]
      %v303 = vld [vmem:[%s239 + $0x190] sm:$0xff]
      %v304 = vld [vmem:[%s239 + $0x198] sm:$0xff]
      %v305 = vld [vmem:[%s239 + $0x1a0] sm:$0xff]
      %v306 = vld [vmem:[%s239 + $0x1a8] sm:$0xff]
      %v307 = vld [vmem:[%s239 + $0x1b0] sm:$0xff]
      %v308 = vld [vmem:[%s239 + $0x1b8] sm:$0xff]
      %v309 = vld [vmem:[%s239 + $0x1c0] sm:$0xff]
      %v310 = vld [vmem:[%s239 + $0x1c8] sm:$0xff]
      %v311 = vld [vmem:[%s239 + $0x1d0] sm:$0xff]
      %v312 = vld [vmem:[%s239 + $0x1d8] sm:$0xff]
      %v313 = vld [vmem:[%s239 + $0x1e0] sm:$0xff]
      %v314 = vld [vmem:[%s239 + $0x1e8] sm:$0xff]
      %v315 = vld [vmem:[%s239 + $0x1f0] sm:$0xff]
      %v316 = vld [vmem:[%s239 + $0x1f8] sm:$0xff]
      %v317 = vld [vmem:[%s1] sm:$0xff]
      %v318 = vld [vmem:[%s1 + $0x8] sm:$0xff]
      %v319 = vld [vmem:[%s1 + $0x10] sm:$0xff]
      %v320 = vld [vmem:[%s1 + $0x18] sm:$0xff]
      %v321 = vld [vmem:[%s1 + $0x20] sm:$0xff]
      %v322 = vld [vmem:[%s1 + $0x28] sm:$0xff]
      %v323 = vld [vmem:[%s1 + $0x30] sm:$0xff]
      %v324 = vld [vmem:[%s1 + $0x38] sm:$0xff]
      %v325 = vld [vmem:[%s1 + $0x40] sm:$0xff]
      %v326 = vld [vmem:[%s1 + $0x48] sm:$0xff]
      %v327 = vld [vmem:[%s1 + $0x50] sm:$0xff]
      %v328 = vld [vmem:[%s1 + $0x58] sm:$0xff]
      %v329 = vld [vmem:[%s1 + $0x60] sm:$0xff]
      %v330 = vld [vmem:[%s1 + $0x68] sm:$0xff]
      %v331 = vld [vmem:[%s1 + $0x70] sm:$0xff]
      %v332 = vld [vmem:[%s1 + $0x78] sm:$0xff]
      %v333 = vld [vmem:[%s1 + $0x80] sm:$0xff]
      %v334 = vld [vmem:[%s1 + $0x88] sm:$0xff]
      %vm335 = vcmask 130048
      %v337 = vsel %vm335, %v254, 0
      %v340 = vsel %vm335, %v256, 0
      %v343 = vsel %vm335, %v258, 0
      %v346 = vsel %vm335, %v260, 0
      %v349 = vsel %vm335, %v262, 0
      %v352 = vsel %vm335, %v264, 0
      %v355 = vsel %vm335, %v266, 0
      %v358 = vsel %vm335, %v268, 0
      %v361 = vsel %vm335, %v270, 0
      %v364 = vsel %vm335, %v272, 0
      %v367 = vsel %vm335, %v274, 0
      %v370 = vsel %vm335, %v276, 0
      %v373 = vsel %vm335, %v278, 0
      %v376 = vsel %vm335, %v280, 0
      %v379 = vsel %vm335, %v282, 0
      %v382 = vsel %vm335, %v284, 0
      %v385 = vsel %vm335, %v286, 0
      %v388 = vsel %vm335, %v288, 0
      %v391 = vsel %vm335, %v290, 0
      %v394 = vsel %vm335, %v292, 0
      %v397 = vsel %vm335, %v294, 0
      %v400 = vsel %vm335, %v296, 0
      %v403 = vsel %vm335, %v298, 0
      %v406 = vsel %vm335, %v300, 0
      %v409 = vsel %vm335, %v302, 0
      %v412 = vsel %vm335, %v304, 0
      %v415 = vsel %vm335, %v306, 0
      %v418 = vsel %vm335, %v308, 0
      %v421 = vsel %vm335, %v310, 0
      %v424 = vsel %vm335, %v312, 0
      %v427 = vsel %vm335, %v314, 0
      %v430 = vsel %vm335, %v316, 0
      %432 = vmatpush.msra.mxu0 %v332
      %433 = vmatpush.msra.mxu0 %v331
      %434 = vmatpush.msra.mxu0 %v330
      %435 = vmatpush.msra.mxu0 %v329
      %436 = vmatpush.msra.mxu0 %v328
      %437 = vmatpush.msra.mxu0 %v327
      %438 = vmatpush.msra.mxu0 %v326
      %439 = vmatpush.msra.mxu0 %v325
      %440 = vmatpush.msra.mxu0 %v324
      %441 = vmatpush.msra.mxu0 %v323
      %442 = vmatpush.msra.mxu0 %v322
      %443 = vmatpush.msra.mxu0 %v321
      %444 = vmatpush.msra.mxu0 %v320
      %445 = vmatpush.msra.mxu0 %v319
      %446 = vmatpush.msra.mxu0 %v318
      %447 = vmatpush.msra.mxu0 %v317
      %448 = vmatmul.f32.gmra.mxu0 %v253
      %v449 = vpop.f32.mrf.mxu0
      %v450 = vadd.f32 0.0, %v449
      %451 = vmatmul.f32.gmra.mxu0 %v255
      %v452 = vpop.f32.mrf.mxu0
      %v453 = vadd.f32 0.0, %v452
      %454 = vmatmul.f32.gmra.mxu0 %v257
      %v455 = vpop.f32.mrf.mxu0
      %v456 = vadd.f32 0.0, %v455
      %457 = vmatmul.f32.gmra.mxu0 %v259
      %v458 = vpop.f32.mrf.mxu0
      %v459 = vadd.f32 0.0, %v458
      %460 = vmatmul.f32.gmra.mxu0 %v261
      %v461 = vpop.f32.mrf.mxu0
      %v462 = vadd.f32 0.0, %v461
      %463 = vmatmul.f32.gmra.mxu0 %v263
      %v464 = vpop.f32.mrf.mxu0
      %v465 = vadd.f32 0.0, %v464
      %466 = vmatmul.f32.gmra.mxu0 %v265
      %v467 = vpop.f32.mrf.mxu0
      %v468 = vadd.f32 0.0, %v467
      %469 = vmatmul.f32.gmra.mxu0 %v267
      %v470 = vpop.f32.mrf.mxu0
      %v471 = vadd.f32 0.0, %v470
      %472 = vmatmul.f32.gmra.mxu0 %v269
      %v473 = vpop.f32.mrf.mxu0
      %v474 = vadd.f32 0.0, %v473
      %475 = vmatmul.f32.gmra.mxu0 %v271
      %v476 = vpop.f32.mrf.mxu0
      %v477 = vadd.f32 0.0, %v476
      %478 = vmatmul.f32.gmra.mxu0 %v273
      %v479 = vpop.f32.mrf.mxu0
      %v480 = vadd.f32 0.0, %v479
      %481 = vmatmul.f32.gmra.mxu0 %v275
      %v482 = vpop.f32.mrf.mxu0
      %v483 = vadd.f32 0.0, %v482
      %484 = vmatmul.f32.gmra.mxu0 %v277
      %v485 = vpop.f32.mrf.mxu0
      %v486 = vadd.f32 0.0, %v485
      %487 = vmatmul.f32.gmra.mxu0 %v279
      %v488 = vpop.f32.mrf.mxu0
      %v489 = vadd.f32 0.0, %v488
      %490 = vmatmul.f32.gmra.mxu0 %v281
      %v491 = vpop.f32.mrf.mxu0
      %v492 = vadd.f32 0.0, %v491
      %493 = vmatmul.f32.gmra.mxu0 %v283
      %v494 = vpop.f32.mrf.mxu0
      %v495 = vadd.f32 0.0, %v494
      %496 = vmatmul.f32.gmra.mxu0 %v285
      %v497 = vpop.f32.mrf.mxu0
      %v498 = vadd.f32 0.0, %v497
      %499 = vmatmul.f32.gmra.mxu0 %v287
      %v500 = vpop.f32.mrf.mxu0
      %v501 = vadd.f32 0.0, %v500
      %502 = vmatmul.f32.gmra.mxu0 %v289
      %v503 = vpop.f32.mrf.mxu0
      %v504 = vadd.f32 0.0, %v503
      %505 = vmatmul.f32.gmra.mxu0 %v291
      %v506 = vpop.f32.mrf.mxu0
      %v507 = vadd.f32 0.0, %v506
      %508 = vmatmul.f32.gmra.mxu0 %v293
      %v509 = vpop.f32.mrf.mxu0
      %v510 = vadd.f32 0.0, %v509
      %511 = vmatmul.f32.gmra.mxu0 %v295
      %v512 = vpop.f32.mrf.mxu0
      %v513 = vadd.f32 0.0, %v512
      %514 = vmatmul.f32.gmra.mxu0 %v297
      %v515 = vpop.f32.mrf.mxu0
      %v516 = vadd.f32 0.0, %v515
      %517 = vmatmul.f32.gmra.mxu0 %v299
      %v518 = vpop.f32.mrf.mxu0
      %v519 = vadd.f32 0.0, %v518
      %520 = vmatmul.f32.gmra.mxu0 %v301
      %v521 = vpop.f32.mrf.mxu0
      %v522 = vadd.f32 0.0, %v521
      %523 = vmatmul.f32.gmra.mxu0 %v303
      %v524 = vpop.f32.mrf.mxu0
      %v525 = vadd.f32 0.0, %v524
      %526 = vmatmul.f32.gmra.mxu0 %v305
      %v527 = vpop.f32.mrf.mxu0
      %v528 = vadd.f32 0.0, %v527
      %529 = vmatmul.f32.gmra.mxu0 %v307
      %v530 = vpop.f32.mrf.mxu0
      %v531 = vadd.f32 0.0, %v530
      %532 = vmatmul.f32.gmra.mxu0 %v309
      %v533 = vpop.f32.mrf.mxu0
      %v534 = vadd.f32 0.0, %v533
      %535 = vmatmul.f32.gmra.mxu0 %v311
      %v536 = vpop.f32.mrf.mxu0
      %v537 = vadd.f32 0.0, %v536
      %538 = vmatmul.f32.gmra.mxu0 %v313
      %v539 = vpop.f32.mrf.mxu0
      %v540 = vadd.f32 0.0, %v539
      %541 = vmatmul.f32.gmra.mxu0 %v315
      %v542 = vpop.f32.mrf.mxu0
      %v543 = vadd.f32 0.0, %v542
      %544 = vdwg.mxu0
      %545 = vmatpush.msra.mxu0 0.0
      %546 = vmatpush.msra.mxu0 0.0
      %547 = vmatpush.msra.mxu0 0.0
      %548 = vmatpush.msra.mxu0 0.0
      %549 = vmatpush.msra.mxu0 0.0
      %550 = vmatpush.msra.mxu0 0.0
      %551 = vmatpush.msra.mxu0 0.0
      %552 = vmatpush.msra.mxu0 0.0
      %553 = vmatpush.msra.mxu0 0.0
      %554 = vmatpush.msra.mxu0 0.0
      %555 = vmatpush.msra.mxu0 0.0
      %556 = vmatpush.msra.mxu0 0.0
      %557 = vmatpush.msra.mxu0 0.0
      %558 = vmatpush.msra.mxu0 0.0
      %559 = vmatpush.msra.mxu0 %v334
      %560 = vmatpush.msra.mxu0 %v333
      %561 = vmatmul.f32.gmra.mxu0 %v337
      %v562 = vpop.f32.mrf.mxu0
      %v563 = vadd.f32 %v450, %v562
      %564 = vmatmul.f32.gmra.mxu0 %v340
      %v565 = vpop.f32.mrf.mxu0
      %v566 = vadd.f32 %v453, %v565
      %567 = vmatmul.f32.gmra.mxu0 %v343
      %v568 = vpop.f32.mrf.mxu0
      %v569 = vadd.f32 %v456, %v568
      %570 = vmatmul.f32.gmra.mxu0 %v346
      %v571 = vpop.f32.mrf.mxu0
      %v572 = vadd.f32 %v459, %v571
      %573 = vmatmul.f32.gmra.mxu0 %v349
      %v574 = vpop.f32.mrf.mxu0
      %v575 = vadd.f32 %v462, %v574
      %576 = vmatmul.f32.gmra.mxu0 %v352
      %v577 = vpop.f32.mrf.mxu0
      %v578 = vadd.f32 %v465, %v577
      %579 = vmatmul.f32.gmra.mxu0 %v355
      %v580 = vpop.f32.mrf.mxu0
      %v581 = vadd.f32 %v468, %v580
      %582 = vmatmul.f32.gmra.mxu0 %v358
      %v583 = vpop.f32.mrf.mxu0
      %v584 = vadd.f32 %v471, %v583
      %585 = vmatmul.f32.gmra.mxu0 %v361
      %v586 = vpop.f32.mrf.mxu0
      %v587 = vadd.f32 %v474, %v586
      %588 = vmatmul.f32.gmra.mxu0 %v364
      %v589 = vpop.f32.mrf.mxu0
      %v590 = vadd.f32 %v477, %v589
      %591 = vmatmul.f32.gmra.mxu0 %v367
      %v592 = vpop.f32.mrf.mxu0
      %v593 = vadd.f32 %v480, %v592
      %594 = vmatmul.f32.gmra.mxu0 %v370
      %v595 = vpop.f32.mrf.mxu0
      %v596 = vadd.f32 %v483, %v595
      %597 = vmatmul.f32.gmra.mxu0 %v373
      %v598 = vpop.f32.mrf.mxu0
      %v599 = vadd.f32 %v486, %v598
      %600 = vmatmul.f32.gmra.mxu0 %v376
      %v601 = vpop.f32.mrf.mxu0
      %v602 = vadd.f32 %v489, %v601
      %603 = vmatmul.f32.gmra.mxu0 %v379
      %v604 = vpop.f32.mrf.mxu0
      %v605 = vadd.f32 %v492, %v604
      %606 = vmatmul.f32.gmra.mxu0 %v382
      %v607 = vpop.f32.mrf.mxu0
      %v608 = vadd.f32 %v495, %v607
      %609 = vmatmul.f32.gmra.mxu0 %v385
      %v610 = vpop.f32.mrf.mxu0
      %v611 = vadd.f32 %v498, %v610
      %612 = vmatmul.f32.gmra.mxu0 %v388
      %v613 = vpop.f32.mrf.mxu0
      %v614 = vadd.f32 %v501, %v613
      %615 = vmatmul.f32.gmra.mxu0 %v391
      %v616 = vpop.f32.mrf.mxu0
      %v617 = vadd.f32 %v504, %v616
      %618 = vmatmul.f32.gmra.mxu0 %v394
      %v619 = vpop.f32.mrf.mxu0
      %v620 = vadd.f32 %v507, %v619
      %621 = vmatmul.f32.gmra.mxu0 %v397
      %v622 = vpop.f32.mrf.mxu0
      %v623 = vadd.f32 %v510, %v622
      %624 = vmatmul.f32.gmra.mxu0 %v400
      %v625 = vpop.f32.mrf.mxu0
      %v626 = vadd.f32 %v513, %v625
      %627 = vmatmul.f32.gmra.mxu0 %v403
      %v628 = vpop.f32.mrf.mxu0
      %v629 = vadd.f32 %v516, %v628
      %630 = vmatmul.f32.gmra.mxu0 %v406
      %v631 = vpop.f32.mrf.mxu0
      %v632 = vadd.f32 %v519, %v631
      %633 = vmatmul.f32.gmra.mxu0 %v409
      %v634 = vpop.f32.mrf.mxu0
      %v635 = vadd.f32 %v522, %v634
      %636 = vmatmul.f32.gmra.mxu0 %v412
      %v637 = vpop.f32.mrf.mxu0
      %v638 = vadd.f32 %v525, %v637
      %639 = vmatmul.f32.gmra.mxu0 %v415
      %v640 = vpop.f32.mrf.mxu0
      %v641 = vadd.f32 %v528, %v640
      %642 = vmatmul.f32.gmra.mxu0 %v418
      %v643 = vpop.f32.mrf.mxu0
      %v644 = vadd.f32 %v531, %v643
      %645 = vmatmul.f32.gmra.mxu0 %v421
      %v646 = vpop.f32.mrf.mxu0
      %v647 = vadd.f32 %v534, %v646
      %648 = vmatmul.f32.gmra.mxu0 %v424
      %v649 = vpop.f32.mrf.mxu0
      %v650 = vadd.f32 %v537, %v649
      %651 = vmatmul.f32.gmra.mxu0 %v427
      %v652 = vpop.f32.mrf.mxu0
      %v653 = vadd.f32 %v540, %v652
      %654 = vmatmul.f32.gmra.mxu0 %v430
      %v655 = vpop.f32.mrf.mxu0
      %v656 = vadd.f32 %v543, %v655
      %657 = vdwg.mxu0
      %v658 = vld [vmem:[%s2] sm:$0x1]
      %v660 = vperm.slane %v658, 0
      %v662 = vmul.f32 %v563, %v660
      %v663 = vmul.f32 %v566, %v660
      %v664 = vmul.f32 %v569, %v660
      %v665 = vmul.f32 %v572, %v660
      %v666 = vmul.f32 %v575, %v660
      %v667 = vmul.f32 %v578, %v660
      %v668 = vmul.f32 %v581, %v660
      %v669 = vmul.f32 %v584, %v660
      %v670 = vmul.f32 %v587, %v660
      %v671 = vmul.f32 %v590, %v660
      %v672 = vmul.f32 %v593, %v660
      %v673 = vmul.f32 %v596, %v660
      %v674 = vmul.f32 %v599, %v660
      %v675 = vmul.f32 %v602, %v660
      %v676 = vmul.f32 %v605, %v660
      %v677 = vmul.f32 %v608, %v660
      %v678 = vmul.f32 %v611, %v660
      %v679 = vmul.f32 %v614, %v660
      %v680 = vmul.f32 %v617, %v660
      %v681 = vmul.f32 %v620, %v660
      %v682 = vmul.f32 %v623, %v660
      %v683 = vmul.f32 %v626, %v660
      %v684 = vmul.f32 %v629, %v660
      %v685 = vmul.f32 %v632, %v660
      %v686 = vmul.f32 %v635, %v660
      %v687 = vmul.f32 %v638, %v660
      %v688 = vmul.f32 %v641, %v660
      %v689 = vmul.f32 %v644, %v660
      %v690 = vmul.f32 %v647, %v660
      %v691 = vmul.f32 %v650, %v660
      %v692 = vmul.f32 %v653, %v660
      %v693 = vmul.f32 %v656, %v660
      %v694 = vld [vmem:[%s3] sm:$0x1]
      %v696 = vperm.slane %v694, 0
      %v698 = vadd.f32 %v662, %v696
      %v699 = vadd.f32 %v663, %v696
      %v700 = vadd.f32 %v664, %v696
      %v701 = vadd.f32 %v665, %v696
      %v702 = vadd.f32 %v666, %v696
      %v703 = vadd.f32 %v667, %v696
      %v704 = vadd.f32 %v668, %v696
      %v705 = vadd.f32 %v669, %v696
      %v706 = vadd.f32 %v670, %v696
      %v707 = vadd.f32 %v671, %v696
      %v708 = vadd.f32 %v672, %v696
      %v709 = vadd.f32 %v673, %v696
      %v710 = vadd.f32 %v674, %v696
      %v711 = vadd.f32 %v675, %v696
      %v712 = vadd.f32 %v676, %v696
      %v713 = vadd.f32 %v677, %v696
      %v714 = vadd.f32 %v678, %v696
      %v715 = vadd.f32 %v679, %v696
      %v716 = vadd.f32 %v680, %v696
      %v717 = vadd.f32 %v681, %v696
      %v718 = vadd.f32 %v682, %v696
      %v719 = vadd.f32 %v683, %v696
      %v720 = vadd.f32 %v684, %v696
      %v721 = vadd.f32 %v685, %v696
      %v722 = vadd.f32 %v686, %v696
      %v723 = vadd.f32 %v687, %v696
      %v724 = vadd.f32 %v688, %v696
      %v725 = vadd.f32 %v689, %v696
      %v726 = vadd.f32 %v690, %v696
      %v727 = vadd.f32 %v691, %v696
      %v728 = vadd.f32 %v692, %v696
      %v729 = vadd.f32 %v693, %v696
      %v730 = vxor.u32 %v698, 2147483648
      %v731 = vxor.u32 %v699, 2147483648
      %v732 = vxor.u32 %v700, 2147483648
      %v733 = vxor.u32 %v701, 2147483648
      %v734 = vxor.u32 %v702, 2147483648
      %v735 = vxor.u32 %v703, 2147483648
      %v736 = vxor.u32 %v704, 2147483648
      %v737 = vxor.u32 %v705, 2147483648
      %v738 = vxor.u32 %v706, 2147483648
      %v739 = vxor.u32 %v707, 2147483648
      %v740 = vxor.u32 %v708, 2147483648
      %v741 = vxor.u32 %v709, 2147483648
      %v742 = vxor.u32 %v710, 2147483648
      %v743 = vxor.u32 %v711, 2147483648
      %v744 = vxor.u32 %v712, 2147483648
      %v745 = vxor.u32 %v713, 2147483648
      %v746 = vxor.u32 %v714, 2147483648
      %v747 = vxor.u32 %v715, 2147483648
      %v748 = vxor.u32 %v716, 2147483648
      %v749 = vxor.u32 %v717, 2147483648
      %v750 = vxor.u32 %v718, 2147483648
      %v751 = vxor.u32 %v719, 2147483648
      %v752 = vxor.u32 %v720, 2147483648
      %v753 = vxor.u32 %v721, 2147483648
      %v754 = vxor.u32 %v722, 2147483648
      %v755 = vxor.u32 %v723, 2147483648
      %v756 = vxor.u32 %v724, 2147483648
      %v757 = vxor.u32 %v725, 2147483648
      %v758 = vxor.u32 %v726, 2147483648
      %v759 = vxor.u32 %v727, 2147483648
      %v760 = vxor.u32 %v728, 2147483648
      %v761 = vxor.u32 %v729, 2147483648
      %v762 = vmul.f32 %v730, 1.442695
      %v763 = vpow.pop %v762
      %v764 = vmul.f32 %v731, 1.442695
      %v765 = vpow.pop %v764
      %v766 = vmul.f32 %v732, 1.442695
      %v767 = vpow.pop %v766
      %v768 = vmul.f32 %v733, 1.442695
      %v769 = vpow.pop %v768
      %v770 = vmul.f32 %v734, 1.442695
      %v771 = vpow.pop %v770
      %v772 = vmul.f32 %v735, 1.442695
      %v773 = vpow.pop %v772
      %v774 = vmul.f32 %v736, 1.442695
      %v775 = vpow.pop %v774
      %v776 = vmul.f32 %v737, 1.442695
      %v777 = vpow.pop %v776
      %v778 = vmul.f32 %v738, 1.442695
      %v779 = vpow.pop %v778
      %v780 = vmul.f32 %v739, 1.442695
      %v781 = vpow.pop %v780
      %v782 = vmul.f32 %v740, 1.442695
      %v783 = vpow.pop %v782
      %v784 = vmul.f32 %v741, 1.442695
      %v785 = vpow.pop %v784
      %v786 = vmul.f32 %v742, 1.442695
      %v787 = vpow.pop %v786
      %v788 = vmul.f32 %v743, 1.442695
      %v789 = vpow.pop %v788
      %v790 = vmul.f32 %v744, 1.442695
      %v791 = vpow.pop %v790
      %v792 = vmul.f32 %v745, 1.442695
      %v793 = vpow.pop %v792
      %v794 = vmul.f32 %v746, 1.442695
      %v795 = vpow.pop %v794
      %v796 = vmul.f32 %v747, 1.442695
      %v797 = vpow.pop %v796
      %v798 = vmul.f32 %v748, 1.442695
      %v799 = vpow.pop %v798
      %v800 = vmul.f32 %v749, 1.442695
      %v801 = vpow.pop %v800
      %v802 = vmul.f32 %v750, 1.442695
      %v803 = vpow.pop %v802
      %v804 = vmul.f32 %v751, 1.442695
      %v805 = vpow.pop %v804
      %v806 = vmul.f32 %v752, 1.442695
      %v807 = vpow.pop %v806
      %v808 = vmul.f32 %v753, 1.442695
      %v809 = vpow.pop %v808
      %v810 = vmul.f32 %v754, 1.442695
      %v811 = vpow.pop %v810
      %v812 = vmul.f32 %v755, 1.442695
      %v813 = vpow.pop %v812
      %v814 = vmul.f32 %v756, 1.442695
      %v815 = vpow.pop %v814
      %v816 = vmul.f32 %v757, 1.442695
      %v817 = vpow.pop %v816
      %v818 = vmul.f32 %v758, 1.442695
      %v819 = vpow.pop %v818
      %v820 = vmul.f32 %v759, 1.442695
      %v821 = vpow.pop %v820
      %v822 = vmul.f32 %v760, 1.442695
      %v823 = vpow.pop %v822
      %v824 = vmul.f32 %v761, 1.442695
      %v825 = vpow.pop %v824
      %v826 = vadd.f32 %v763, 1.0
      %v827 = vadd.f32 %v765, 1.0
      %v828 = vadd.f32 %v767, 1.0
      %v829 = vadd.f32 %v769, 1.0
      %v830 = vadd.f32 %v771, 1.0
      %v831 = vadd.f32 %v773, 1.0
      %v832 = vadd.f32 %v775, 1.0
      %v833 = vadd.f32 %v777, 1.0
      %v834 = vadd.f32 %v779, 1.0
      %v835 = vadd.f32 %v781, 1.0
      %v836 = vadd.f32 %v783, 1.0
      %v837 = vadd.f32 %v785, 1.0
      %v838 = vadd.f32 %v787, 1.0
      %v839 = vadd.f32 %v789, 1.0
      %v840 = vadd.f32 %v791, 1.0
      %v841 = vadd.f32 %v793, 1.0
      %v842 = vadd.f32 %v795, 1.0
      %v843 = vadd.f32 %v797, 1.0
      %v844 = vadd.f32 %v799, 1.0
      %v845 = vadd.f32 %v801, 1.0
      %v846 = vadd.f32 %v803, 1.0
      %v847 = vadd.f32 %v805, 1.0
      %v848 = vadd.f32 %v807, 1.0
      %v849 = vadd.f32 %v809, 1.0
      %v850 = vadd.f32 %v811, 1.0
      %v851 = vadd.f32 %v813, 1.0
      %v852 = vadd.f32 %v815, 1.0
      %v853 = vadd.f32 %v817, 1.0
      %v854 = vadd.f32 %v819, 1.0
      %v855 = vadd.f32 %v821, 1.0
      %v856 = vadd.f32 %v823, 1.0
      %v857 = vadd.f32 %v825, 1.0
      %v858 = vrcp.pop %v826
      %v859 = vmul.f32 %v826, %v858
      %v860 = vsub.f32 1.0, %v859
      %v861 = vmul.f32 %v858, %v860
      %v862 = vadd.f32 %v858, %v861
      %vm863 = vweird.f32 %v826
      %vm864 = vweird.f32 %v858
      %vm865 = vmor %vm863, %vm864
      %v866 = vsel %vm865, %v858, %v862
      %v867 = vand.u32 2147483647, %v826
      %vm868 = vcmp.eq.f32.partialorder %v867, 8.507059e+37
      %v869 = vand.u32 %v826, 2147483648
      %v870 = vor.u32 1.1754944e-38, %v869
      %v871 = vsel %vm868, %v870, %v866
      %v872 = vmul.f32 1.0, %v871
      %v873 = vrcp.pop %v827
      %v874 = vmul.f32 %v827, %v873
      %v875 = vsub.f32 1.0, %v874
      %v876 = vmul.f32 %v873, %v875
      %v877 = vadd.f32 %v873, %v876
      %vm878 = vweird.f32 %v827
      %vm879 = vweird.f32 %v873
      %vm880 = vmor %vm878, %vm879
      %v881 = vsel %vm880, %v873, %v877
      %v882 = vand.u32 2147483647, %v827
      %vm883 = vcmp.eq.f32.partialorder %v882, 8.507059e+37
      %v884 = vand.u32 %v827, 2147483648
      %v885 = vor.u32 1.1754944e-38, %v884
      %v886 = vsel %vm883, %v885, %v881
      %v887 = vmul.f32 1.0, %v886
      %v888 = vrcp.pop %v828
      %v889 = vmul.f32 %v828, %v888
      %v890 = vsub.f32 1.0, %v889
      %v891 = vmul.f32 %v888, %v890
      %v892 = vadd.f32 %v888, %v891
      %vm893 = vweird.f32 %v828
      %vm894 = vweird.f32 %v888
      %vm895 = vmor %vm893, %vm894
      %v896 = vsel %vm895, %v888, %v892
      %v897 = vand.u32 2147483647, %v828
      %vm898 = vcmp.eq.f32.partialorder %v897, 8.507059e+37
      %v899 = vand.u32 %v828, 2147483648
      %v900 = vor.u32 1.1754944e-38, %v899
      %v901 = vsel %vm898, %v900, %v896
      %v902 = vmul.f32 1.0, %v901
      %v903 = vrcp.pop %v829
      %v904 = vmul.f32 %v829, %v903
      %v905 = vsub.f32 1.0, %v904
      %v906 = vmul.f32 %v903, %v905
      %v907 = vadd.f32 %v903, %v906
      %vm908 = vweird.f32 %v829
      %vm909 = vweird.f32 %v903
      %vm910 = vmor %vm908, %vm909
      %v911 = vsel %vm910, %v903, %v907
      %v912 = vand.u32 2147483647, %v829
      %vm913 = vcmp.eq.f32.partialorder %v912, 8.507059e+37
      %v914 = vand.u32 %v829, 2147483648
      %v915 = vor.u32 1.1754944e-38, %v914
      %v916 = vsel %vm913, %v915, %v911
      %v917 = vmul.f32 1.0, %v916
      %v918 = vrcp.pop %v830
      %v919 = vmul.f32 %v830, %v918
      %v920 = vsub.f32 1.0, %v919
      %v921 = vmul.f32 %v918, %v920
      %v922 = vadd.f32 %v918, %v921
      %vm923 = vweird.f32 %v830
      %vm924 = vweird.f32 %v918
      %vm925 = vmor %vm923, %vm924
      %v926 = vsel %vm925, %v918, %v922
      %v927 = vand.u32 2147483647, %v830
      %vm928 = vcmp.eq.f32.partialorder %v927, 8.507059e+37
      %v929 = vand.u32 %v830, 2147483648
      %v930 = vor.u32 1.1754944e-38, %v929
      %v931 = vsel %vm928, %v930, %v926
      %v932 = vmul.f32 1.0, %v931
      %v933 = vrcp.pop %v831
      %v934 = vmul.f32 %v831, %v933
      %v935 = vsub.f32 1.0, %v934
      %v936 = vmul.f32 %v933, %v935
      %v937 = vadd.f32 %v933, %v936
      %vm938 = vweird.f32 %v831
      %vm939 = vweird.f32 %v933
      %vm940 = vmor %vm938, %vm939
      %v941 = vsel %vm940, %v933, %v937
      %v942 = vand.u32 2147483647, %v831
      %vm943 = vcmp.eq.f32.partialorder %v942, 8.507059e+37
      %v944 = vand.u32 %v831, 2147483648
      %v945 = vor.u32 1.1754944e-38, %v944
      %v946 = vsel %vm943, %v945, %v941
      %v947 = vmul.f32 1.0, %v946
      %v948 = vrcp.pop %v832
      %v949 = vmul.f32 %v832, %v948
      %v950 = vsub.f32 1.0, %v949
      %v951 = vmul.f32 %v948, %v950
      %v952 = vadd.f32 %v948, %v951
      %vm953 = vweird.f32 %v832
      %vm954 = vweird.f32 %v948
      %vm955 = vmor %vm953, %vm954
      %v956 = vsel %vm955, %v948, %v952
      %v957 = vand.u32 2147483647, %v832
      %vm958 = vcmp.eq.f32.partialorder %v957, 8.507059e+37
      %v959 = vand.u32 %v832, 2147483648
      %v960 = vor.u32 1.1754944e-38, %v959
      %v961 = vsel %vm958, %v960, %v956
      %v962 = vmul.f32 1.0, %v961
      %v963 = vrcp.pop %v833
      %v964 = vmul.f32 %v833, %v963
      %v965 = vsub.f32 1.0, %v964
      %v966 = vmul.f32 %v963, %v965
      %v967 = vadd.f32 %v963, %v966
      %vm968 = vweird.f32 %v833
      %vm969 = vweird.f32 %v963
      %vm970 = vmor %vm968, %vm969
      %v971 = vsel %vm970, %v963, %v967
      %v972 = vand.u32 2147483647, %v833
      %vm973 = vcmp.eq.f32.partialorder %v972, 8.507059e+37
      %v974 = vand.u32 %v833, 2147483648
      %v975 = vor.u32 1.1754944e-38, %v974
      %v976 = vsel %vm973, %v975, %v971
      %v977 = vmul.f32 1.0, %v976
      %v978 = vrcp.pop %v834
      %v979 = vmul.f32 %v834, %v978
      %v980 = vsub.f32 1.0, %v979
      %v981 = vmul.f32 %v978, %v980
      %v982 = vadd.f32 %v978, %v981
      %vm983 = vweird.f32 %v834
      %vm984 = vweird.f32 %v978
      %vm985 = vmor %vm983, %vm984
      %v986 = vsel %vm985, %v978, %v982
      %v987 = vand.u32 2147483647, %v834
      %vm988 = vcmp.eq.f32.partialorder %v987, 8.507059e+37
      %v989 = vand.u32 %v834, 2147483648
      %v990 = vor.u32 1.1754944e-38, %v989
      %v991 = vsel %vm988, %v990, %v986
      %v992 = vmul.f32 1.0, %v991
      %v993 = vrcp.pop %v835
      %v994 = vmul.f32 %v835, %v993
      %v995 = vsub.f32 1.0, %v994
      %v996 = vmul.f32 %v993, %v995
      %v997 = vadd.f32 %v993, %v996
      %vm998 = vweird.f32 %v835
      %vm999 = vweird.f32 %v993
      %vm1000 = vmor %vm998, %vm999
      %v1001 = vsel %vm1000, %v993, %v997
      %v1002 = vand.u32 2147483647, %v835
      %vm1003 = vcmp.eq.f32.partialorder %v1002, 8.507059e+37
      %v1004 = vand.u32 %v835, 2147483648
      %v1005 = vor.u32 1.1754944e-38, %v1004
      %v1006 = vsel %vm1003, %v1005, %v1001
      %v1007 = vmul.f32 1.0, %v1006
      %v1008 = vrcp.pop %v836
      %v1009 = vmul.f32 %v836, %v1008
      %v1010 = vsub.f32 1.0, %v1009
      %v1011 = vmul.f32 %v1008, %v1010
      %v1012 = vadd.f32 %v1008, %v1011
      %vm1013 = vweird.f32 %v836
      %vm1014 = vweird.f32 %v1008
      %vm1015 = vmor %vm1013, %vm1014
      %v1016 = vsel %vm1015, %v1008, %v1012
      %v1017 = vand.u32 2147483647, %v836
      %vm1018 = vcmp.eq.f32.partialorder %v1017, 8.507059e+37
      %v1019 = vand.u32 %v836, 2147483648
      %v1020 = vor.u32 1.1754944e-38, %v1019
      %v1021 = vsel %vm1018, %v1020, %v1016
      %v1022 = vmul.f32 1.0, %v1021
      %v1023 = vrcp.pop %v837
      %v1024 = vmul.f32 %v837, %v1023
      %v1025 = vsub.f32 1.0, %v1024
      %v1026 = vmul.f32 %v1023, %v1025
      %v1027 = vadd.f32 %v1023, %v1026
      %vm1028 = vweird.f32 %v837
      %vm1029 = vweird.f32 %v1023
      %vm1030 = vmor %vm1028, %vm1029
      %v1031 = vsel %vm1030, %v1023, %v1027
      %v1032 = vand.u32 2147483647, %v837
      %vm1033 = vcmp.eq.f32.partialorder %v1032, 8.507059e+37
      %v1034 = vand.u32 %v837, 2147483648
      %v1035 = vor.u32 1.1754944e-38, %v1034
      %v1036 = vsel %vm1033, %v1035, %v1031
      %v1037 = vmul.f32 1.0, %v1036
      %v1038 = vrcp.pop %v838
      %v1039 = vmul.f32 %v838, %v1038
      %v1040 = vsub.f32 1.0, %v1039
      %v1041 = vmul.f32 %v1038, %v1040
      %v1042 = vadd.f32 %v1038, %v1041
      %vm1043 = vweird.f32 %v838
      %vm1044 = vweird.f32 %v1038
      %vm1045 = vmor %vm1043, %vm1044
      %v1046 = vsel %vm1045, %v1038, %v1042
      %v1047 = vand.u32 2147483647, %v838
      %vm1048 = vcmp.eq.f32.partialorder %v1047, 8.507059e+37
      %v1049 = vand.u32 %v838, 2147483648
      %v1050 = vor.u32 1.1754944e-38, %v1049
      %v1051 = vsel %vm1048, %v1050, %v1046
      %v1052 = vmul.f32 1.0, %v1051
      %v1053 = vrcp.pop %v839
      %v1054 = vmul.f32 %v839, %v1053
      %v1055 = vsub.f32 1.0, %v1054
      %v1056 = vmul.f32 %v1053, %v1055
      %v1057 = vadd.f32 %v1053, %v1056
      %vm1058 = vweird.f32 %v839
      %vm1059 = vweird.f32 %v1053
      %vm1060 = vmor %vm1058, %vm1059
      %v1061 = vsel %vm1060, %v1053, %v1057
      %v1062 = vand.u32 2147483647, %v839
      %vm1063 = vcmp.eq.f32.partialorder %v1062, 8.507059e+37
      %v1064 = vand.u32 %v839, 2147483648
      %v1065 = vor.u32 1.1754944e-38, %v1064
      %v1066 = vsel %vm1063, %v1065, %v1061
      %v1067 = vmul.f32 1.0, %v1066
      %v1068 = vrcp.pop %v840
      %v1069 = vmul.f32 %v840, %v1068
      %v1070 = vsub.f32 1.0, %v1069
      %v1071 = vmul.f32 %v1068, %v1070
      %v1072 = vadd.f32 %v1068, %v1071
      %vm1073 = vweird.f32 %v840
      %vm1074 = vweird.f32 %v1068
      %vm1075 = vmor %vm1073, %vm1074
      %v1076 = vsel %vm1075, %v1068, %v1072
      %v1077 = vand.u32 2147483647, %v840
      %vm1078 = vcmp.eq.f32.partialorder %v1077, 8.507059e+37
      %v1079 = vand.u32 %v840, 2147483648
      %v1080 = vor.u32 1.1754944e-38, %v1079
      %v1081 = vsel %vm1078, %v1080, %v1076
      %v1082 = vmul.f32 1.0, %v1081
      %v1083 = vrcp.pop %v841
      %v1084 = vmul.f32 %v841, %v1083
      %v1085 = vsub.f32 1.0, %v1084
      %v1086 = vmul.f32 %v1083, %v1085
      %v1087 = vadd.f32 %v1083, %v1086
      %vm1088 = vweird.f32 %v841
      %vm1089 = vweird.f32 %v1083
      %vm1090 = vmor %vm1088, %vm1089
      %v1091 = vsel %vm1090, %v1083, %v1087
      %v1092 = vand.u32 2147483647, %v841
      %vm1093 = vcmp.eq.f32.partialorder %v1092, 8.507059e+37
      %v1094 = vand.u32 %v841, 2147483648
      %v1095 = vor.u32 1.1754944e-38, %v1094
      %v1096 = vsel %vm1093, %v1095, %v1091
      %v1097 = vmul.f32 1.0, %v1096
      %v1098 = vrcp.pop %v842
      %v1099 = vmul.f32 %v842, %v1098
      %v1100 = vsub.f32 1.0, %v1099
      %v1101 = vmul.f32 %v1098, %v1100
      %v1102 = vadd.f32 %v1098, %v1101
      %vm1103 = vweird.f32 %v842
      %vm1104 = vweird.f32 %v1098
      %vm1105 = vmor %vm1103, %vm1104
      %v1106 = vsel %vm1105, %v1098, %v1102
      %v1107 = vand.u32 2147483647, %v842
      %vm1108 = vcmp.eq.f32.partialorder %v1107, 8.507059e+37
      %v1109 = vand.u32 %v842, 2147483648
      %v1110 = vor.u32 1.1754944e-38, %v1109
      %v1111 = vsel %vm1108, %v1110, %v1106
      %v1112 = vmul.f32 1.0, %v1111
      %v1113 = vrcp.pop %v843
      %v1114 = vmul.f32 %v843, %v1113
      %v1115 = vsub.f32 1.0, %v1114
      %v1116 = vmul.f32 %v1113, %v1115
      %v1117 = vadd.f32 %v1113, %v1116
      %vm1118 = vweird.f32 %v843
      %vm1119 = vweird.f32 %v1113
      %vm1120 = vmor %vm1118, %vm1119
      %v1121 = vsel %vm1120, %v1113, %v1117
      %v1122 = vand.u32 2147483647, %v843
      %vm1123 = vcmp.eq.f32.partialorder %v1122, 8.507059e+37
      %v1124 = vand.u32 %v843, 2147483648
      %v1125 = vor.u32 1.1754944e-38, %v1124
      %v1126 = vsel %vm1123, %v1125, %v1121
      %v1127 = vmul.f32 1.0, %v1126
      %v1128 = vrcp.pop %v844
      %v1129 = vmul.f32 %v844, %v1128
      %v1130 = vsub.f32 1.0, %v1129
      %v1131 = vmul.f32 %v1128, %v1130
      %v1132 = vadd.f32 %v1128, %v1131
      %vm1133 = vweird.f32 %v844
      %vm1134 = vweird.f32 %v1128
      %vm1135 = vmor %vm1133, %vm1134
      %v1136 = vsel %vm1135, %v1128, %v1132
      %v1137 = vand.u32 2147483647, %v844
      %vm1138 = vcmp.eq.f32.partialorder %v1137, 8.507059e+37
      %v1139 = vand.u32 %v844, 2147483648
      %v1140 = vor.u32 1.1754944e-38, %v1139
      %v1141 = vsel %vm1138, %v1140, %v1136
      %v1142 = vmul.f32 1.0, %v1141
      %v1143 = vrcp.pop %v845
      %v1144 = vmul.f32 %v845, %v1143
      %v1145 = vsub.f32 1.0, %v1144
      %v1146 = vmul.f32 %v1143, %v1145
      %v1147 = vadd.f32 %v1143, %v1146
      %vm1148 = vweird.f32 %v845
      %vm1149 = vweird.f32 %v1143
      %vm1150 = vmor %vm1148, %vm1149
      %v1151 = vsel %vm1150, %v1143, %v1147
      %v1152 = vand.u32 2147483647, %v845
      %vm1153 = vcmp.eq.f32.partialorder %v1152, 8.507059e+37
      %v1154 = vand.u32 %v845, 2147483648
      %v1155 = vor.u32 1.1754944e-38, %v1154
      %v1156 = vsel %vm1153, %v1155, %v1151
      %v1157 = vmul.f32 1.0, %v1156
      %v1158 = vrcp.pop %v846
      %v1159 = vmul.f32 %v846, %v1158
      %v1160 = vsub.f32 1.0, %v1159
      %v1161 = vmul.f32 %v1158, %v1160
      %v1162 = vadd.f32 %v1158, %v1161
      %vm1163 = vweird.f32 %v846
      %vm1164 = vweird.f32 %v1158
      %vm1165 = vmor %vm1163, %vm1164
      %v1166 = vsel %vm1165, %v1158, %v1162
      %v1167 = vand.u32 2147483647, %v846
      %vm1168 = vcmp.eq.f32.partialorder %v1167, 8.507059e+37
      %v1169 = vand.u32 %v846, 2147483648
      %v1170 = vor.u32 1.1754944e-38, %v1169
      %v1171 = vsel %vm1168, %v1170, %v1166
      %v1172 = vmul.f32 1.0, %v1171
      %v1173 = vrcp.pop %v847
      %v1174 = vmul.f32 %v847, %v1173
      %v1175 = vsub.f32 1.0, %v1174
      %v1176 = vmul.f32 %v1173, %v1175
      %v1177 = vadd.f32 %v1173, %v1176
      %vm1178 = vweird.f32 %v847
      %vm1179 = vweird.f32 %v1173
      %vm1180 = vmor %vm1178, %vm1179
      %v1181 = vsel %vm1180, %v1173, %v1177
      %v1182 = vand.u32 2147483647, %v847
      %vm1183 = vcmp.eq.f32.partialorder %v1182, 8.507059e+37
      %v1184 = vand.u32 %v847, 2147483648
      %v1185 = vor.u32 1.1754944e-38, %v1184
      %v1186 = vsel %vm1183, %v1185, %v1181
      %v1187 = vmul.f32 1.0, %v1186
      %v1188 = vrcp.pop %v848
      %v1189 = vmul.f32 %v848, %v1188
      %v1190 = vsub.f32 1.0, %v1189
      %v1191 = vmul.f32 %v1188, %v1190
      %v1192 = vadd.f32 %v1188, %v1191
      %vm1193 = vweird.f32 %v848
      %vm1194 = vweird.f32 %v1188
      %vm1195 = vmor %vm1193, %vm1194
      %v1196 = vsel %vm1195, %v1188, %v1192
      %v1197 = vand.u32 2147483647, %v848
      %vm1198 = vcmp.eq.f32.partialorder %v1197, 8.507059e+37
      %v1199 = vand.u32 %v848, 2147483648
      %v1200 = vor.u32 1.1754944e-38, %v1199
      %v1201 = vsel %vm1198, %v1200, %v1196
      %v1202 = vmul.f32 1.0, %v1201
      %v1203 = vrcp.pop %v849
      %v1204 = vmul.f32 %v849, %v1203
      %v1205 = vsub.f32 1.0, %v1204
      %v1206 = vmul.f32 %v1203, %v1205
      %v1207 = vadd.f32 %v1203, %v1206
      %vm1208 = vweird.f32 %v849
      %vm1209 = vweird.f32 %v1203
      %vm1210 = vmor %vm1208, %vm1209
      %v1211 = vsel %vm1210, %v1203, %v1207
      %v1212 = vand.u32 2147483647, %v849
      %vm1213 = vcmp.eq.f32.partialorder %v1212, 8.507059e+37
      %v1214 = vand.u32 %v849, 2147483648
      %v1215 = vor.u32 1.1754944e-38, %v1214
      %v1216 = vsel %vm1213, %v1215, %v1211
      %v1217 = vmul.f32 1.0, %v1216
      %v1218 = vrcp.pop %v850
      %v1219 = vmul.f32 %v850, %v1218
      %v1220 = vsub.f32 1.0, %v1219
      %v1221 = vmul.f32 %v1218, %v1220
      %v1222 = vadd.f32 %v1218, %v1221
      %vm1223 = vweird.f32 %v850
      %vm1224 = vweird.f32 %v1218
      %vm1225 = vmor %vm1223, %vm1224
      %v1226 = vsel %vm1225, %v1218, %v1222
      %v1227 = vand.u32 2147483647, %v850
      %vm1228 = vcmp.eq.f32.partialorder %v1227, 8.507059e+37
      %v1229 = vand.u32 %v850, 2147483648
      %v1230 = vor.u32 1.1754944e-38, %v1229
      %v1231 = vsel %vm1228, %v1230, %v1226
      %v1232 = vmul.f32 1.0, %v1231
      %v1233 = vrcp.pop %v851
      %v1234 = vmul.f32 %v851, %v1233
      %v1235 = vsub.f32 1.0, %v1234
      %v1236 = vmul.f32 %v1233, %v1235
      %v1237 = vadd.f32 %v1233, %v1236
      %vm1238 = vweird.f32 %v851
      %vm1239 = vweird.f32 %v1233
      %vm1240 = vmor %vm1238, %vm1239
      %v1241 = vsel %vm1240, %v1233, %v1237
      %v1242 = vand.u32 2147483647, %v851
      %vm1243 = vcmp.eq.f32.partialorder %v1242, 8.507059e+37
      %v1244 = vand.u32 %v851, 2147483648
      %v1245 = vor.u32 1.1754944e-38, %v1244
      %v1246 = vsel %vm1243, %v1245, %v1241
      %v1247 = vmul.f32 1.0, %v1246
      %v1248 = vrcp.pop %v852
      %v1249 = vmul.f32 %v852, %v1248
      %v1250 = vsub.f32 1.0, %v1249
      %v1251 = vmul.f32 %v1248, %v1250
      %v1252 = vadd.f32 %v1248, %v1251
      %vm1253 = vweird.f32 %v852
      %vm1254 = vweird.f32 %v1248
      %vm1255 = vmor %vm1253, %vm1254
      %v1256 = vsel %vm1255, %v1248, %v1252
      %v1257 = vand.u32 2147483647, %v852
      %vm1258 = vcmp.eq.f32.partialorder %v1257, 8.507059e+37
      %v1259 = vand.u32 %v852, 2147483648
      %v1260 = vor.u32 1.1754944e-38, %v1259
      %v1261 = vsel %vm1258, %v1260, %v1256
      %v1262 = vmul.f32 1.0, %v1261
      %v1263 = vrcp.pop %v853
      %v1264 = vmul.f32 %v853, %v1263
      %v1265 = vsub.f32 1.0, %v1264
      %v1266 = vmul.f32 %v1263, %v1265
      %v1267 = vadd.f32 %v1263, %v1266
      %vm1268 = vweird.f32 %v853
      %vm1269 = vweird.f32 %v1263
      %vm1270 = vmor %vm1268, %vm1269
      %v1271 = vsel %vm1270, %v1263, %v1267
      %v1272 = vand.u32 2147483647, %v853
      %vm1273 = vcmp.eq.f32.partialorder %v1272, 8.507059e+37
      %v1274 = vand.u32 %v853, 2147483648
      %v1275 = vor.u32 1.1754944e-38, %v1274
      %v1276 = vsel %vm1273, %v1275, %v1271
      %v1277 = vmul.f32 1.0, %v1276
      %v1278 = vrcp.pop %v854
      %v1279 = vmul.f32 %v854, %v1278
      %v1280 = vsub.f32 1.0, %v1279
      %v1281 = vmul.f32 %v1278, %v1280
      %v1282 = vadd.f32 %v1278, %v1281
      %vm1283 = vweird.f32 %v854
      %vm1284 = vweird.f32 %v1278
      %vm1285 = vmor %vm1283, %vm1284
      %v1286 = vsel %vm1285, %v1278, %v1282
      %v1287 = vand.u32 2147483647, %v854
      %vm1288 = vcmp.eq.f32.partialorder %v1287, 8.507059e+37
      %v1289 = vand.u32 %v854, 2147483648
      %v1290 = vor.u32 1.1754944e-38, %v1289
      %v1291 = vsel %vm1288, %v1290, %v1286
      %v1292 = vmul.f32 1.0, %v1291
      %v1293 = vrcp.pop %v855
      %v1294 = vmul.f32 %v855, %v1293
      %v1295 = vsub.f32 1.0, %v1294
      %v1296 = vmul.f32 %v1293, %v1295
      %v1297 = vadd.f32 %v1293, %v1296
      %vm1298 = vweird.f32 %v855
      %vm1299 = vweird.f32 %v1293
      %vm1300 = vmor %vm1298, %vm1299
      %v1301 = vsel %vm1300, %v1293, %v1297
      %v1302 = vand.u32 2147483647, %v855
      %vm1303 = vcmp.eq.f32.partialorder %v1302, 8.507059e+37
      %v1304 = vand.u32 %v855, 2147483648
      %v1305 = vor.u32 1.1754944e-38, %v1304
      %v1306 = vsel %vm1303, %v1305, %v1301
      %v1307 = vmul.f32 1.0, %v1306
      %v1308 = vrcp.pop %v856
      %v1309 = vmul.f32 %v856, %v1308
      %v1310 = vsub.f32 1.0, %v1309
      %v1311 = vmul.f32 %v1308, %v1310
      %v1312 = vadd.f32 %v1308, %v1311
      %vm1313 = vweird.f32 %v856
      %vm1314 = vweird.f32 %v1308
      %vm1315 = vmor %vm1313, %vm1314
      %v1316 = vsel %vm1315, %v1308, %v1312
      %v1317 = vand.u32 2147483647, %v856
      %vm1318 = vcmp.eq.f32.partialorder %v1317, 8.507059e+37
      %v1319 = vand.u32 %v856, 2147483648
      %v1320 = vor.u32 1.1754944e-38, %v1319
      %v1321 = vsel %vm1318, %v1320, %v1316
      %v1322 = vmul.f32 1.0, %v1321
      %v1323 = vrcp.pop %v857
      %v1324 = vmul.f32 %v857, %v1323
      %v1325 = vsub.f32 1.0, %v1324
      %v1326 = vmul.f32 %v1323, %v1325
      %v1327 = vadd.f32 %v1323, %v1326
      %vm1328 = vweird.f32 %v857
      %vm1329 = vweird.f32 %v1323
      %vm1330 = vmor %vm1328, %vm1329
      %v1331 = vsel %vm1330, %v1323, %v1327
      %v1332 = vand.u32 2147483647, %v857
      %vm1333 = vcmp.eq.f32.partialorder %v1332, 8.507059e+37
      %v1334 = vand.u32 %v857, 2147483648
      %v1335 = vor.u32 1.1754944e-38, %v1334
      %v1336 = vsel %vm1333, %v1335, %v1331
      %v1337 = vmul.f32 1.0, %v1336
      %v1338 = vmul.f32 %v698, %v872
      %v1339 = vmul.f32 %v699, %v887
      %v1340 = vmul.f32 %v700, %v902
      %v1341 = vmul.f32 %v701, %v917
      %v1342 = vmul.f32 %v702, %v932
      %v1343 = vmul.f32 %v703, %v947
      %v1344 = vmul.f32 %v704, %v962
      %v1345 = vmul.f32 %v705, %v977
      %v1346 = vmul.f32 %v706, %v992
      %v1347 = vmul.f32 %v707, %v1007
      %v1348 = vmul.f32 %v708, %v1022
      %v1349 = vmul.f32 %v709, %v1037
      %v1350 = vmul.f32 %v710, %v1052
      %v1351 = vmul.f32 %v711, %v1067
      %v1352 = vmul.f32 %v712, %v1082
      %v1353 = vmul.f32 %v713, %v1097
      %v1354 = vmul.f32 %v714, %v1112
      %v1355 = vmul.f32 %v715, %v1127
      %v1356 = vmul.f32 %v716, %v1142
      %v1357 = vmul.f32 %v717, %v1157
      %v1358 = vmul.f32 %v718, %v1172
      %v1359 = vmul.f32 %v719, %v1187
      %v1360 = vmul.f32 %v720, %v1202
      %v1361 = vmul.f32 %v721, %v1217
      %v1362 = vmul.f32 %v722, %v1232
      %v1363 = vmul.f32 %v723, %v1247
      %v1364 = vmul.f32 %v724, %v1262
      %v1365 = vmul.f32 %v725, %v1277
      %v1366 = vmul.f32 %v726, %v1292
      %v1367 = vmul.f32 %v727, %v1307
      %v1368 = vmul.f32 %v728, %v1322
      %v1369 = vmul.f32 %v729, %v1337
      %v1370 = vld [vmem:[%s245] sm:$0xff]
      %v1371 = vld [vmem:[%s245 + $0x8] sm:$0xff]
      %v1372 = vld [vmem:[%s245 + $0x10] sm:$0xff]
      %v1373 = vld [vmem:[%s245 + $0x18] sm:$0xff]
      %v1374 = vld [vmem:[%s245 + $0x20] sm:$0xff]
      %v1375 = vld [vmem:[%s245 + $0x28] sm:$0xff]
      %v1376 = vld [vmem:[%s245 + $0x30] sm:$0xff]
      %v1377 = vld [vmem:[%s245 + $0x38] sm:$0xff]
      %v1378 = vld [vmem:[%s245 + $0x40] sm:$0xff]
      %v1379 = vld [vmem:[%s245 + $0x48] sm:$0xff]
      %v1380 = vld [vmem:[%s245 + $0x50] sm:$0xff]
      %v1381 = vld [vmem:[%s245 + $0x58] sm:$0xff]
      %v1382 = vld [vmem:[%s245 + $0x60] sm:$0xff]
      %v1383 = vld [vmem:[%s245 + $0x68] sm:$0xff]
      %v1384 = vld [vmem:[%s245 + $0x70] sm:$0xff]
      %v1385 = vld [vmem:[%s245 + $0x78] sm:$0xff]
      %v1386 = vld [vmem:[%s245 + $0x80] sm:$0xff]
      %v1387 = vld [vmem:[%s245 + $0x88] sm:$0xff]
      %v1388 = vld [vmem:[%s245 + $0x90] sm:$0xff]
      %v1389 = vld [vmem:[%s245 + $0x98] sm:$0xff]
      %v1390 = vld [vmem:[%s245 + $0xa0] sm:$0xff]
      %v1391 = vld [vmem:[%s245 + $0xa8] sm:$0xff]
      %v1392 = vld [vmem:[%s245 + $0xb0] sm:$0xff]
      %v1393 = vld [vmem:[%s245 + $0xb8] sm:$0xff]
      %v1394 = vld [vmem:[%s245 + $0xc0] sm:$0xff]
      %v1395 = vld [vmem:[%s245 + $0xc8] sm:$0xff]
      %v1396 = vld [vmem:[%s245 + $0xd0] sm:$0xff]
      %v1397 = vld [vmem:[%s245 + $0xd8] sm:$0xff]
      %v1398 = vld [vmem:[%s245 + $0xe0] sm:$0xff]
      %v1399 = vld [vmem:[%s245 + $0xe8] sm:$0xff]
      %v1400 = vld [vmem:[%s245 + $0xf0] sm:$0xff]
      %v1401 = vld [vmem:[%s245 + $0xf8] sm:$0xff]
      %v1402 = vadd.f32 %v1338, %v1370
      %v1403 = vadd.f32 %v1339, %v1371
      %v1404 = vadd.f32 %v1340, %v1372
      %v1405 = vadd.f32 %v1341, %v1373
      %v1406 = vadd.f32 %v1342, %v1374
      %v1407 = vadd.f32 %v1343, %v1375
      %v1408 = vadd.f32 %v1344, %v1376
      %v1409 = vadd.f32 %v1345, %v1377
      %v1410 = vadd.f32 %v1346, %v1378
      %v1411 = vadd.f32 %v1347, %v1379
      %v1412 = vadd.f32 %v1348, %v1380
      %v1413 = vadd.f32 %v1349, %v1381
      %v1414 = vadd.f32 %v1350, %v1382
      %v1415 = vadd.f32 %v1351, %v1383
      %v1416 = vadd.f32 %v1352, %v1384
      %v1417 = vadd.f32 %v1353, %v1385
      %v1418 = vadd.f32 %v1354, %v1386
      %v1419 = vadd.f32 %v1355, %v1387
      %v1420 = vadd.f32 %v1356, %v1388
      %v1421 = vadd.f32 %v1357, %v1389
      %v1422 = vadd.f32 %v1358, %v1390
      %v1423 = vadd.f32 %v1359, %v1391
      %v1424 = vadd.f32 %v1360, %v1392
      %v1425 = vadd.f32 %v1361, %v1393
      %v1426 = vadd.f32 %v1362, %v1394
      %v1427 = vadd.f32 %v1363, %v1395
      %v1428 = vadd.f32 %v1364, %v1396
      %v1429 = vadd.f32 %v1365, %v1397
      %v1430 = vadd.f32 %v1366, %v1398
      %v1431 = vadd.f32 %v1367, %v1399
      %v1432 = vadd.f32 %v1368, %v1400
      %v1433 = vadd.f32 %v1369, %v1401
      %1434 = vst.msk [vmem:[%s251] sm:$0xff] %vm335, %v1402
      %1435 = vst.msk [vmem:[%s251 + $0x8] sm:$0xff] %vm335, %v1403
      %1436 = vst.msk [vmem:[%s251 + $0x10] sm:$0xff] %vm335, %v1404
      %1437 = vst.msk [vmem:[%s251 + $0x18] sm:$0xff] %vm335, %v1405
      %1438 = vst.msk [vmem:[%s251 + $0x20] sm:$0xff] %vm335, %v1406
      %1439 = vst.msk [vmem:[%s251 + $0x28] sm:$0xff] %vm335, %v1407
      %1440 = vst.msk [vmem:[%s251 + $0x30] sm:$0xff] %vm335, %v1408
      %1441 = vst.msk [vmem:[%s251 + $0x38] sm:$0xff] %vm335, %v1409
      %1442 = vst.msk [vmem:[%s251 + $0x40] sm:$0xff] %vm335, %v1410
      %1443 = vst.msk [vmem:[%s251 + $0x48] sm:$0xff] %vm335, %v1411
      %1444 = vst.msk [vmem:[%s251 + $0x50] sm:$0xff] %vm335, %v1412
      %1445 = vst.msk [vmem:[%s251 + $0x58] sm:$0xff] %vm335, %v1413
      %1446 = vst.msk [vmem:[%s251 + $0x60] sm:$0xff] %vm335, %v1414
      %1447 = vst.msk [vmem:[%s251 + $0x68] sm:$0xff] %vm335, %v1415
      %1448 = vst.msk [vmem:[%s251 + $0x70] sm:$0xff] %vm335, %v1416
      %1449 = vst.msk [vmem:[%s251 + $0x78] sm:$0xff] %vm335, %v1417
      %1450 = vst.msk [vmem:[%s251 + $0x80] sm:$0xff] %vm335, %v1418
      %1451 = vst.msk [vmem:[%s251 + $0x88] sm:$0xff] %vm335, %v1419
      %1452 = vst.msk [vmem:[%s251 + $0x90] sm:$0xff] %vm335, %v1420
      %1453 = vst.msk [vmem:[%s251 + $0x98] sm:$0xff] %vm335, %v1421
      %1454 = vst.msk [vmem:[%s251 + $0xa0] sm:$0xff] %vm335, %v1422
      %1455 = vst.msk [vmem:[%s251 + $0xa8] sm:$0xff] %vm335, %v1423
      %1456 = vst.msk [vmem:[%s251 + $0xb0] sm:$0xff] %vm335, %v1424
      %1457 = vst.msk [vmem:[%s251 + $0xb8] sm:$0xff] %vm335, %v1425
      %1458 = vst.msk [vmem:[%s251 + $0xc0] sm:$0xff] %vm335, %v1426
      %1459 = vst.msk [vmem:[%s251 + $0xc8] sm:$0xff] %vm335, %v1427
      %1460 = vst.msk [vmem:[%s251 + $0xd0] sm:$0xff] %vm335, %v1428
      %1461 = vst.msk [vmem:[%s251 + $0xd8] sm:$0xff] %vm335, %v1429
      %1462 = vst.msk [vmem:[%s251 + $0xe0] sm:$0xff] %vm335, %v1430
      %1463 = vst.msk [vmem:[%s251 + $0xe8] sm:$0xff] %vm335, %v1431
      %1464 = vst.msk [vmem:[%s251 + $0xf0] sm:$0xff] %vm335, %v1432
      %1465 = vst.msk [vmem:[%s251 + $0xf8] sm:$0xff] %vm335, %v1433
      %s1466 = smul.u32 32, %s16
      %p1467 = scmp.lt.s32.totalorder %s1466, 63
      %s1468 = scalar_select %p1467, %s1466, 63
      %s1469 = smul.addr %s1468, 8
      %s1470 = scalar_lea.vmem %s5, %s1469
      // Predicated region
      $region41: #{c3_forward_pallas.10} parent=39 // pred_check
        %p1471 = pneg %p149
      $region42: #{c3_forward_pallas.10} parent=39 // pred_check_branch
        %1473 = sbr.rel (%p1471) target = $region44
      $region43: #{c3_forward_pallas.10} parent=39 // pred_region
        %s1474 = smul.u32 32, %s16
      $region44: #{c3_forward_pallas.10} parent=39 // pred_fallthru
        _
    $region40: #{c3_forward_pallas.10} parent=5 // pred_fallthru
      _
    %p1475 = scmp.le.s32.totalorder 2, %s11
    // Predicated region
    $region45: #{c3_forward_pallas.10} parent=5 // pred_check
      %p1476 = pneg %p1475
    $region46: #{c3_forward_pallas.10} parent=5 // pred_check_branch
      %1478 = sbr.rel (%p1476) target = $region48
    $region47: #{c3_forward_pallas.10} parent=5 // pred_region
      %s1479 = ssub.s32 %s11, 2
      // Predicated region
      $region49: #{c3_forward_pallas.10} parent=47 // pred_check
        %p1480 = pneg %p155
      $region50: #{c3_forward_pallas.10} parent=47 // pred_check_branch
        %1482 = sbr.rel (%p1480) target = $region52
      $region51: #{c3_forward_pallas.10} parent=47 // pred_region
        %s1483 = smul.u32 32, %s17
        %p1484 = scmp.lt.s32.totalorder %s1483, 63
        %s1485 = scalar_select %p1484, %s1483, 63
        %s1486 = smul.addr %s1485, 8
        %s1487 = scalar_lea.vmem %s5, %s1486
      $region52: #{c3_forward_pallas.10} parent=47 // pred_fallthru
        _
    $region48: #{c3_forward_pallas.10} parent=5 // pred_fallthru
      _
  $region6: #{c3_forward_pallas.10} parent=0 // loop_footer
    %s15 = sadd.s32 1, %s11
  $region7: #{c3_forward_pallas.10} parent=0 // loop_footer_branch
    %10 = sbr.rel target = $region3
  $region8: #{c3_forward_pallas.10} parent=0 // loop_exit
    _

</llo_original>
